<compile_context>
chip_gen: v7x
topology: tpu7x:2x2x1
jax: 0.10.0
libtpu: 0.0.40
codegen_flags: <defaults>
</compile_context>

<pallas_src>
import jax
import jax.numpy as jnp
from jax.experimental import pallas as pl
from jax.experimental.pallas import tpu as pltpu

PATCH = 32          # encoder/decoder spatial stride (ResNet-50 trunk stride)
EPS = 1e-5          # PyTorch BatchNorm1d default eps
_VMEM_LIMIT = 48 * 1024 * 1024   # fits v7x (64 MiB physical); plenty on v5e/v6e


def _round_up(x, m):
    return (x + m - 1) // m * m


def _min_parallel_steps():
    # v7x has 2 TensorCores per chip -> keep >=2 parallel grid steps when
    # possible; v5e/v6e have a single TC where extra steps are pure overhead.
    try:
        kind = jax.devices()[0].device_kind.lower()
    except Exception:
        return 1
    return 2 if "v7" in kind else 1


# ----------------------------- Pallas kernels -----------------------------

def _pretext_kernel(x_ref, we_ref, be_ref, wd_ref, bd_ref, o_ref):
    # Fused encoder + decoder for one row-tile of patches (bf16 MXU operands,
    # f32 accumulation + epilogues, bf16 store):
    #   enc = relu(x @ w_enc + b_enc) ;  o = sigmoid(enc @ w_dec + b_dec)
    enc = jnp.dot(x_ref[...], we_ref[...], preferred_element_type=jnp.float32)
    enc = jnp.maximum(enc + be_ref[...], 0.0)
    dec = jnp.dot(enc.astype(jnp.bfloat16), wd_ref[...],
                  preferred_element_type=jnp.float32)
    # Sigmoid stays f32 (v5e EUP has no bf16).  On v6e/v7x re-profile whether the
    # single EUP slot becomes co-critical after the bf16-I/O change.
    o_ref[...] = jax.nn.sigmoid(dec + bd_ref[...]).astype(o_ref.dtype)


def _aesthetic_kernel(x_ref, we_ref, be_ref, w1_ref, b1_ref,
                      w2_ref, b2_ref, w3_ref, b3_ref, o_ref):
    # Fused encoder + NCHW flatten + eval-mode regression head for B images
    # per grid step.  x_ref: (hw, B, K_in) bf16, patch-major, so every MXU push
    # below has M = B rows (previously M = 1 per image).
    # torch.flatten(NCHW) @ w1  ==  sum_p enc_p @ w1r[p]   (w1r is patch-major).
    hw = x_ref.shape[0]
    acc = b1_ref[...]                                            # (1, H1) f32, broadcasts
    for p in range(hw):                                          # static unroll (hw small)
        enc_p = jnp.dot(x_ref[p], we_ref[...],
                        preferred_element_type=jnp.float32)
        enc_p = jnp.maximum(enc_p + be_ref[...], 0.0)            # (B, C_enc)
        acc = acc + jnp.dot(enc_p.astype(jnp.bfloat16), w1_ref[p],
                            preferred_element_type=jnp.float32)
    h1 = jnp.maximum(acc, 0.0)                                   # (B, 512)

    h2 = jnp.dot(h1.astype(jnp.bfloat16), w2_ref[...],
                 preferred_element_type=jnp.float32) + b2_ref[...]
    h2 = jnp.maximum(h2, 0.0)                                    # (B, 256)

    out = jnp.dot(h2.astype(jnp.bfloat16), w3_ref[...],
                  preferred_element_type=jnp.float32) + b3_ref[...]
    o_ref[...] = out                                             # (B, 128) lane-dense


# ----------------------------- wrappers -----------------------------

def _patchify(x_nhwc, *, patch_major=False):
    """(N,H,W,C) -> patch rows of length PATCH*PATCH*C (row, col, channel order).

    patch_major=False: (N, h*w, K)   — image-major (pretext path)
    patch_major=True : (h*w, N, K)   — patch-major  (aesthetic path)
    """
    N, H, W, C = x_nhwc.shape
    h, w = H // PATCH, W // PATCH
    p = x_nhwc.reshape(N, h, PATCH, w, PATCH, C)
    if patch_major:
        p = p.transpose(1, 3, 0, 2, 4, 5).reshape(h * w, N, PATCH * PATCH * C)
    else:
        p = p.transpose(0, 1, 3, 2, 4, 5).reshape(N, h * w, PATCH * PATCH * C)
    return p, h, w


def pretext_forward(x_nhwc, params, *, tm=None):
    """Fused encoder+decoder. Returns reconstructed image (N, H, W, 3) in bf16."""
    # bf16 cast BEFORE the patchify transpose: halves relayout + input DMA bytes.
    patches3, h, w = _patchify(x_nhwc.astype(jnp.bfloat16))
    N = x_nhwc.shape[0]
    hw = h * w
    K_in = patches3.shape[-1]
    M = N * hw
    patches = patches3.reshape(M, K_in)

    if tm is None:
        # Single grid step when M is small (one TC on v5e/v6e), >=2 steps on
        # v7x (2 TCs), 512-row cap for large M (roofline-sized tiles).
        steps = _min_parallel_steps()
        tm = min(512, _round_up(max(8, pl.cdiv(M, steps)), 8))
    M_pad = _round_up(M, tm)
    if M_pad != M:
        patches = jnp.pad(patches, ((0, M_pad - M), (0, 0)))

    C_enc = params["w_enc"].shape[1]
    C_out = params["w_dec"].shape[1]            # 3 * PATCH * PATCH

    cost = pl.CostEstimate(
        flops=int(2 * M_pad * K_in * C_enc + 2 * M_pad * C_enc * C_out),
        transcendentals=int(M_pad * C_out),
        bytes_accessed=int(M_pad * K_in * 2 + K_in * C_enc * 2 + C_enc * 4
                           + C_enc * C_out * 2 + C_out * 4 + M_pad * C_out * 2))

    out = pl.pallas_call(
        _pretext_kernel,
        out_shape=jax.ShapeDtypeStruct((M_pad, C_out), jnp.bfloat16),
        grid=(M_pad // tm,),
        in_specs=[
            pl.BlockSpec((tm, K_in), lambda i: (i, 0)),          # bf16 patch rows
            pl.BlockSpec((K_in, C_enc), lambda i: (0, 0)),       # w_enc (resident)
            pl.BlockSpec((1, C_enc), lambda i: (0, 0)),          # b_enc
            pl.BlockSpec((C_enc, C_out), lambda i: (0, 0)),      # w_dec (resident)
            pl.BlockSpec((1, C_out), lambda i: (0, 0)),          # b_dec
        ],
        out_specs=pl.BlockSpec((tm, C_out), lambda i: (i, 0)),
        compiler_params=pltpu.CompilerParams(
            dimension_semantics=("parallel",),
            vmem_limit_bytes=_VMEM_LIMIT),
        cost_estimate=cost,
    )(patches, params["w_enc"], params["b_enc"],
      params["w_dec"], params["b_dec"])

    out = out[:M]
    # depth-to-space x32 back to (N, H, W, 3), done on the bf16 output.
    out = out.reshape(N, h, w, PATCH, PATCH, 3)
    out = out.transpose(0, 1, 3, 2, 4, 5).reshape(N, h * PATCH, w * PATCH, 3)
    return out


def aesthetic_forward(x_nhwc, params, *, num_classes=1, images_per_step=128):
    """Fused encoder + regression head. Returns scores (N, num_classes) f32."""
    patches_pm, h, w = _patchify(x_nhwc.astype(jnp.bfloat16), patch_major=True)
    hw, N, K_in = patches_pm.shape

    # B images per grid step; B must be a sublane multiple when it tiles N.
    B = min(N, images_per_step)
    if B < N:
        B = _round_up(B, 8)
    N_pad = _round_up(N, B)
    if N_pad != N:
        patches_pm = jnp.pad(patches_pm, ((0, 0), (0, N_pad - N), (0, 0)))

    C_enc = params["w_enc"].shape[1]
    H1 = params["w1r"].shape[2]
    H2 = params["w2f"].shape[1]
    NCp = params["w3f"].shape[1]                # num_classes padded to 128 lanes

    cost = pl.CostEstimate(
        flops=int(2 * N_pad * hw * K_in * C_enc
                  + 2 * N_pad * (hw * C_enc * H1 + H1 * H2 + H2 * NCp)),
        transcendentals=0,
        bytes_accessed=int(N_pad * hw * K_in * 2
                           + (K_in * C_enc + hw * C_enc * H1 + H1 * H2 + H2 * NCp) * 2
                           + (C_enc + H1 + H2 + NCp) * 4 + N_pad * NCp * 4))

    out = pl.pallas_call(
        _aesthetic_kernel,
        out_shape=jax.ShapeDtypeStruct((N_pad, NCp), jnp.float32),
        grid=(N_pad // B,),
        in_specs=[
            pl.BlockSpec((hw, B, K_in), lambda i: (0, i, 0)),    # B images, patch-major
            pl.BlockSpec((K_in, C_enc), lambda i: (0, 0)),       # w_enc (resident)
            pl.BlockSpec((1, C_enc), lambda i: (0, 0)),          # b_enc
            pl.BlockSpec((hw, C_enc, H1), lambda i: (0, 0, 0)),  # w1 (patch-major)
            pl.BlockSpec((1, H1), lambda i: (0, 0)),             # b1
            pl.BlockSpec((H1, H2), lambda i: (0, 0)),            # w2 (BN1 folded)
            pl.BlockSpec((1, H2), lambda i: (0, 0)),             # b2 (BN1 folded)
            pl.BlockSpec((H2, NCp), lambda i: (0, 0)),           # w3 (BN2 folded, padded)
            pl.BlockSpec((1, NCp), lambda i: (0, 0)),            # b3 (BN2 folded, padded)
        ],
        out_specs=pl.BlockSpec((B, NCp), lambda i: (i, 0)),
        compiler_params=pltpu.CompilerParams(
            dimension_semantics=("parallel",),
            vmem_limit_bytes=_VMEM_LIMIT),
        cost_estimate=cost,
    )(patches_pm, params["w_enc"], params["b_enc"],
      params["w1r"], params["b1"],
      params["w2f"], params["b2f"],
      params["w3f"], params["b3f"])

    return out[:N, :num_classes]


def aesthetic_net_forward(x_nhwc, params, phase="pretext", num_classes=1):
    if phase == "pretext":
        return pretext_forward(x_nhwc, params)
    elif phase == "aesthetic":
        return aesthetic_forward(x_nhwc, params, num_classes=num_classes)
    raise ValueError(phase)


# ----------------------------- parameters -----------------------------

def init_raw_params(key, c_in, c_enc, hw, num_classes):
    """PyTorch-style raw parameters (f32, BN as gamma/beta/mean/var)."""
    flattened = hw * c_enc
    ks = jax.random.split(key, 16)
    f32 = jnp.float32

    def u(k, shape, scale=0.05):
        return jax.random.uniform(k, shape, f32, -1.0, 1.0) * scale

    return {
        "w_enc": u(ks[0], (PATCH * PATCH * c_in, c_enc), 0.02),
        "b_enc": u(ks[1], (1, c_enc)),
        "w_dec": u(ks[2], (c_enc, 3 * PATCH * PATCH), 0.02),
        "b_dec": u(ks[3], (1, 3 * PATCH * PATCH)),
        "w1": u(ks[4], (flattened, 512), 0.02), "b1": u(ks[5], (1, 512)),
        "g1": 1.0 + u(ks[6], (1, 512)), "be1": u(ks[7], (1, 512)),
        "m1": u(ks[8], (1, 512)),
        "v1": 0.5 + jax.random.uniform(ks[9], (1, 512), f32, 0.0, 1.0),
        "w2": u(ks[10], (512, 256), 0.05), "b2": u(ks[11], (1, 256)),
        "g2": 1.0 + u(ks[12], (1, 256)), "be2": u(ks[13], (1, 256)),
        "m2": u(ks[14], (1, 256)),
        "v2": 0.5 + jax.random.uniform(ks[15], (1, 256), f32, 0.0, 1.0),
        "w3": u(jax.random.fold_in(key, 99), (256, num_classes), 0.05),
        "b3": jnp.zeros((1, num_classes), f32),
    }


def prepare_params(raw, hw):
    """Fold eval-mode BN into the following Linear, reorder w1 to patch-major,
    pad the final projection to 128 lanes, and cast matmul weights to bf16."""
    bf = jnp.bfloat16
    s1 = raw["g1"] * jax.lax.rsqrt(raw["v1"] + EPS)
    t1 = raw["be1"] - raw["m1"] * s1
    s2 = raw["g2"] * jax.lax.rsqrt(raw["v2"] + EPS)
    t2 = raw["be2"] - raw["m2"] * s2

    w2f = raw["w2"] * s1.reshape(-1, 1)
    b2f = raw["b2"] + t1 @ raw["w2"]
    w3f = raw["w3"] * s2.reshape(-1, 1)
    b3f = raw["b3"] + t2 @ raw["w3"]

    nc = raw["w3"].shape[1]
    nc_pad = _round_up(max(nc, 128), 128)
    w3f = jnp.pad(w3f, ((0, 0), (0, nc_pad - nc)))
    b3f = jnp.pad(b3f, ((0, 0), (0, nc_pad - nc)))

    c_enc = raw["w_enc"].shape[1]
    h1 = raw["w1"].shape[1]
    # torch.flatten(NCHW): row index of w1 is c*hw + p  ->  (hw, C_enc, 512)
    w1r = raw["w1"].reshape(c_enc, hw, h1).transpose(1, 0, 2)

    return {
        "w_enc": raw["w_enc"].astype(bf), "b_enc": raw["b_enc"],
        "w_dec": raw["w_dec"].astype(bf), "b_dec": raw["b_dec"],
        "w1r": w1r.astype(bf), "b1": raw["b1"],
        "w2f": w2f.astype(bf), "b2f": b2f,
        "w3f": w3f.astype(bf), "b3f": b3f,
    }


# ----------------------------- pure-JAX reference -----------------------------

def reference_forward(x_nhwc, raw, phase):
    N, H, W, C = x_nhwc.shape
    h, w = H // PATCH, W // PATCH
    p = x_nhwc.reshape(N, h, PATCH, w, PATCH, C).transpose(0, 1, 3, 2, 4, 5)
    p = p.reshape(N, h * w, PATCH * PATCH * C)
    enc = jnp.maximum(jnp.einsum("npk,kc->npc", p, raw["w_enc"]) + raw["b_enc"], 0.0)
    if phase == "pretext":
        dec = jax.nn.sigmoid(jnp.einsum("npc,cd->npd", enc, raw["w_dec"]) + raw["b_dec"])
        dec = dec.reshape(N, h, w, PATCH, PATCH, 3).transpose(0, 1, 3, 2, 4, 5)
        return dec.reshape(N, H, W, 3)
    feat = enc.reshape(N, h, w, -1).transpose(0, 3, 1, 2).reshape(N, -1)  # NCHW flatten

    def bn(x, g, be, m, v):
        return (x - m) * g / jnp.sqrt(v + EPS) + be

    z = jnp.maximum(feat @ raw["w1"] + raw["b1"], 0.0)
    z = bn(z, raw["g1"], raw["be1"], raw["m1"], raw["v1"])
    z = jnp.maximum(z @ raw["w2"] + raw["b2"], 0.0)
    z = bn(z, raw["g2"], raw["be2"], raw["m2"], raw["v2"])
    return z @ raw["w3"] + raw["b3"]


# ----------------------------- main -----------------------------

if __name__ == "__main__":
    key = jax.random.PRNGKey(0)
    k_param, k_x = jax.random.split(key)

    # Small shapes: batch=4, 3-channel 64x64 image, stride-32 encoder -> 2x2
    # feature map, C_enc=128 -> flattened_size = 2*2*128 = 512.
    N, H, W, C_IN = 4, 64, 64, 3
    C_ENC = 128
    NUM_CLASSES = 1
    hw = (H // PATCH) * (W // PATCH)

    raw = init_raw_params(k_param, c_in=C_IN, c_enc=C_ENC, hw=hw,
                          num_classes=NUM_CLASSES)
    prep = prepare_params(raw, hw)
    x = jax.random.normal(k_x, (N, H, W, C_IN), jnp.float32)

    fwd = jax.jit(aesthetic_net_forward, static_argnames=("phase", "num_classes"))

    # phase='pretext': fused encoder -> decoder -> reconstructed image (bf16)
    recon = jax.block_until_ready(fwd(x, prep, phase="pretext"))
    assert recon.shape == (N, H, W, 3), recon.shape

    # phase='aesthetic': fused encoder -> flatten -> regression head -> score
    score = jax.block_until_ready(fwd(x, prep, phase="aesthetic",
                                      num_classes=NUM_CLASSES))
    assert score.shape == (N, NUM_CLASSES), score.shape

    # correctness vs. f32 pure-JAX reference (bf16 MXU operands/IO -> loose tol)
    ref_recon = reference_forward(x, raw, "pretext")
    ref_score = reference_forward(x, raw, "aesthetic")
    recon_f32 = recon.astype(jnp.float32)
    err_r = float(jnp.max(jnp.abs(recon_f32 - ref_recon)))
    err_s = float(jnp.max(jnp.abs(score - ref_score)))
    assert err_r < 0.1 and err_s < 0.1, (err_r, err_s)
    assert bool(jnp.all(jnp.isfinite(recon_f32))) and bool(jnp.all(jnp.isfinite(score)))
    print("KERNEL_OK")
</pallas_src>

<mosaic_0001>
module attributes {stable_mosaic.version = 11 : i64} {
  func.func @_pretext_kernel(%arg0: i32, %arg1: memref<16x3072xbf16, #tpu.memory_space<vmem>>, %arg2: memref<3072x128xbf16, #tpu.memory_space<vmem>>, %arg3: memref<1x128xf32, #tpu.memory_space<vmem>>, %arg4: memref<128x3072xbf16, #tpu.memory_space<vmem>>, %arg5: memref<1x3072xf32, #tpu.memory_space<vmem>>, %arg6: memref<16x3072xbf16, #tpu.memory_space<vmem>>) attributes {dimension_semantics = [#tpu.dimension_semantics<parallel>], iteration_bounds = array<i64: 1>, scalar_prefetch = 0 : i64, scratch_operands = 0 : i64, tpu.core_type = #tpu.core_type<tc>, window_params = [{transform_indices = @transform_0, window_bounds = array<i64: 16, 3072>}, {pipeline_mode = #tpu.pipeline_mode<synchronous>, transform_indices = @transform_1, window_bounds = array<i64: 3072, 128>}, {pipeline_mode = #tpu.pipeline_mode<synchronous>, transform_indices = @transform_2, window_bounds = array<i64: 1, 128>}, {pipeline_mode = #tpu.pipeline_mode<synchronous>, transform_indices = @transform_3, window_bounds = array<i64: 128, 3072>}, {pipeline_mode = #tpu.pipeline_mode<synchronous>, transform_indices = @transform_4, window_bounds = array<i64: 1, 3072>}, {transform_indices = @transform_5, window_bounds = array<i64: 16, 3072>}]} {
    %c0 = arith.constant 0 : index
    %c0_0 = arith.constant 0 : index
    %0 = vector.load %arg1[%c0, %c0_0] : memref<16x3072xbf16, #tpu.memory_space<vmem>>, vector<16x3072xbf16>
    %c0_1 = arith.constant 0 : index
    %c0_2 = arith.constant 0 : index
    %1 = vector.load %arg2[%c0_1, %c0_2] : memref<3072x128xbf16, #tpu.memory_space<vmem>>, vector<3072x128xbf16>
    %cst = arith.constant dense<0.000000e+00> : vector<16x128xf32>
    %2 = tpu.matmul %0, %1, %cst {dimension_numbers = #tpu.dot_dimension_numbers<[1], [0], [0], [1], [0, 0, 1, 1], [], []>} : vector<16x3072xbf16>, vector<3072x128xbf16>, vector<16x128xf32> -> vector<16x128xf32>
    %c0_3 = arith.constant 0 : index
    %c0_4 = arith.constant 0 : index
    %3 = vector.load %arg3[%c0_3, %c0_4] : memref<1x128xf32, #tpu.memory_space<vmem>>, vector<1x128xf32>
    %4 = vector.broadcast %3 : vector<1x128xf32> to vector<16x128xf32>
    %5 = arith.addf %2, %4 : vector<16x128xf32>
    %cst_5 = arith.constant 0.000000e+00 : f32
    %6 = vector.broadcast %cst_5 : f32 to vector<16x128xf32>
    %7 = arith.maximumf %5, %6 : vector<16x128xf32>
    %8 = arith.truncf %7 : vector<16x128xf32> to vector<16x128xbf16>
    %c0_6 = arith.constant 0 : index
    %c0_7 = arith.constant 0 : index
    %9 = vector.load %arg4[%c0_6, %c0_7] : memref<128x3072xbf16, #tpu.memory_space<vmem>>, vector<128x3072xbf16>
    %cst_8 = arith.constant dense<0.000000e+00> : vector<16x3072xf32>
    %10 = tpu.matmul %8, %9, %cst_8 {dimension_numbers = #tpu.dot_dimension_numbers<[1], [0], [0], [1], [0, 0, 1, 1], [], []>} : vector<16x128xbf16>, vector<128x3072xbf16>, vector<16x3072xf32> -> vector<16x3072xf32>
    %c0_9 = arith.constant 0 : index
    %c0_10 = arith.constant 0 : index
    %11 = vector.load %arg5[%c0_9, %c0_10] : memref<1x3072xf32, #tpu.memory_space<vmem>>, vector<1x3072xf32>
    %12 = vector.broadcast %11 : vector<1x3072xf32> to vector<16x3072xf32>
    %13 = arith.addf %10, %12 : vector<16x3072xf32>
    %14 = arith.negf %13 : vector<16x3072xf32>
    %15 = math.exp %14 : vector<16x3072xf32>
    %cst_11 = arith.constant 1.000000e+00 : f32
    %16 = vector.broadcast %cst_11 : f32 to vector<16x3072xf32>
    %17 = arith.addf %16, %15 : vector<16x3072xf32>
    %18 = arith.divf %16, %17 : vector<16x3072xf32>
    %19 = arith.truncf %18 : vector<16x3072xf32> to vector<16x3072xbf16>
    %c0_12 = arith.constant 0 : index
    %c0_13 = arith.constant 0 : index
    %20 = vector.load %arg6[%c0_12, %c0_13] : memref<16x3072xbf16, #tpu.memory_space<vmem>>, vector<16x3072xbf16>
    tpu.vector_store %arg6[%c0_12, %c0_13], %19 {strides = array<i32>} : memref<16x3072xbf16, #tpu.memory_space<vmem>>, vector<16x3072xbf16>,
    return
  }
  func.func @transform_0(%arg0: i32) -> (i32, i32) {
    %c0_i32 = arith.constant 0 : i32
    %c0_i32_0 = arith.constant 0 : i32
    return %arg0, %c0_i32 : i32, i32
  }
  func.func @transform_1(%arg0: i32) -> (i32, i32) {
    %c0_i32 = arith.constant 0 : i32
    %c0_i32_0 = arith.constant 0 : i32
    %c0_i32_1 = arith.constant 0 : i32
    return %c0_i32, %c0_i32_0 : i32, i32
  }
  func.func @transform_2(%arg0: i32) -> (i32, i32) {
    %c0_i32 = arith.constant 0 : i32
    %c0_i32_0 = arith.constant 0 : i32
    %c0_i32_1 = arith.constant 0 : i32
    return %c0_i32, %c0_i32_0 : i32, i32
  }
  func.func @transform_3(%arg0: i32) -> (i32, i32) {
    %c0_i32 = arith.constant 0 : i32
    %c0_i32_0 = arith.constant 0 : i32
    %c0_i32_1 = arith.constant 0 : i32
    return %c0_i32, %c0_i32_0 : i32, i32
  }
  func.func @transform_4(%arg0: i32) -> (i32, i32) {
    %c0_i32 = arith.constant 0 : i32
    %c0_i32_0 = arith.constant 0 : i32
    %c0_i32_1 = arith.constant 0 : i32
    return %c0_i32, %c0_i32_0 : i32, i32
  }
  func.func @transform_5(%arg0: i32) -> (i32, i32) {
    %c0_i32 = arith.constant 0 : i32
    %c0_i32_0 = arith.constant 0 : i32
    return %arg0, %c0_i32 : i32, i32
  }
}

</mosaic_0001>

<llo_original>
// kernel: aesthetic_net_forward.1
$region0: #{aesthetic_net_forward.1}
  #allocation0 [shape = 'u32[]', space=smem, size = 0x4, offset = 0x4, fixed_abs, tag = 'smem constant byte address 0x4 - core index']
  #allocation1 [shape = 'u32[144,128]{1,0:T(1,128)}', space=vmem, size = 0x12000, scoped, tag = 'internal scratch']
  %s0 = inlined_call_operand.vmem [shape: bf16[16,3072], index: 0, kind: input, shape index: {}]
  %s1 = inlined_call_operand.vmem [shape: bf16[3072,128], index: 1, kind: input, shape index: {}]
  %s2 = inlined_call_operand.vmem [shape: f32[1,128], index: 2, kind: input, shape index: {}]
  %s3 = inlined_call_operand.vmem [shape: bf16[128,3072], index: 3, kind: input, shape index: {}]
  %s4 = inlined_call_operand.vmem [shape: f32[1,3072], index: 4, kind: input, shape index: {}]
  %s5 = inlined_call_operand.vmem [shape: bf16[16,3072], index: 5, kind: output, shape index: {}]
  %s6 = sld [smem:[#allocation0]]
  $region30: #{aesthetic_net_forward.1} parent=0
    _
  %s8 = ssub.s32 1, %s6
  %s9 = scalar_select 0, %s8, %s6
  // Predicated region
  $region2: #{aesthetic_net_forward.1} parent=0 // pred_check
    _
  $region3: #{aesthetic_net_forward.1} parent=0 // pred_check_branch
    %11 = sbr.rel (0) target = $region5
  $region4: #{aesthetic_net_forward.1} parent=0 // pred_region
    _
  $region5: #{aesthetic_net_forward.1} parent=0 // pred_fallthru
    _
  // Predicated region
  $region6: #{aesthetic_net_forward.1} parent=0 // pred_check
    _
  $region7: #{aesthetic_net_forward.1} parent=0 // pred_check_branch
    %13 = sbr.rel (0) target = $region9
  $region8: #{aesthetic_net_forward.1} parent=0 // pred_region
    _
  $region9: #{aesthetic_net_forward.1} parent=0 // pred_fallthru
    _
  // Predicated region
  $region10: #{aesthetic_net_forward.1} parent=0 // pred_check
    _
  $region11: #{aesthetic_net_forward.1} parent=0 // pred_check_branch
    %15 = sbr.rel (0) target = $region13
  $region12: #{aesthetic_net_forward.1} parent=0 // pred_region
    _
  $region13: #{aesthetic_net_forward.1} parent=0 // pred_fallthru
    _
  // Predicated region
  $region14: #{aesthetic_net_forward.1} parent=0 // pred_check
    _
  $region15: #{aesthetic_net_forward.1} parent=0 // pred_check_branch
    %17 = sbr.rel (0) target = $region17
  $region16: #{aesthetic_net_forward.1} parent=0 // pred_region
    _
  $region17: #{aesthetic_net_forward.1} parent=0 // pred_fallthru
    _
  // Predicated region
  $region18: #{aesthetic_net_forward.1} parent=0 // pred_check
    _
  $region19: #{aesthetic_net_forward.1} parent=0 // pred_check_branch
    %19 = sbr.rel (0) target = $region21
  $region20: #{aesthetic_net_forward.1} parent=0 // pred_region
    _
  $region21: #{aesthetic_net_forward.1} parent=0 // pred_fallthru
    _
  %v21 = vld [vmem:[%s0] sm:$0xff]
  %v22 = vld [vmem:[%s0 + $0x8] sm:$0xff]
  %v23 = vld [vmem:[%s0 + $0x10] sm:$0xff]
  %v24 = vld [vmem:[%s0 + $0x18] sm:$0xff]
  %v25 = vld [vmem:[%s0 + $0x20] sm:$0xff]
  %v26 = vld [vmem:[%s0 + $0x28] sm:$0xff]
  %v27 = vld [vmem:[%s0 + $0x30] sm:$0xff]
  %v28 = vld [vmem:[%s0 + $0x38] sm:$0xff]
  %v29 = vld [vmem:[%s0 + $0x40] sm:$0xff]
  %v30 = vld [vmem:[%s0 + $0x48] sm:$0xff]
  %v31 = vld [vmem:[%s0 + $0x50] sm:$0xff]
  %v32 = vld [vmem:[%s0 + $0x58] sm:$0xff]
  %v33 = vld [vmem:[%s0 + $0x60] sm:$0xff]
  %v34 = vld [vmem:[%s0 + $0x68] sm:$0xff]
  %v35 = vld [vmem:[%s0 + $0x70] sm:$0xff]
  %v36 = vld [vmem:[%s0 + $0x78] sm:$0xff]
  %v37 = vld [vmem:[%s0 + $0x80] sm:$0xff]
  %v38 = vld [vmem:[%s0 + $0x88] sm:$0xff]
  %v39 = vld [vmem:[%s0 + $0x90] sm:$0xff]
  %v40 = vld [vmem:[%s0 + $0x98] sm:$0xff]
  %v41 = vld [vmem:[%s0 + $0xa0] sm:$0xff]
  %v42 = vld [vmem:[%s0 + $0xa8] sm:$0xff]
  %v43 = vld [vmem:[%s0 + $0xb0] sm:$0xff]
  %v44 = vld [vmem:[%s0 + $0xb8] sm:$0xff]
  %v45 = vld [vmem:[%s1] sm:$0xf]
  %v46 = vld [vmem:[%s1 + $0x4] sm:$0xf]
  %v47 = vld [vmem:[%s1 + $0x8] sm:$0xf]
  %v48 = vld [vmem:[%s1 + $0xc] sm:$0xf]
  %v49 = vld [vmem:[%s1 + $0x10] sm:$0xf]
  %v50 = vld [vmem:[%s1 + $0x14] sm:$0xf]
  %v51 = vld [vmem:[%s1 + $0x18] sm:$0xf]
  %v52 = vld [vmem:[%s1 + $0x1c] sm:$0xf]
  %v53 = vld [vmem:[%s1 + $0x20] sm:$0xf]
  %v54 = vld [vmem:[%s1 + $0x24] sm:$0xf]
  %v55 = vld [vmem:[%s1 + $0x28] sm:$0xf]
  %v56 = vld [vmem:[%s1 + $0x2c] sm:$0xf]
  %v57 = vld [vmem:[%s1 + $0x30] sm:$0xf]
  %v58 = vld [vmem:[%s1 + $0x34] sm:$0xf]
  %v59 = vld [vmem:[%s1 + $0x38] sm:$0xf]
  %v60 = vld [vmem:[%s1 + $0x3c] sm:$0xf]
  %v61 = vld [vmem:[%s1 + $0x40] sm:$0xf]
  %v62 = vld [vmem:[%s1 + $0x44] sm:$0xf]
  %v63 = vld [vmem:[%s1 + $0x48] sm:$0xf]
  %v64 = vld [vmem:[%s1 + $0x4c] sm:$0xf]
  %v65 = vld [vmem:[%s1 + $0x50] sm:$0xf]
  %v66 = vld [vmem:[%s1 + $0x54] sm:$0xf]
  %v67 = vld [vmem:[%s1 + $0x58] sm:$0xf]
  %v68 = vld [vmem:[%s1 + $0x5c] sm:$0xf]
  %v69 = vld [vmem:[%s1 + $0x60] sm:$0xf]
  %v70 = vld [vmem:[%s1 + $0x64] sm:$0xf]
  %v71 = vld [vmem:[%s1 + $0x68] sm:$0xf]
  %v72 = vld [vmem:[%s1 + $0x6c] sm:$0xf]
  %v73 = vld [vmem:[%s1 + $0x70] sm:$0xf]
  %v74 = vld [vmem:[%s1 + $0x74] sm:$0xf]
  %v75 = vld [vmem:[%s1 + $0x78] sm:$0xf]
  %v76 = vld [vmem:[%s1 + $0x7c] sm:$0xf]
  %v77 = vld [vmem:[%s1 + $0x80] sm:$0xf]
  %v78 = vld [vmem:[%s1 + $0x84] sm:$0xf]
  %v79 = vld [vmem:[%s1 + $0x88] sm:$0xf]
  %v80 = vld [vmem:[%s1 + $0x8c] sm:$0xf]
  %v81 = vld [vmem:[%s1 + $0x90] sm:$0xf]
  %v82 = vld [vmem:[%s1 + $0x94] sm:$0xf]
  %v83 = vld [vmem:[%s1 + $0x98] sm:$0xf]
  %v84 = vld [vmem:[%s1 + $0x9c] sm:$0xf]
  %v85 = vld [vmem:[%s1 + $0xa0] sm:$0xf]
  %v86 = vld [vmem:[%s1 + $0xa4] sm:$0xf]
  %v87 = vld [vmem:[%s1 + $0xa8] sm:$0xf]
  %v88 = vld [vmem:[%s1 + $0xac] sm:$0xf]
  %v89 = vld [vmem:[%s1 + $0xb0] sm:$0xf]
  %v90 = vld [vmem:[%s1 + $0xb4] sm:$0xf]
  %v91 = vld [vmem:[%s1 + $0xb8] sm:$0xf]
  %v92 = vld [vmem:[%s1 + $0xbc] sm:$0xf]
  %v93 = vld [vmem:[%s1 + $0xc0] sm:$0xf]
  %v94 = vld [vmem:[%s1 + $0xc4] sm:$0xf]
  %v95 = vld [vmem:[%s1 + $0xc8] sm:$0xf]
  %v96 = vld [vmem:[%s1 + $0xcc] sm:$0xf]
  %v97 = vld [vmem:[%s1 + $0xd0] sm:$0xf]
  %v98 = vld [vmem:[%s1 + $0xd4] sm:$0xf]
  %v99 = vld [vmem:[%s1 + $0xd8] sm:$0xf]
  %v100 = vld [vmem:[%s1 + $0xdc] sm:$0xf]
  %v101 = vld [vmem:[%s1 + $0xe0] sm:$0xf]
  %v102 = vld [vmem:[%s1 + $0xe4] sm:$0xf]
  %v103 = vld [vmem:[%s1 + $0xe8] sm:$0xf]
  %v104 = vld [vmem:[%s1 + $0xec] sm:$0xf]
  %v105 = vld [vmem:[%s1 + $0xf0] sm:$0xf]
  %v106 = vld [vmem:[%s1 + $0xf4] sm:$0xf]
  %v107 = vld [vmem:[%s1 + $0xf8] sm:$0xf]
  %v108 = vld [vmem:[%s1 + $0xfc] sm:$0xf]
  %v109 = vld [vmem:[%s1 + $0x100] sm:$0xf]
  %v110 = vld [vmem:[%s1 + $0x104] sm:$0xf]
  %v111 = vld [vmem:[%s1 + $0x108] sm:$0xf]
  %v112 = vld [vmem:[%s1 + $0x10c] sm:$0xf]
  %v113 = vld [vmem:[%s1 + $0x110] sm:$0xf]
  %v114 = vld [vmem:[%s1 + $0x114] sm:$0xf]
  %v115 = vld [vmem:[%s1 + $0x118] sm:$0xf]
  %v116 = vld [vmem:[%s1 + $0x11c] sm:$0xf]
  %v117 = vld [vmem:[%s1 + $0x120] sm:$0xf]
  %v118 = vld [vmem:[%s1 + $0x124] sm:$0xf]
  %v119 = vld [vmem:[%s1 + $0x128] sm:$0xf]
  %v120 = vld [vmem:[%s1 + $0x12c] sm:$0xf]
  %v121 = vld [vmem:[%s1 + $0x130] sm:$0xf]
  %v122 = vld [vmem:[%s1 + $0x134] sm:$0xf]
  %v123 = vld [vmem:[%s1 + $0x138] sm:$0xf]
  %v124 = vld [vmem:[%s1 + $0x13c] sm:$0xf]
  %v125 = vld [vmem:[%s1 + $0x140] sm:$0xf]
  %v126 = vld [vmem:[%s1 + $0x144] sm:$0xf]
  %v127 = vld [vmem:[%s1 + $0x148] sm:$0xf]
  %v128 = vld [vmem:[%s1 + $0x14c] sm:$0xf]
  %v129 = vld [vmem:[%s1 + $0x150] sm:$0xf]
  %v130 = vld [vmem:[%s1 + $0x154] sm:$0xf]
  %v131 = vld [vmem:[%s1 + $0x158] sm:$0xf]
  %v132 = vld [vmem:[%s1 + $0x15c] sm:$0xf]
  %v133 = vld [vmem:[%s1 + $0x160] sm:$0xf]
  %v134 = vld [vmem:[%s1 + $0x164] sm:$0xf]
  %v135 = vld [vmem:[%s1 + $0x168] sm:$0xf]
  %v136 = vld [vmem:[%s1 + $0x16c] sm:$0xf]
  %v137 = vld [vmem:[%s1 + $0x170] sm:$0xf]
  %v138 = vld [vmem:[%s1 + $0x174] sm:$0xf]
  %v139 = vld [vmem:[%s1 + $0x178] sm:$0xf]
  %v140 = vld [vmem:[%s1 + $0x17c] sm:$0xf]
  %v141 = vld [vmem:[%s1 + $0x180] sm:$0xf]
  %v142 = vld [vmem:[%s1 + $0x184] sm:$0xf]
  %v143 = vld [vmem:[%s1 + $0x188] sm:$0xf]
  %v144 = vld [vmem:[%s1 + $0x18c] sm:$0xf]
  %v145 = vld [vmem:[%s1 + $0x190] sm:$0xf]
  %v146 = vld [vmem:[%s1 + $0x194] sm:$0xf]
  %v147 = vld [vmem:[%s1 + $0x198] sm:$0xf]
  %v148 = vld [vmem:[%s1 + $0x19c] sm:$0xf]
  %v149 = vld [vmem:[%s1 + $0x1a0] sm:$0xf]
  %v150 = vld [vmem:[%s1 + $0x1a4] sm:$0xf]
  %v151 = vld [vmem:[%s1 + $0x1a8] sm:$0xf]
  %v152 = vld [vmem:[%s1 + $0x1ac] sm:$0xf]
  %v153 = vld [vmem:[%s1 + $0x1b0] sm:$0xf]
  %v154 = vld [vmem:[%s1 + $0x1b4] sm:$0xf]
  %v155 = vld [vmem:[%s1 + $0x1b8] sm:$0xf]
  %v156 = vld [vmem:[%s1 + $0x1bc] sm:$0xf]
  %v157 = vld [vmem:[%s1 + $0x1c0] sm:$0xf]
  %v158 = vld [vmem:[%s1 + $0x1c4] sm:$0xf]
  %v159 = vld [vmem:[%s1 + $0x1c8] sm:$0xf]
  %v160 = vld [vmem:[%s1 + $0x1cc] sm:$0xf]
  %v161 = vld [vmem:[%s1 + $0x1d0] sm:$0xf]
  %v162 = vld [vmem:[%s1 + $0x1d4] sm:$0xf]
  %v163 = vld [vmem:[%s1 + $0x1d8] sm:$0xf]
  %v164 = vld [vmem:[%s1 + $0x1dc] sm:$0xf]
  %v165 = vld [vmem:[%s1 + $0x1e0] sm:$0xf]
  %v166 = vld [vmem:[%s1 + $0x1e4] sm:$0xf]
  %v167 = vld [vmem:[%s1 + $0x1e8] sm:$0xf]
  %v168 = vld [vmem:[%s1 + $0x1ec] sm:$0xf]
  %v169 = vld [vmem:[%s1 + $0x1f0] sm:$0xf]
  %v170 = vld [vmem:[%s1 + $0x1f4] sm:$0xf]
  %v171 = vld [vmem:[%s1 + $0x1f8] sm:$0xf]
  %v172 = vld [vmem:[%s1 + $0x1fc] sm:$0xf]
  %v173 = vld [vmem:[%s1 + $0x200] sm:$0xf]
  %v174 = vld [vmem:[%s1 + $0x204] sm:$0xf]
  %v175 = vld [vmem:[%s1 + $0x208] sm:$0xf]
  %v176 = vld [vmem:[%s1 + $0x20c] sm:$0xf]
  %v177 = vld [vmem:[%s1 + $0x210] sm:$0xf]
  %v178 = vld [vmem:[%s1 + $0x214] sm:$0xf]
  %v179 = vld [vmem:[%s1 + $0x218] sm:$0xf]
  %v180 = vld [vmem:[%s1 + $0x21c] sm:$0xf]
  %v181 = vld [vmem:[%s1 + $0x220] sm:$0xf]
  %v182 = vld [vmem:[%s1 + $0x224] sm:$0xf]
  %v183 = vld [vmem:[%s1 + $0x228] sm:$0xf]
  %v184 = vld [vmem:[%s1 + $0x22c] sm:$0xf]
  %v185 = vld [vmem:[%s1 + $0x230] sm:$0xf]
  %v186 = vld [vmem:[%s1 + $0x234] sm:$0xf]
  %v187 = vld [vmem:[%s1 + $0x238] sm:$0xf]
  %v188 = vld [vmem:[%s1 + $0x23c] sm:$0xf]
  %v189 = vld [vmem:[%s1 + $0x240] sm:$0xf]
  %v190 = vld [vmem:[%s1 + $0x244] sm:$0xf]
  %v191 = vld [vmem:[%s1 + $0x248] sm:$0xf]
  %v192 = vld [vmem:[%s1 + $0x24c] sm:$0xf]
  %v193 = vld [vmem:[%s1 + $0x250] sm:$0xf]
  %v194 = vld [vmem:[%s1 + $0x254] sm:$0xf]
  %v195 = vld [vmem:[%s1 + $0x258] sm:$0xf]
  %v196 = vld [vmem:[%s1 + $0x25c] sm:$0xf]
  %v197 = vld [vmem:[%s1 + $0x260] sm:$0xf]
  %v198 = vld [vmem:[%s1 + $0x264] sm:$0xf]
  %v199 = vld [vmem:[%s1 + $0x268] sm:$0xf]
  %v200 = vld [vmem:[%s1 + $0x26c] sm:$0xf]
  %v201 = vld [vmem:[%s1 + $0x270] sm:$0xf]
  %v202 = vld [vmem:[%s1 + $0x274] sm:$0xf]
  %v203 = vld [vmem:[%s1 + $0x278] sm:$0xf]
  %v204 = vld [vmem:[%s1 + $0x27c] sm:$0xf]
  %v205 = vld [vmem:[%s1 + $0x280] sm:$0xf]
  %v206 = vld [vmem:[%s1 + $0x284] sm:$0xf]
  %v207 = vld [vmem:[%s1 + $0x288] sm:$0xf]
  %v208 = vld [vmem:[%s1 + $0x28c] sm:$0xf]
  %v209 = vld [vmem:[%s1 + $0x290] sm:$0xf]
  %v210 = vld [vmem:[%s1 + $0x294] sm:$0xf]
  %v211 = vld [vmem:[%s1 + $0x298] sm:$0xf]
  %v212 = vld [vmem:[%s1 + $0x29c] sm:$0xf]
  %v213 = vld [vmem:[%s1 + $0x2a0] sm:$0xf]
  %v214 = vld [vmem:[%s1 + $0x2a4] sm:$0xf]
  %v215 = vld [vmem:[%s1 + $0x2a8] sm:$0xf]
  %v216 = vld [vmem:[%s1 + $0x2ac] sm:$0xf]
  %v217 = vld [vmem:[%s1 + $0x2b0] sm:$0xf]
  %v218 = vld [vmem:[%s1 + $0x2b4] sm:$0xf]
  %v219 = vld [vmem:[%s1 + $0x2b8] sm:$0xf]
  %v220 = vld [vmem:[%s1 + $0x2bc] sm:$0xf]
  %v221 = vld [vmem:[%s1 + $0x2c0] sm:$0xf]
  %v222 = vld [vmem:[%s1 + $0x2c4] sm:$0xf]
  %v223 = vld [vmem:[%s1 + $0x2c8] sm:$0xf]
  %v224 = vld [vmem:[%s1 + $0x2cc] sm:$0xf]
  %v225 = vld [vmem:[%s1 + $0x2d0] sm:$0xf]
  %v226 = vld [vmem:[%s1 + $0x2d4] sm:$0xf]
  %v227 = vld [vmem:[%s1 + $0x2d8] sm:$0xf]
  %v228 = vld [vmem:[%s1 + $0x2dc] sm:$0xf]
  %v229 = vld [vmem:[%s1 + $0x2e0] sm:$0xf]
  %v230 = vld [vmem:[%s1 + $0x2e4] sm:$0xf]
  %v231 = vld [vmem:[%s1 + $0x2e8] sm:$0xf]
  %v232 = vld [vmem:[%s1 + $0x2ec] sm:$0xf]
  %v233 = vld [vmem:[%s1 + $0x2f0] sm:$0xf]
  %v234 = vld [vmem:[%s1 + $0x2f4] sm:$0xf]
  %v235 = vld [vmem:[%s1 + $0x2f8] sm:$0xf]
  %v236 = vld [vmem:[%s1 + $0x2fc] sm:$0xf]
  %v237 = vld [vmem:[%s1 + $0x300] sm:$0xf]
  %v238 = vld [vmem:[%s1 + $0x304] sm:$0xf]
  %v239 = vld [vmem:[%s1 + $0x308] sm:$0xf]
  %v240 = vld [vmem:[%s1 + $0x30c] sm:$0xf]
  %v241 = vld [vmem:[%s1 + $0x310] sm:$0xf]
  %v242 = vld [vmem:[%s1 + $0x314] sm:$0xf]
  %v243 = vld [vmem:[%s1 + $0x318] sm:$0xf]
  %v244 = vld [vmem:[%s1 + $0x31c] sm:$0xf]
  %v245 = vld [vmem:[%s1 + $0x320] sm:$0xf]
  %v246 = vld [vmem:[%s1 + $0x324] sm:$0xf]
  %v247 = vld [vmem:[%s1 + $0x328] sm:$0xf]
  %v248 = vld [vmem:[%s1 + $0x32c] sm:$0xf]
  %v249 = vld [vmem:[%s1 + $0x330] sm:$0xf]
  %v250 = vld [vmem:[%s1 + $0x334] sm:$0xf]
  %v251 = vld [vmem:[%s1 + $0x338] sm:$0xf]
  %v252 = vld [vmem:[%s1 + $0x33c] sm:$0xf]
  %v253 = vld [vmem:[%s1 + $0x340] sm:$0xf]
  %v254 = vld [vmem:[%s1 + $0x344] sm:$0xf]
  %v255 = vld [vmem:[%s1 + $0x348] sm:$0xf]
  %v256 = vld [vmem:[%s1 + $0x34c] sm:$0xf]
  %v257 = vld [vmem:[%s1 + $0x350] sm:$0xf]
  %v258 = vld [vmem:[%s1 + $0x354] sm:$0xf]
  %v259 = vld [vmem:[%s1 + $0x358] sm:$0xf]
  %v260 = vld [vmem:[%s1 + $0x35c] sm:$0xf]
  %v261 = vld [vmem:[%s1 + $0x360] sm:$0xf]
  %v262 = vld [vmem:[%s1 + $0x364] sm:$0xf]
  %v263 = vld [vmem:[%s1 + $0x368] sm:$0xf]
  %v264 = vld [vmem:[%s1 + $0x36c] sm:$0xf]
  %v265 = vld [vmem:[%s1 + $0x370] sm:$0xf]
  %v266 = vld [vmem:[%s1 + $0x374] sm:$0xf]
  %v267 = vld [vmem:[%s1 + $0x378] sm:$0xf]
  %v268 = vld [vmem:[%s1 + $0x37c] sm:$0xf]
  %v269 = vld [vmem:[%s1 + $0x380] sm:$0xf]
  %v270 = vld [vmem:[%s1 + $0x384] sm:$0xf]
  %v271 = vld [vmem:[%s1 + $0x388] sm:$0xf]
  %v272 = vld [vmem:[%s1 + $0x38c] sm:$0xf]
  %v273 = vld [vmem:[%s1 + $0x390] sm:$0xf]
  %v274 = vld [vmem:[%s1 + $0x394] sm:$0xf]
  %v275 = vld [vmem:[%s1 + $0x398] sm:$0xf]
  %v276 = vld [vmem:[%s1 + $0x39c] sm:$0xf]
  %v277 = vld [vmem:[%s1 + $0x3a0] sm:$0xf]
  %v278 = vld [vmem:[%s1 + $0x3a4] sm:$0xf]
  %v279 = vld [vmem:[%s1 + $0x3a8] sm:$0xf]
  %v280 = vld [vmem:[%s1 + $0x3ac] sm:$0xf]
  %v281 = vld [vmem:[%s1 + $0x3b0] sm:$0xf]
  %v282 = vld [vmem:[%s1 + $0x3b4] sm:$0xf]
  %v283 = vld [vmem:[%s1 + $0x3b8] sm:$0xf]
  %v284 = vld [vmem:[%s1 + $0x3bc] sm:$0xf]
  %v285 = vld [vmem:[%s1 + $0x3c0] sm:$0xf]
  %v286 = vld [vmem:[%s1 + $0x3c4] sm:$0xf]
  %v287 = vld [vmem:[%s1 + $0x3c8] sm:$0xf]
  %v288 = vld [vmem:[%s1 + $0x3cc] sm:$0xf]
  %v289 = vld [vmem:[%s1 + $0x3d0] sm:$0xf]
  %v290 = vld [vmem:[%s1 + $0x3d4] sm:$0xf]
  %v291 = vld [vmem:[%s1 + $0x3d8] sm:$0xf]
  %v292 = vld [vmem:[%s1 + $0x3dc] sm:$0xf]
  %v293 = vld [vmem:[%s1 + $0x3e0] sm:$0xf]
  %v294 = vld [vmem:[%s1 + $0x3e4] sm:$0xf]
  %v295 = vld [vmem:[%s1 + $0x3e8] sm:$0xf]
  %v296 = vld [vmem:[%s1 + $0x3ec] sm:$0xf]
  %v297 = vld [vmem:[%s1 + $0x3f0] sm:$0xf]
  %v298 = vld [vmem:[%s1 + $0x3f4] sm:$0xf]
  %v299 = vld [vmem:[%s1 + $0x3f8] sm:$0xf]
  %v300 = vld [vmem:[%s1 + $0x3fc] sm:$0xf]
  %v301 = vld [vmem:[%s1 + $0x400] sm:$0xf]
  %v302 = vld [vmem:[%s1 + $0x404] sm:$0xf]
  %v303 = vld [vmem:[%s1 + $0x408] sm:$0xf]
  %v304 = vld [vmem:[%s1 + $0x40c] sm:$0xf]
  %v305 = vld [vmem:[%s1 + $0x410] sm:$0xf]
  %v306 = vld [vmem:[%s1 + $0x414] sm:$0xf]
  %v307 = vld [vmem:[%s1 + $0x418] sm:$0xf]
  %v308 = vld [vmem:[%s1 + $0x41c] sm:$0xf]
  %v309 = vld [vmem:[%s1 + $0x420] sm:$0xf]
  %v310 = vld [vmem:[%s1 + $0x424] sm:$0xf]
  %v311 = vld [vmem:[%s1 + $0x428] sm:$0xf]
  %v312 = vld [vmem:[%s1 + $0x42c] sm:$0xf]
  %v313 = vld [vmem:[%s1 + $0x430] sm:$0xf]
  %v314 = vld [vmem:[%s1 + $0x434] sm:$0xf]
  %v315 = vld [vmem:[%s1 + $0x438] sm:$0xf]
  %v316 = vld [vmem:[%s1 + $0x43c] sm:$0xf]
  %v317 = vld [vmem:[%s1 + $0x440] sm:$0xf]
  %v318 = vld [vmem:[%s1 + $0x444] sm:$0xf]
  %v319 = vld [vmem:[%s1 + $0x448] sm:$0xf]
  %v320 = vld [vmem:[%s1 + $0x44c] sm:$0xf]
  %v321 = vld [vmem:[%s1 + $0x450] sm:$0xf]
  %v322 = vld [vmem:[%s1 + $0x454] sm:$0xf]
  %v323 = vld [vmem:[%s1 + $0x458] sm:$0xf]
  %v324 = vld [vmem:[%s1 + $0x45c] sm:$0xf]
  %v325 = vld [vmem:[%s1 + $0x460] sm:$0xf]
  %v326 = vld [vmem:[%s1 + $0x464] sm:$0xf]
  %v327 = vld [vmem:[%s1 + $0x468] sm:$0xf]
  %v328 = vld [vmem:[%s1 + $0x46c] sm:$0xf]
  %v329 = vld [vmem:[%s1 + $0x470] sm:$0xf]
  %v330 = vld [vmem:[%s1 + $0x474] sm:$0xf]
  %v331 = vld [vmem:[%s1 + $0x478] sm:$0xf]
  %v332 = vld [vmem:[%s1 + $0x47c] sm:$0xf]
  %v333 = vld [vmem:[%s1 + $0x480] sm:$0xf]
  %v334 = vld [vmem:[%s1 + $0x484] sm:$0xf]
  %v335 = vld [vmem:[%s1 + $0x488] sm:$0xf]
  %v336 = vld [vmem:[%s1 + $0x48c] sm:$0xf]
  %v337 = vld [vmem:[%s1 + $0x490] sm:$0xf]
  %v338 = vld [vmem:[%s1 + $0x494] sm:$0xf]
  %v339 = vld [vmem:[%s1 + $0x498] sm:$0xf]
  %v340 = vld [vmem:[%s1 + $0x49c] sm:$0xf]
  %v341 = vld [vmem:[%s1 + $0x4a0] sm:$0xf]
  %v342 = vld [vmem:[%s1 + $0x4a4] sm:$0xf]
  %v343 = vld [vmem:[%s1 + $0x4a8] sm:$0xf]
  %v344 = vld [vmem:[%s1 + $0x4ac] sm:$0xf]
  %v345 = vld [vmem:[%s1 + $0x4b0] sm:$0xf]
  %v346 = vld [vmem:[%s1 + $0x4b4] sm:$0xf]
  %v347 = vld [vmem:[%s1 + $0x4b8] sm:$0xf]
  %v348 = vld [vmem:[%s1 + $0x4bc] sm:$0xf]
  %v349 = vld [vmem:[%s1 + $0x4c0] sm:$0xf]
  %v350 = vld [vmem:[%s1 + $0x4c4] sm:$0xf]
  %v351 = vld [vmem:[%s1 + $0x4c8] sm:$0xf]
  %v352 = vld [vmem:[%s1 + $0x4cc] sm:$0xf]
  %v353 = vld [vmem:[%s1 + $0x4d0] sm:$0xf]
  %v354 = vld [vmem:[%s1 + $0x4d4] sm:$0xf]
  %v355 = vld [vmem:[%s1 + $0x4d8] sm:$0xf]
  %v356 = vld [vmem:[%s1 + $0x4dc] sm:$0xf]
  %v357 = vld [vmem:[%s1 + $0x4e0] sm:$0xf]
  %v358 = vld [vmem:[%s1 + $0x4e4] sm:$0xf]
  %v359 = vld [vmem:[%s1 + $0x4e8] sm:$0xf]
  %v360 = vld [vmem:[%s1 + $0x4ec] sm:$0xf]
  %v361 = vld [vmem:[%s1 + $0x4f0] sm:$0xf]
  %v362 = vld [vmem:[%s1 + $0x4f4] sm:$0xf]
  %v363 = vld [vmem:[%s1 + $0x4f8] sm:$0xf]
  %v364 = vld [vmem:[%s1 + $0x4fc] sm:$0xf]
  %v365 = vld [vmem:[%s1 + $0x500] sm:$0xf]
  %v366 = vld [vmem:[%s1 + $0x504] sm:$0xf]
  %v367 = vld [vmem:[%s1 + $0x508] sm:$0xf]
  %v368 = vld [vmem:[%s1 + $0x50c] sm:$0xf]
  %v369 = vld [vmem:[%s1 + $0x510] sm:$0xf]
  %v370 = vld [vmem:[%s1 + $0x514] sm:$0xf]
  %v371 = vld [vmem:[%s1 + $0x518] sm:$0xf]
  %v372 = vld [vmem:[%s1 + $0x51c] sm:$0xf]
  %v373 = vld [vmem:[%s1 + $0x520] sm:$0xf]
  %v374 = vld [vmem:[%s1 + $0x524] sm:$0xf]
  %v375 = vld [vmem:[%s1 + $0x528] sm:$0xf]
  %v376 = vld [vmem:[%s1 + $0x52c] sm:$0xf]
  %v377 = vld [vmem:[%s1 + $0x530] sm:$0xf]
  %v378 = vld [vmem:[%s1 + $0x534] sm:$0xf]
  %v379 = vld [vmem:[%s1 + $0x538] sm:$0xf]
  %v380 = vld [vmem:[%s1 + $0x53c] sm:$0xf]
  %v381 = vld [vmem:[%s1 + $0x540] sm:$0xf]
  %v382 = vld [vmem:[%s1 + $0x544] sm:$0xf]
  %v383 = vld [vmem:[%s1 + $0x548] sm:$0xf]
  %v384 = vld [vmem:[%s1 + $0x54c] sm:$0xf]
  %v385 = vld [vmem:[%s1 + $0x550] sm:$0xf]
  %v386 = vld [vmem:[%s1 + $0x554] sm:$0xf]
  %v387 = vld [vmem:[%s1 + $0x558] sm:$0xf]
  %v388 = vld [vmem:[%s1 + $0x55c] sm:$0xf]
  %v389 = vld [vmem:[%s1 + $0x560] sm:$0xf]
  %v390 = vld [vmem:[%s1 + $0x564] sm:$0xf]
  %v391 = vld [vmem:[%s1 + $0x568] sm:$0xf]
  %v392 = vld [vmem:[%s1 + $0x56c] sm:$0xf]
  %v393 = vld [vmem:[%s1 + $0x570] sm:$0xf]
  %v394 = vld [vmem:[%s1 + $0x574] sm:$0xf]
  %v395 = vld [vmem:[%s1 + $0x578] sm:$0xf]
  %v396 = vld [vmem:[%s1 + $0x57c] sm:$0xf]
  %v397 = vld [vmem:[%s1 + $0x580] sm:$0xf]
  %v398 = vld [vmem:[%s1 + $0x584] sm:$0xf]
  %v399 = vld [vmem:[%s1 + $0x588] sm:$0xf]
  %v400 = vld [vmem:[%s1 + $0x58c] sm:$0xf]
  %v401 = vld [vmem:[%s1 + $0x590] sm:$0xf]
  %v402 = vld [vmem:[%s1 + $0x594] sm:$0xf]
  %v403 = vld [vmem:[%s1 + $0x598] sm:$0xf]
  %v404 = vld [vmem:[%s1 + $0x59c] sm:$0xf]
  %v405 = vld [vmem:[%s1 + $0x5a0] sm:$0xf]
  %v406 = vld [vmem:[%s1 + $0x5a4] sm:$0xf]
  %v407 = vld [vmem:[%s1 + $0x5a8] sm:$0xf]
  %v408 = vld [vmem:[%s1 + $0x5ac] sm:$0xf]
  %v409 = vld [vmem:[%s1 + $0x5b0] sm:$0xf]
  %v410 = vld [vmem:[%s1 + $0x5b4] sm:$0xf]
  %v411 = vld [vmem:[%s1 + $0x5b8] sm:$0xf]
  %v412 = vld [vmem:[%s1 + $0x5bc] sm:$0xf]
  %v413 = vld [vmem:[%s1 + $0x5c0] sm:$0xf]
  %v414 = vld [vmem:[%s1 + $0x5c4] sm:$0xf]
  %v415 = vld [vmem:[%s1 + $0x5c8] sm:$0xf]
  %v416 = vld [vmem:[%s1 + $0x5cc] sm:$0xf]
  %v417 = vld [vmem:[%s1 + $0x5d0] sm:$0xf]
  %v418 = vld [vmem:[%s1 + $0x5d4] sm:$0xf]
  %v419 = vld [vmem:[%s1 + $0x5d8] sm:$0xf]
  %v420 = vld [vmem:[%s1 + $0x5dc] sm:$0xf]
  %v421 = vld [vmem:[%s1 + $0x5e0] sm:$0xf]
  %v422 = vld [vmem:[%s1 + $0x5e4] sm:$0xf]
  %v423 = vld [vmem:[%s1 + $0x5e8] sm:$0xf]
  %v424 = vld [vmem:[%s1 + $0x5ec] sm:$0xf]
  %v425 = vld [vmem:[%s1 + $0x5f0] sm:$0xf]
  %v426 = vld [vmem:[%s1 + $0x5f4] sm:$0xf]
  %v427 = vld [vmem:[%s1 + $0x5f8] sm:$0xf]
  %v428 = vld [vmem:[%s1 + $0x5fc] sm:$0xf]
  %v429 = vld [vmem:[%s2] sm:$0x1]
  %v431 = vlaneseq
  %v432 = vshrl.u32 %v431, 7
  %v433 = vsub.s32 0, %v432
  %v434 = vrot.slane %v429, %v433
  %v460 = vunpack.c.l.b16 %v21
  %v461 = vunpack.c.h.b16 %v21
  %v462 = vunpack.c.l.b16 %v22
  %v463 = vunpack.c.h.b16 %v22
  %v464 = vunpack.c.l.b16 %v23
  %v465 = vunpack.c.h.b16 %v23
  %v466 = vunpack.c.l.b16 %v24
  %v467 = vunpack.c.h.b16 %v24
  %v468 = vunpack.c.l.b16 %v25
  %v469 = vunpack.c.h.b16 %v25
  %v470 = vunpack.c.l.b16 %v26
  %v471 = vunpack.c.h.b16 %v26
  %v472 = vunpack.c.l.b16 %v27
  %v473 = vunpack.c.h.b16 %v27
  %v474 = vunpack.c.l.b16 %v28
  %v475 = vunpack.c.h.b16 %v28
  %v476 = vunpack.c.l.b16 %v29
  %v477 = vunpack.c.h.b16 %v29
  %v478 = vunpack.c.l.b16 %v30
  %v479 = vunpack.c.h.b16 %v30
  %v480 = vunpack.c.l.b16 %v31
  %v481 = vunpack.c.h.b16 %v31
  %v482 = vunpack.c.l.b16 %v32
  %v483 = vunpack.c.h.b16 %v32
  %v484 = vunpack.c.l.b16 %v33
  %v485 = vunpack.c.h.b16 %v33
  %v486 = vunpack.c.l.b16 %v34
  %v487 = vunpack.c.h.b16 %v34
  %v488 = vunpack.c.l.b16 %v35
  %v489 = vunpack.c.h.b16 %v35
  %v490 = vunpack.c.l.b16 %v36
  %v491 = vunpack.c.h.b16 %v36
  %v492 = vunpack.c.l.b16 %v37
  %v493 = vunpack.c.h.b16 %v37
  %v494 = vunpack.c.l.b16 %v38
  %v495 = vunpack.c.h.b16 %v38
  %v496 = vunpack.c.l.b16 %v39
  %v497 = vunpack.c.h.b16 %v39
  %v498 = vunpack.c.l.b16 %v40
  %v499 = vunpack.c.h.b16 %v40
  %v500 = vunpack.c.l.b16 %v41
  %v501 = vunpack.c.h.b16 %v41
  %v502 = vunpack.c.l.b16 %v42
  %v503 = vunpack.c.h.b16 %v42
  %v504 = vunpack.c.l.b16 %v43
  %v505 = vunpack.c.h.b16 %v43
  %v506 = vunpack.c.l.b16 %v44
  %v507 = vunpack.c.h.b16 %v44
  %v508 = vpack.c.b16 %v484, %v460
  %v509 = vpack.c.b16 %v485, %v461
  %v510 = vpack.c.b16 %v486, %v462
  %v511 = vpack.c.b16 %v487, %v463
  %v512 = vpack.c.b16 %v488, %v464
  %v513 = vpack.c.b16 %v489, %v465
  %v514 = vpack.c.b16 %v490, %v466
  %v515 = vpack.c.b16 %v491, %v467
  %v516 = vpack.c.b16 %v492, %v468
  %v517 = vpack.c.b16 %v493, %v469
  %v518 = vpack.c.b16 %v494, %v470
  %v519 = vpack.c.b16 %v495, %v471
  %v520 = vpack.c.b16 %v496, %v472
  %v521 = vpack.c.b16 %v497, %v473
  %v522 = vpack.c.b16 %v498, %v474
  %v523 = vpack.c.b16 %v499, %v475
  %v524 = vpack.c.b16 %v500, %v476
  %v525 = vpack.c.b16 %v501, %v477
  %v526 = vpack.c.b16 %v502, %v478
  %v527 = vpack.c.b16 %v503, %v479
  %v528 = vpack.c.b16 %v504, %v480
  %v529 = vpack.c.b16 %v505, %v481
  %v530 = vpack.c.b16 %v506, %v482
  %v531 = vpack.c.b16 %v507, %v483
  %v940 = vunpack.c.l.b16 %v45
  %v941 = vunpack.c.l.b16 %v46
  %v942 = vunpack.c.l.b16 %v47
  %v943 = vunpack.c.l.b16 %v48
  %v944 = vunpack.c.l.b16 %v49
  %v945 = vunpack.c.l.b16 %v50
  %v946 = vunpack.c.l.b16 %v51
  %v947 = vunpack.c.l.b16 %v52
  %v948 = vunpack.c.l.b16 %v53
  %v949 = vunpack.c.l.b16 %v54
  %v950 = vunpack.c.l.b16 %v55
  %v951 = vunpack.c.l.b16 %v56
  %v952 = vunpack.c.l.b16 %v57
  %v953 = vunpack.c.l.b16 %v58
  %v954 = vunpack.c.l.b16 %v59
  %v955 = vunpack.c.l.b16 %v60
  %v956 = vunpack.c.l.b16 %v61
  %v957 = vunpack.c.l.b16 %v62
  %v958 = vunpack.c.l.b16 %v63
  %v959 = vunpack.c.l.b16 %v64
  %v960 = vunpack.c.l.b16 %v65
  %v961 = vunpack.c.l.b16 %v66
  %v962 = vunpack.c.l.b16 %v67
  %v963 = vunpack.c.l.b16 %v68
  %v964 = vunpack.c.l.b16 %v69
  %v965 = vunpack.c.l.b16 %v70
  %v966 = vunpack.c.l.b16 %v71
  %v967 = vunpack.c.l.b16 %v72
  %v968 = vunpack.c.l.b16 %v73
  %v969 = vunpack.c.l.b16 %v74
  %v970 = vunpack.c.l.b16 %v75
  %v971 = vunpack.c.l.b16 %v76
  %v972 = vunpack.c.l.b16 %v77
  %v973 = vunpack.c.l.b16 %v78
  %v974 = vunpack.c.l.b16 %v79
  %v975 = vunpack.c.l.b16 %v80
  %v976 = vunpack.c.l.b16 %v81
  %v977 = vunpack.c.l.b16 %v82
  %v978 = vunpack.c.l.b16 %v83
  %v979 = vunpack.c.l.b16 %v84
  %v980 = vunpack.c.l.b16 %v85
  %v981 = vunpack.c.l.b16 %v86
  %v982 = vunpack.c.l.b16 %v87
  %v983 = vunpack.c.l.b16 %v88
  %v984 = vunpack.c.l.b16 %v89
  %v985 = vunpack.c.l.b16 %v90
  %v986 = vunpack.c.l.b16 %v91
  %v987 = vunpack.c.l.b16 %v92
  %v988 = vunpack.c.l.b16 %v93
  %v989 = vunpack.c.l.b16 %v94
  %v990 = vunpack.c.l.b16 %v95
  %v991 = vunpack.c.l.b16 %v96
  %v992 = vunpack.c.l.b16 %v97
  %v993 = vunpack.c.l.b16 %v98
  %v994 = vunpack.c.l.b16 %v99
  %v995 = vunpack.c.l.b16 %v100
  %v996 = vunpack.c.l.b16 %v101
  %v997 = vunpack.c.l.b16 %v102
  %v998 = vunpack.c.l.b16 %v103
  %v999 = vunpack.c.l.b16 %v104
  %v1000 = vunpack.c.l.b16 %v105
  %v1001 = vunpack.c.l.b16 %v106
  %v1002 = vunpack.c.l.b16 %v107
  %v1003 = vunpack.c.l.b16 %v108
  %v1004 = vunpack.c.l.b16 %v109
  %v1005 = vunpack.c.l.b16 %v110
  %v1006 = vunpack.c.l.b16 %v111
  %v1007 = vunpack.c.l.b16 %v112
  %v1008 = vunpack.c.l.b16 %v113
  %v1009 = vunpack.c.l.b16 %v114
  %v1010 = vunpack.c.l.b16 %v115
  %v1011 = vunpack.c.l.b16 %v116
  %v1012 = vunpack.c.l.b16 %v117
  %v1013 = vunpack.c.l.b16 %v118
  %v1014 = vunpack.c.l.b16 %v119
  %v1015 = vunpack.c.l.b16 %v120
  %v1016 = vunpack.c.l.b16 %v121
  %v1017 = vunpack.c.l.b16 %v122
  %v1018 = vunpack.c.l.b16 %v123
  %v1019 = vunpack.c.l.b16 %v124
  %v1020 = vunpack.c.l.b16 %v125
  %v1021 = vunpack.c.l.b16 %v126
  %v1022 = vunpack.c.l.b16 %v127
  %v1023 = vunpack.c.l.b16 %v128
  %v1024 = vunpack.c.l.b16 %v129
  %v1025 = vunpack.c.l.b16 %v130
  %v1026 = vunpack.c.l.b16 %v131
  %v1027 = vunpack.c.l.b16 %v132
  %v1028 = vunpack.c.l.b16 %v133
  %v1029 = vunpack.c.l.b16 %v134
  %v1030 = vunpack.c.l.b16 %v135
  %v1031 = vunpack.c.l.b16 %v136
  %v1032 = vunpack.c.l.b16 %v137
  %v1033 = vunpack.c.l.b16 %v138
  %v1034 = vunpack.c.l.b16 %v139
  %v1035 = vunpack.c.l.b16 %v140
  %v1036 = vunpack.c.l.b16 %v141
  %v1037 = vunpack.c.l.b16 %v142
  %v1038 = vunpack.c.l.b16 %v143
  %v1039 = vunpack.c.l.b16 %v144
  %v1040 = vunpack.c.l.b16 %v145
  %v1041 = vunpack.c.l.b16 %v146
  %v1042 = vunpack.c.l.b16 %v147
  %v1043 = vunpack.c.l.b16 %v148
  %v1044 = vunpack.c.l.b16 %v149
  %v1045 = vunpack.c.l.b16 %v150
  %v1046 = vunpack.c.l.b16 %v151
  %v1047 = vunpack.c.l.b16 %v152
  %v1048 = vunpack.c.l.b16 %v153
  %v1049 = vunpack.c.l.b16 %v154
  %v1050 = vunpack.c.l.b16 %v155
  %v1051 = vunpack.c.l.b16 %v156
  %v1052 = vunpack.c.l.b16 %v157
  %v1053 = vunpack.c.l.b16 %v158
  %v1054 = vunpack.c.l.b16 %v159
  %v1055 = vunpack.c.l.b16 %v160
  %v1056 = vunpack.c.l.b16 %v161
  %v1057 = vunpack.c.l.b16 %v162
  %v1058 = vunpack.c.l.b16 %v163
  %v1059 = vunpack.c.l.b16 %v164
  %v1060 = vunpack.c.l.b16 %v165
  %v1061 = vunpack.c.l.b16 %v166
  %v1062 = vunpack.c.l.b16 %v167
  %v1063 = vunpack.c.l.b16 %v168
  %v1064 = vunpack.c.l.b16 %v169
  %v1065 = vunpack.c.l.b16 %v170
  %v1066 = vunpack.c.l.b16 %v171
  %v1067 = vunpack.c.l.b16 %v172
  %v1068 = vunpack.c.l.b16 %v173
  %v1069 = vunpack.c.l.b16 %v174
  %v1070 = vunpack.c.l.b16 %v175
  %v1071 = vunpack.c.l.b16 %v176
  %v1072 = vunpack.c.l.b16 %v177
  %v1073 = vunpack.c.l.b16 %v178
  %v1074 = vunpack.c.l.b16 %v179
  %v1075 = vunpack.c.l.b16 %v180
  %v1076 = vunpack.c.l.b16 %v181
  %v1077 = vunpack.c.l.b16 %v182
  %v1078 = vunpack.c.l.b16 %v183
  %v1079 = vunpack.c.l.b16 %v184
  %v1080 = vunpack.c.l.b16 %v185
  %v1081 = vunpack.c.l.b16 %v186
  %v1082 = vunpack.c.l.b16 %v187
  %v1083 = vunpack.c.l.b16 %v188
  %v1084 = vunpack.c.l.b16 %v189
  %v1085 = vunpack.c.l.b16 %v190
  %v1086 = vunpack.c.l.b16 %v191
  %v1087 = vunpack.c.l.b16 %v192
  %v1088 = vunpack.c.l.b16 %v193
  %v1089 = vunpack.c.l.b16 %v194
  %v1090 = vunpack.c.l.b16 %v195
  %v1091 = vunpack.c.l.b16 %v196
  %v1092 = vunpack.c.l.b16 %v197
  %v1093 = vunpack.c.l.b16 %v198
  %v1094 = vunpack.c.l.b16 %v199
  %v1095 = vunpack.c.l.b16 %v200
  %v1096 = vunpack.c.l.b16 %v201
  %v1097 = vunpack.c.l.b16 %v202
  %v1098 = vunpack.c.l.b16 %v203
  %v1099 = vunpack.c.l.b16 %v204
  %v1100 = vunpack.c.l.b16 %v205
  %v1101 = vunpack.c.l.b16 %v206
  %v1102 = vunpack.c.l.b16 %v207
  %v1103 = vunpack.c.l.b16 %v208
  %v1104 = vunpack.c.l.b16 %v209
  %v1105 = vunpack.c.l.b16 %v210
  %v1106 = vunpack.c.l.b16 %v211
  %v1107 = vunpack.c.l.b16 %v212
  %v1108 = vunpack.c.l.b16 %v213
  %v1109 = vunpack.c.l.b16 %v214
  %v1110 = vunpack.c.l.b16 %v215
  %v1111 = vunpack.c.l.b16 %v216
  %v1112 = vunpack.c.l.b16 %v217
  %v1113 = vunpack.c.l.b16 %v218
  %v1114 = vunpack.c.l.b16 %v219
  %v1115 = vunpack.c.l.b16 %v220
  %v1116 = vunpack.c.l.b16 %v221
  %v1117 = vunpack.c.l.b16 %v222
  %v1118 = vunpack.c.l.b16 %v223
  %v1119 = vunpack.c.l.b16 %v224
  %v1120 = vunpack.c.l.b16 %v225
  %v1121 = vunpack.c.l.b16 %v226
  %v1122 = vunpack.c.l.b16 %v227
  %v1123 = vunpack.c.l.b16 %v228
  %v1124 = vunpack.c.l.b16 %v229
  %v1125 = vunpack.c.l.b16 %v230
  %v1126 = vunpack.c.l.b16 %v231
  %v1127 = vunpack.c.l.b16 %v232
  %v1128 = vunpack.c.l.b16 %v233
  %v1129 = vunpack.c.l.b16 %v234
  %v1130 = vunpack.c.l.b16 %v235
  %v1131 = vunpack.c.l.b16 %v236
  %v1132 = vunpack.c.l.b16 %v237
  %v1133 = vunpack.c.l.b16 %v238
  %v1134 = vunpack.c.l.b16 %v239
  %v1135 = vunpack.c.l.b16 %v240
  %v1136 = vunpack.c.l.b16 %v241
  %v1137 = vunpack.c.l.b16 %v242
  %v1138 = vunpack.c.l.b16 %v243
  %v1139 = vunpack.c.l.b16 %v244
  %v1140 = vunpack.c.l.b16 %v245
  %v1141 = vunpack.c.l.b16 %v246
  %v1142 = vunpack.c.l.b16 %v247
  %v1143 = vunpack.c.l.b16 %v248
  %v1144 = vunpack.c.l.b16 %v249
  %v1145 = vunpack.c.l.b16 %v250
  %v1146 = vunpack.c.l.b16 %v251
  %v1147 = vunpack.c.l.b16 %v252
  %v1148 = vunpack.c.l.b16 %v253
  %v1149 = vunpack.c.l.b16 %v254
  %v1150 = vunpack.c.l.b16 %v255
  %v1151 = vunpack.c.l.b16 %v256
  %v1152 = vunpack.c.l.b16 %v257
  %v1153 = vunpack.c.l.b16 %v258
  %v1154 = vunpack.c.l.b16 %v259
  %v1155 = vunpack.c.l.b16 %v260
  %v1156 = vunpack.c.l.b16 %v261
  %v1157 = vunpack.c.l.b16 %v262
  %v1158 = vunpack.c.l.b16 %v263
  %v1159 = vunpack.c.l.b16 %v264
  %v1160 = vunpack.c.l.b16 %v265
  %v1161 = vunpack.c.l.b16 %v266
  %v1162 = vunpack.c.l.b16 %v267
  %v1163 = vunpack.c.l.b16 %v268
  %v1164 = vunpack.c.l.b16 %v269
  %v1165 = vunpack.c.l.b16 %v270
  %v1166 = vunpack.c.l.b16 %v271
  %v1167 = vunpack.c.l.b16 %v272
  %v1168 = vunpack.c.l.b16 %v273
  %v1169 = vunpack.c.l.b16 %v274
  %v1170 = vunpack.c.l.b16 %v275
  %v1171 = vunpack.c.l.b16 %v276
  %v1172 = vunpack.c.l.b16 %v277
  %v1173 = vunpack.c.l.b16 %v278
  %v1174 = vunpack.c.l.b16 %v279
  %v1175 = vunpack.c.l.b16 %v280
  %v1176 = vunpack.c.l.b16 %v281
  %v1177 = vunpack.c.l.b16 %v282
  %v1178 = vunpack.c.l.b16 %v283
  %v1179 = vunpack.c.l.b16 %v284
  %v1180 = vunpack.c.l.b16 %v285
  %v1181 = vunpack.c.l.b16 %v286
  %v1182 = vunpack.c.l.b16 %v287
  %v1183 = vunpack.c.l.b16 %v288
  %v1184 = vunpack.c.l.b16 %v289
  %v1185 = vunpack.c.l.b16 %v290
  %v1186 = vunpack.c.l.b16 %v291
  %v1187 = vunpack.c.l.b16 %v292
  %v1188 = vunpack.c.l.b16 %v293
  %v1189 = vunpack.c.l.b16 %v294
  %v1190 = vunpack.c.l.b16 %v295
  %v1191 = vunpack.c.l.b16 %v296
  %v1192 = vunpack.c.l.b16 %v297
  %v1193 = vunpack.c.l.b16 %v298
  %v1194 = vunpack.c.l.b16 %v299
  %v1195 = vunpack.c.l.b16 %v300
  %v1196 = vunpack.c.l.b16 %v301
  %v1197 = vunpack.c.l.b16 %v302
  %v1198 = vunpack.c.l.b16 %v303
  %v1199 = vunpack.c.l.b16 %v304
  %v1200 = vunpack.c.l.b16 %v305
  %v1201 = vunpack.c.l.b16 %v306
  %v1202 = vunpack.c.l.b16 %v307
  %v1203 = vunpack.c.l.b16 %v308
  %v1204 = vunpack.c.l.b16 %v309
  %v1205 = vunpack.c.l.b16 %v310
  %v1206 = vunpack.c.l.b16 %v311
  %v1207 = vunpack.c.l.b16 %v312
  %v1208 = vunpack.c.l.b16 %v313
  %v1209 = vunpack.c.l.b16 %v314
  %v1210 = vunpack.c.l.b16 %v315
  %v1211 = vunpack.c.l.b16 %v316
  %v1212 = vunpack.c.l.b16 %v317
  %v1213 = vunpack.c.l.b16 %v318
  %v1214 = vunpack.c.l.b16 %v319
  %v1215 = vunpack.c.l.b16 %v320
  %v1216 = vunpack.c.l.b16 %v321
  %v1217 = vunpack.c.l.b16 %v322
  %v1218 = vunpack.c.l.b16 %v323
  %v1219 = vunpack.c.l.b16 %v324
  %v1220 = vunpack.c.l.b16 %v325
  %v1221 = vunpack.c.l.b16 %v326
  %v1222 = vunpack.c.l.b16 %v327
  %v1223 = vunpack.c.l.b16 %v328
  %v1224 = vunpack.c.l.b16 %v329
  %v1225 = vunpack.c.l.b16 %v330
  %v1226 = vunpack.c.l.b16 %v331
  %v1227 = vunpack.c.l.b16 %v332
  %v1228 = vunpack.c.l.b16 %v333
  %v1229 = vunpack.c.l.b16 %v334
  %v1230 = vunpack.c.l.b16 %v335
  %v1231 = vunpack.c.l.b16 %v336
  %v1232 = vunpack.c.l.b16 %v337
  %v1233 = vunpack.c.l.b16 %v338
  %v1234 = vunpack.c.l.b16 %v339
  %v1235 = vunpack.c.l.b16 %v340
  %v1236 = vunpack.c.l.b16 %v341
  %v1237 = vunpack.c.l.b16 %v342
  %v1238 = vunpack.c.l.b16 %v343
  %v1239 = vunpack.c.l.b16 %v344
  %v1240 = vunpack.c.l.b16 %v345
  %v1241 = vunpack.c.l.b16 %v346
  %v1242 = vunpack.c.l.b16 %v347
  %v1243 = vunpack.c.l.b16 %v348
  %v1244 = vunpack.c.l.b16 %v349
  %v1245 = vunpack.c.l.b16 %v350
  %v1246 = vunpack.c.l.b16 %v351
  %v1247 = vunpack.c.l.b16 %v352
  %v1248 = vunpack.c.l.b16 %v353
  %v1249 = vunpack.c.l.b16 %v354
  %v1250 = vunpack.c.l.b16 %v355
  %v1251 = vunpack.c.l.b16 %v356
  %v1252 = vunpack.c.l.b16 %v357
  %v1253 = vunpack.c.l.b16 %v358
  %v1254 = vunpack.c.l.b16 %v359
  %v1255 = vunpack.c.l.b16 %v360
  %v1256 = vunpack.c.l.b16 %v361
  %v1257 = vunpack.c.l.b16 %v362
  %v1258 = vunpack.c.l.b16 %v363
  %v1259 = vunpack.c.l.b16 %v364
  %v1260 = vunpack.c.l.b16 %v365
  %v1261 = vunpack.c.l.b16 %v366
  %v1262 = vunpack.c.l.b16 %v367
  %v1263 = vunpack.c.l.b16 %v368
  %v1264 = vunpack.c.l.b16 %v369
  %v1265 = vunpack.c.l.b16 %v370
  %v1266 = vunpack.c.l.b16 %v371
  %v1267 = vunpack.c.l.b16 %v372
  %v1268 = vunpack.c.l.b16 %v373
  %v1269 = vunpack.c.l.b16 %v374
  %v1270 = vunpack.c.l.b16 %v375
  %v1271 = vunpack.c.l.b16 %v376
  %v1272 = vunpack.c.l.b16 %v377
  %v1273 = vunpack.c.l.b16 %v378
  %v1274 = vunpack.c.l.b16 %v379
  %v1275 = vunpack.c.l.b16 %v380
  %v1276 = vunpack.c.l.b16 %v381
  %v1277 = vunpack.c.l.b16 %v382
  %v1278 = vunpack.c.l.b16 %v383
  %v1279 = vunpack.c.l.b16 %v384
  %v1280 = vunpack.c.l.b16 %v385
  %v1281 = vunpack.c.l.b16 %v386
  %v1282 = vunpack.c.l.b16 %v387
  %v1283 = vunpack.c.l.b16 %v388
  %v1284 = vunpack.c.l.b16 %v389
  %v1285 = vunpack.c.l.b16 %v390
  %v1286 = vunpack.c.l.b16 %v391
  %v1287 = vunpack.c.l.b16 %v392
  %v1288 = vunpack.c.l.b16 %v393
  %v1289 = vunpack.c.l.b16 %v394
  %v1290 = vunpack.c.l.b16 %v395
  %v1291 = vunpack.c.l.b16 %v396
  %v1292 = vunpack.c.l.b16 %v397
  %v1293 = vunpack.c.l.b16 %v398
  %v1294 = vunpack.c.l.b16 %v399
  %v1295 = vunpack.c.l.b16 %v400
  %v1296 = vunpack.c.l.b16 %v401
  %v1297 = vunpack.c.l.b16 %v402
  %v1298 = vunpack.c.l.b16 %v403
  %v1299 = vunpack.c.l.b16 %v404
  %v1300 = vunpack.c.l.b16 %v405
  %v1301 = vunpack.c.l.b16 %v406
  %v1302 = vunpack.c.l.b16 %v407
  %v1303 = vunpack.c.l.b16 %v408
  %v1304 = vunpack.c.l.b16 %v409
  %v1305 = vunpack.c.l.b16 %v410
  %v1306 = vunpack.c.l.b16 %v411
  %v1307 = vunpack.c.l.b16 %v412
  %v1308 = vunpack.c.l.b16 %v413
  %v1309 = vunpack.c.l.b16 %v414
  %v1310 = vunpack.c.l.b16 %v415
  %v1311 = vunpack.c.l.b16 %v416
  %v1312 = vunpack.c.l.b16 %v417
  %v1313 = vunpack.c.l.b16 %v418
  %v1314 = vunpack.c.l.b16 %v419
  %v1315 = vunpack.c.l.b16 %v420
  %v1316 = vunpack.c.l.b16 %v421
  %v1317 = vunpack.c.l.b16 %v422
  %v1318 = vunpack.c.l.b16 %v423
  %v1319 = vunpack.c.l.b16 %v424
  %v1320 = vunpack.c.l.b16 %v425
  %v1321 = vunpack.c.l.b16 %v426
  %v1322 = vunpack.c.l.b16 %v427
  %v1323 = vunpack.c.l.b16 %v428
  %v1324 = vpack.c.b16 %v941, %v940
  %v1325 = vpack.c.b16 %v943, %v942
  %v1326 = vpack.c.b16 %v945, %v944
  %v1327 = vpack.c.b16 %v947, %v946
  %v1328 = vpack.c.b16 %v949, %v948
  %v1329 = vpack.c.b16 %v951, %v950
  %v1330 = vpack.c.b16 %v953, %v952
  %v1331 = vpack.c.b16 %v955, %v954
  %v1332 = vpack.c.b16 %v957, %v956
  %v1333 = vpack.c.b16 %v959, %v958
  %v1334 = vpack.c.b16 %v961, %v960
  %v1335 = vpack.c.b16 %v963, %v962
  %v1336 = vpack.c.b16 %v965, %v964
  %v1337 = vpack.c.b16 %v967, %v966
  %v1338 = vpack.c.b16 %v969, %v968
  %v1339 = vpack.c.b16 %v971, %v970
  %v1340 = vpack.c.b16 %v973, %v972
  %v1341 = vpack.c.b16 %v975, %v974
  %v1342 = vpack.c.b16 %v977, %v976
  %v1343 = vpack.c.b16 %v979, %v978
  %v1344 = vpack.c.b16 %v981, %v980
  %v1345 = vpack.c.b16 %v983, %v982
  %v1346 = vpack.c.b16 %v985, %v984
  %v1347 = vpack.c.b16 %v987, %v986
  %v1348 = vpack.c.b16 %v989, %v988
  %v1349 = vpack.c.b16 %v991, %v990
  %v1350 = vpack.c.b16 %v993, %v992
  %v1351 = vpack.c.b16 %v995, %v994
  %v1352 = vpack.c.b16 %v997, %v996
  %v1353 = vpack.c.b16 %v999, %v998
  %v1354 = vpack.c.b16 %v1001, %v1000
  %v1355 = vpack.c.b16 %v1003, %v1002
  %v1356 = vpack.c.b16 %v1005, %v1004
  %v1357 = vpack.c.b16 %v1007, %v1006
  %v1358 = vpack.c.b16 %v1009, %v1008
  %v1359 = vpack.c.b16 %v1011, %v1010
  %v1360 = vpack.c.b16 %v1013, %v1012
  %v1361 = vpack.c.b16 %v1015, %v1014
  %v1362 = vpack.c.b16 %v1017, %v1016
  %v1363 = vpack.c.b16 %v1019, %v1018
  %v1364 = vpack.c.b16 %v1021, %v1020
  %v1365 = vpack.c.b16 %v1023, %v1022
  %v1366 = vpack.c.b16 %v1025, %v1024
  %v1367 = vpack.c.b16 %v1027, %v1026
  %v1368 = vpack.c.b16 %v1029, %v1028
  %v1369 = vpack.c.b16 %v1031, %v1030
  %v1370 = vpack.c.b16 %v1033, %v1032
  %v1371 = vpack.c.b16 %v1035, %v1034
  %v1372 = vpack.c.b16 %v1037, %v1036
  %v1373 = vpack.c.b16 %v1039, %v1038
  %v1374 = vpack.c.b16 %v1041, %v1040
  %v1375 = vpack.c.b16 %v1043, %v1042
  %v1376 = vpack.c.b16 %v1045, %v1044
  %v1377 = vpack.c.b16 %v1047, %v1046
  %v1378 = vpack.c.b16 %v1049, %v1048
  %v1379 = vpack.c.b16 %v1051, %v1050
  %v1380 = vpack.c.b16 %v1053, %v1052
  %v1381 = vpack.c.b16 %v1055, %v1054
  %v1382 = vpack.c.b16 %v1057, %v1056
  %v1383 = vpack.c.b16 %v1059, %v1058
  %v1384 = vpack.c.b16 %v1061, %v1060
  %v1385 = vpack.c.b16 %v1063, %v1062
  %v1386 = vpack.c.b16 %v1065, %v1064
  %v1387 = vpack.c.b16 %v1067, %v1066
  %v1388 = vpack.c.b16 %v1069, %v1068
  %v1389 = vpack.c.b16 %v1071, %v1070
  %v1390 = vpack.c.b16 %v1073, %v1072
  %v1391 = vpack.c.b16 %v1075, %v1074
  %v1392 = vpack.c.b16 %v1077, %v1076
  %v1393 = vpack.c.b16 %v1079, %v1078
  %v1394 = vpack.c.b16 %v1081, %v1080
  %v1395 = vpack.c.b16 %v1083, %v1082
  %v1396 = vpack.c.b16 %v1085, %v1084
  %v1397 = vpack.c.b16 %v1087, %v1086
  %v1398 = vpack.c.b16 %v1089, %v1088
  %v1399 = vpack.c.b16 %v1091, %v1090
  %v1400 = vpack.c.b16 %v1093, %v1092
  %v1401 = vpack.c.b16 %v1095, %v1094
  %v1402 = vpack.c.b16 %v1097, %v1096
  %v1403 = vpack.c.b16 %v1099, %v1098
  %v1404 = vpack.c.b16 %v1101, %v1100
  %v1405 = vpack.c.b16 %v1103, %v1102
  %v1406 = vpack.c.b16 %v1105, %v1104
  %v1407 = vpack.c.b16 %v1107, %v1106
  %v1408 = vpack.c.b16 %v1109, %v1108
  %v1409 = vpack.c.b16 %v1111, %v1110
  %v1410 = vpack.c.b16 %v1113, %v1112
  %v1411 = vpack.c.b16 %v1115, %v1114
  %v1412 = vpack.c.b16 %v1117, %v1116
  %v1413 = vpack.c.b16 %v1119, %v1118
  %v1414 = vpack.c.b16 %v1121, %v1120
  %v1415 = vpack.c.b16 %v1123, %v1122
  %v1416 = vpack.c.b16 %v1125, %v1124
  %v1417 = vpack.c.b16 %v1127, %v1126
  %v1418 = vpack.c.b16 %v1129, %v1128
  %v1419 = vpack.c.b16 %v1131, %v1130
  %v1420 = vpack.c.b16 %v1133, %v1132
  %v1421 = vpack.c.b16 %v1135, %v1134
  %v1422 = vpack.c.b16 %v1137, %v1136
  %v1423 = vpack.c.b16 %v1139, %v1138
  %v1424 = vpack.c.b16 %v1141, %v1140
  %v1425 = vpack.c.b16 %v1143, %v1142
  %v1426 = vpack.c.b16 %v1145, %v1144
  %v1427 = vpack.c.b16 %v1147, %v1146
  %v1428 = vpack.c.b16 %v1149, %v1148
  %v1429 = vpack.c.b16 %v1151, %v1150
  %v1430 = vpack.c.b16 %v1153, %v1152
  %v1431 = vpack.c.b16 %v1155, %v1154
  %v1432 = vpack.c.b16 %v1157, %v1156
  %v1433 = vpack.c.b16 %v1159, %v1158
  %v1434 = vpack.c.b16 %v1161, %v1160
  %v1435 = vpack.c.b16 %v1163, %v1162
  %v1436 = vpack.c.b16 %v1165, %v1164
  %v1437 = vpack.c.b16 %v1167, %v1166
  %v1438 = vpack.c.b16 %v1169, %v1168
  %v1439 = vpack.c.b16 %v1171, %v1170
  %v1440 = vpack.c.b16 %v1173, %v1172
  %v1441 = vpack.c.b16 %v1175, %v1174
  %v1442 = vpack.c.b16 %v1177, %v1176
  %v1443 = vpack.c.b16 %v1179, %v1178
  %v1444 = vpack.c.b16 %v1181, %v1180
  %v1445 = vpack.c.b16 %v1183, %v1182
  %v1446 = vpack.c.b16 %v1185, %v1184
  %v1447 = vpack.c.b16 %v1187, %v1186
  %v1448 = vpack.c.b16 %v1189, %v1188
  %v1449 = vpack.c.b16 %v1191, %v1190
  %v1450 = vpack.c.b16 %v1193, %v1192
  %v1451 = vpack.c.b16 %v1195, %v1194
  %v1452 = vpack.c.b16 %v1197, %v1196
  %v1453 = vpack.c.b16 %v1199, %v1198
  %v1454 = vpack.c.b16 %v1201, %v1200
  %v1455 = vpack.c.b16 %v1203, %v1202
  %v1456 = vpack.c.b16 %v1205, %v1204
  %v1457 = vpack.c.b16 %v1207, %v1206
  %v1458 = vpack.c.b16 %v1209, %v1208
  %v1459 = vpack.c.b16 %v1211, %v1210
  %v1460 = vpack.c.b16 %v1213, %v1212
  %v1461 = vpack.c.b16 %v1215, %v1214
  %v1462 = vpack.c.b16 %v1217, %v1216
  %v1463 = vpack.c.b16 %v1219, %v1218
  %v1464 = vpack.c.b16 %v1221, %v1220
  %v1465 = vpack.c.b16 %v1223, %v1222
  %v1466 = vpack.c.b16 %v1225, %v1224
  %v1467 = vpack.c.b16 %v1227, %v1226
  %v1468 = vpack.c.b16 %v1229, %v1228
  %v1469 = vpack.c.b16 %v1231, %v1230
  %v1470 = vpack.c.b16 %v1233, %v1232
  %v1471 = vpack.c.b16 %v1235, %v1234
  %v1472 = vpack.c.b16 %v1237, %v1236
  %v1473 = vpack.c.b16 %v1239, %v1238
  %v1474 = vpack.c.b16 %v1241, %v1240
  %v1475 = vpack.c.b16 %v1243, %v1242
  %v1476 = vpack.c.b16 %v1245, %v1244
  %v1477 = vpack.c.b16 %v1247, %v1246
  %v1478 = vpack.c.b16 %v1249, %v1248
  %v1479 = vpack.c.b16 %v1251, %v1250
  %v1480 = vpack.c.b16 %v1253, %v1252
  %v1481 = vpack.c.b16 %v1255, %v1254
  %v1482 = vpack.c.b16 %v1257, %v1256
  %v1483 = vpack.c.b16 %v1259, %v1258
  %v1484 = vpack.c.b16 %v1261, %v1260
  %v1485 = vpack.c.b16 %v1263, %v1262
  %v1486 = vpack.c.b16 %v1265, %v1264
  %v1487 = vpack.c.b16 %v1267, %v1266
  %v1488 = vpack.c.b16 %v1269, %v1268
  %v1489 = vpack.c.b16 %v1271, %v1270
  %v1490 = vpack.c.b16 %v1273, %v1272
  %v1491 = vpack.c.b16 %v1275, %v1274
  %v1492 = vpack.c.b16 %v1277, %v1276
  %v1493 = vpack.c.b16 %v1279, %v1278
  %v1494 = vpack.c.b16 %v1281, %v1280
  %v1495 = vpack.c.b16 %v1283, %v1282
  %v1496 = vpack.c.b16 %v1285, %v1284
  %v1497 = vpack.c.b16 %v1287, %v1286
  %v1498 = vpack.c.b16 %v1289, %v1288
  %v1499 = vpack.c.b16 %v1291, %v1290
  %v1500 = vpack.c.b16 %v1293, %v1292
  %v1501 = vpack.c.b16 %v1295, %v1294
  %v1502 = vpack.c.b16 %v1297, %v1296
  %v1503 = vpack.c.b16 %v1299, %v1298
  %v1504 = vpack.c.b16 %v1301, %v1300
  %v1505 = vpack.c.b16 %v1303, %v1302
  %v1506 = vpack.c.b16 %v1305, %v1304
  %v1507 = vpack.c.b16 %v1307, %v1306
  %v1508 = vpack.c.b16 %v1309, %v1308
  %v1509 = vpack.c.b16 %v1311, %v1310
  %v1510 = vpack.c.b16 %v1313, %v1312
  %v1511 = vpack.c.b16 %v1315, %v1314
  %v1512 = vpack.c.b16 %v1317, %v1316
  %v1513 = vpack.c.b16 %v1319, %v1318
  %v1514 = vpack.c.b16 %v1321, %v1320
  %v1515 = vpack.c.b16 %v1323, %v1322
  %1708 = vmatprep.subr.bf16.mxu0 0
  %1709 = vmatpush1.bf16.msra.mxu0 %v1324
  %1710 = vmatprep.subr.bf16.mxu0 0
  %1711 = vmatpush1.bf16.msra.mxu0 %v1325
  %1712 = vmatprep.subr.bf16.mxu0 0
  %1713 = vmatpush1.bf16.msra.mxu0 %v1326
  %1714 = vmatprep.subr.bf16.mxu0 0
  %1715 = vmatpush1.bf16.msra.mxu0 %v1327
  %1716 = vmatprep.subr.bf16.mxu0 0
  %1717 = vmatpush1.bf16.msra.mxu0 %v1328
  %1718 = vmatprep.subr.bf16.mxu0 0
  %1719 = vmatpush1.bf16.msra.mxu0 %v1329
  %1720 = vmatprep.subr.bf16.mxu0 0
  %1721 = vmatpush1.bf16.msra.mxu0 %v1330
  %1722 = vmatprep.subr.bf16.mxu0 0
  %1723 = vmatpush1.bf16.msra.mxu0 %v1331
  %1724 = vmatprep.subr.bf16.mxu0 0
  %1725 = vmatpush1.bf16.msra.mxu0 %v1332
  %1726 = vmatprep.subr.bf16.mxu0 0
  %1727 = vmatpush1.bf16.msra.mxu0 %v1333
  %1728 = vmatprep.subr.bf16.mxu0 0
  %1729 = vmatpush1.bf16.msra.mxu0 %v1334
  %1730 = vmatprep.subr.bf16.mxu0 0
  %1731 = vmatpush1.bf16.msra.mxu0 %v1335
  %1732 = vmatprep.subr.bf16.mxu0 0
  %1733 = vmatpush1.bf16.msra.mxu0 %v1336
  %1734 = vmatprep.subr.bf16.mxu0 0
  %1735 = vmatpush1.bf16.msra.mxu0 %v1337
  %1736 = vmatprep.subr.bf16.mxu0 0
  %1737 = vmatpush1.bf16.msra.mxu0 %v1338
  %1738 = vmatprep.subr.bf16.mxu0 0
  %1739 = vmatpush1.bf16.msra.mxu0 %v1339
  %1740 = vmatprep.mubr.bf16.mxu0 %v509
  %1741 = vmatmul.mubr.bf16.gmra.mrb[0].mxu0 %v508
  %v1742 = vpop.f32.mrb[0].mxu0
  %v1743 = vadd.f32 %v434, %v1742
  %v1744 = vpop.f32.mrb[0].mxu0
  %v1745 = vpop.f32.mrb[0].mxu0
  %v1746 = vadd.f32 %v434, %v1745
  %v1747 = vpop.f32.mrb[0].mxu0
  %1748 = vdwg.mxu0
  %1749 = vmatprep.subr.bf16.mxu0 0
  %1750 = vmatpush1.bf16.msra.mxu0 %v1340
  %1751 = vmatprep.subr.bf16.mxu0 0
  %1752 = vmatpush1.bf16.msra.mxu0 %v1341
  %1753 = vmatprep.subr.bf16.mxu0 0
  %1754 = vmatpush1.bf16.msra.mxu0 %v1342
  %1755 = vmatprep.subr.bf16.mxu0 0
  %1756 = vmatpush1.bf16.msra.mxu0 %v1343
  %1757 = vmatprep.subr.bf16.mxu0 0
  %1758 = vmatpush1.bf16.msra.mxu0 %v1344
  %1759 = vmatprep.subr.bf16.mxu0 0
  %1760 = vmatpush1.bf16.msra.mxu0 %v1345
  %1761 = vmatprep.subr.bf16.mxu0 0
  %1762 = vmatpush1.bf16.msra.mxu0 %v1346
  %1763 = vmatprep.subr.bf16.mxu0 0
  %1764 = vmatpush1.bf16.msra.mxu0 %v1347
  %1765 = vmatprep.subr.bf16.mxu0 0
  %1766 = vmatpush1.bf16.msra.mxu0 %v1348
  %1767 = vmatprep.subr.bf16.mxu0 0
  %1768 = vmatpush1.bf16.msra.mxu0 %v1349
  %1769 = vmatprep.subr.bf16.mxu0 0
  %1770 = vmatpush1.bf16.msra.mxu0 %v1350
  %1771 = vmatprep.subr.bf16.mxu0 0
  %1772 = vmatpush1.bf16.msra.mxu0 %v1351
  %1773 = vmatprep.subr.bf16.mxu0 0
  %1774 = vmatpush1.bf16.msra.mxu0 %v1352
  %1775 = vmatprep.subr.bf16.mxu0 0
  %1776 = vmatpush1.bf16.msra.mxu0 %v1353
  %1777 = vmatprep.subr.bf16.mxu0 0
  %1778 = vmatpush1.bf16.msra.mxu0 %v1354
  %1779 = vmatprep.subr.bf16.mxu0 0
  %1780 = vmatpush1.bf16.msra.mxu0 %v1355
  %1781 = vmatprep.mubr.bf16.mxu0 %v511
  %1782 = vmatmul.mubr.bf16.gmra.mrb[0].mxu0 %v510
  %v1783 = vpop.f32.mrb[0].mxu0
  %v1784 = vadd.f32 %v1743, %v1783
  %v1785 = vpop.f32.mrb[0].mxu0
  %v1786 = vpop.f32.mrb[0].mxu0
  %v1787 = vadd.f32 %v1746, %v1786
  %v1788 = vpop.f32.mrb[0].mxu0
  %1789 = vdwg.mxu0
  %1790 = vmatprep.subr.bf16.mxu0 0
  %1791 = vmatpush1.bf16.msra.mxu0 %v1356
  %1792 = vmatprep.subr.bf16.mxu0 0
  %1793 = vmatpush1.bf16.msra.mxu0 %v1357
  %1794 = vmatprep.subr.bf16.mxu0 0
  %1795 = vmatpush1.bf16.msra.mxu0 %v1358
  %1796 = vmatprep.subr.bf16.mxu0 0
  %1797 = vmatpush1.bf16.msra.mxu0 %v1359
  %1798 = vmatprep.subr.bf16.mxu0 0
  %1799 = vmatpush1.bf16.msra.mxu0 %v1360
  %1800 = vmatprep.subr.bf16.mxu0 0
  %1801 = vmatpush1.bf16.msra.mxu0 %v1361
  %1802 = vmatprep.subr.bf16.mxu0 0
  %1803 = vmatpush1.bf16.msra.mxu0 %v1362
  %1804 = vmatprep.subr.bf16.mxu0 0
  %1805 = vmatpush1.bf16.msra.mxu0 %v1363
  %1806 = vmatprep.subr.bf16.mxu0 0
  %1807 = vmatpush1.bf16.msra.mxu0 %v1364
  %1808 = vmatprep.subr.bf16.mxu0 0
  %1809 = vmatpush1.bf16.msra.mxu0 %v1365
  %1810 = vmatprep.subr.bf16.mxu0 0
  %1811 = vmatpush1.bf16.msra.mxu0 %v1366
  %1812 = vmatprep.subr.bf16.mxu0 0
  %1813 = vmatpush1.bf16.msra.mxu0 %v1367
  %1814 = vmatprep.subr.bf16.mxu0 0
  %1815 = vmatpush1.bf16.msra.mxu0 %v1368
  %1816 = vmatprep.subr.bf16.mxu0 0
  %1817 = vmatpush1.bf16.msra.mxu0 %v1369
  %1818 = vmatprep.subr.bf16.mxu0 0
  %1819 = vmatpush1.bf16.msra.mxu0 %v1370
  %1820 = vmatprep.subr.bf16.mxu0 0
  %1821 = vmatpush1.bf16.msra.mxu0 %v1371
  %1822 = vmatprep.mubr.bf16.mxu0 %v513
  %1823 = vmatmul.mubr.bf16.gmra.mrb[0].mxu0 %v512
  %v1824 = vpop.f32.mrb[0].mxu0
  %v1825 = vadd.f32 %v1784, %v1824
  %v1826 = vpop.f32.mrb[0].mxu0
  %v1827 = vpop.f32.mrb[0].mxu0
  %v1828 = vadd.f32 %v1787, %v1827
  %v1829 = vpop.f32.mrb[0].mxu0
  %1830 = vdwg.mxu0
  %1831 = vmatprep.subr.bf16.mxu0 0
  %1832 = vmatpush1.bf16.msra.mxu0 %v1372
  %1833 = vmatprep.subr.bf16.mxu0 0
  %1834 = vmatpush1.bf16.msra.mxu0 %v1373
  %1835 = vmatprep.subr.bf16.mxu0 0
  %1836 = vmatpush1.bf16.msra.mxu0 %v1374
  %1837 = vmatprep.subr.bf16.mxu0 0
  %1838 = vmatpush1.bf16.msra.mxu0 %v1375
  %1839 = vmatprep.subr.bf16.mxu0 0
  %1840 = vmatpush1.bf16.msra.mxu0 %v1376
  %1841 = vmatprep.subr.bf16.mxu0 0
  %1842 = vmatpush1.bf16.msra.mxu0 %v1377
  %1843 = vmatprep.subr.bf16.mxu0 0
  %1844 = vmatpush1.bf16.msra.mxu0 %v1378
  %1845 = vmatprep.subr.bf16.mxu0 0
  %1846 = vmatpush1.bf16.msra.mxu0 %v1379
  %1847 = vmatprep.subr.bf16.mxu0 0
  %1848 = vmatpush1.bf16.msra.mxu0 %v1380
  %1849 = vmatprep.subr.bf16.mxu0 0
  %1850 = vmatpush1.bf16.msra.mxu0 %v1381
  %1851 = vmatprep.subr.bf16.mxu0 0
  %1852 = vmatpush1.bf16.msra.mxu0 %v1382
  %1853 = vmatprep.subr.bf16.mxu0 0
  %1854 = vmatpush1.bf16.msra.mxu0 %v1383
  %1855 = vmatprep.subr.bf16.mxu0 0
  %1856 = vmatpush1.bf16.msra.mxu0 %v1384
  %1857 = vmatprep.subr.bf16.mxu0 0
  %1858 = vmatpush1.bf16.msra.mxu0 %v1385
  %1859 = vmatprep.subr.bf16.mxu0 0
  %1860 = vmatpush1.bf16.msra.mxu0 %v1386
  %1861 = vmatprep.subr.bf16.mxu0 0
  %1862 = vmatpush1.bf16.msra.mxu0 %v1387
  %1863 = vmatprep.mubr.bf16.mxu0 %v515
  %1864 = vmatmul.mubr.bf16.gmra.mrb[0].mxu0 %v514
  %v1865 = vpop.f32.mrb[0].mxu0
  %v1866 = vadd.f32 %v1825, %v1865
  %v1867 = vpop.f32.mrb[0].mxu0
  %v1868 = vpop.f32.mrb[0].mxu0
  %v1869 = vadd.f32 %v1828, %v1868
  %v1870 = vpop.f32.mrb[0].mxu0
  %1871 = vdwg.mxu0
  %1872 = vmatprep.subr.bf16.mxu0 0
  %1873 = vmatpush1.bf16.msra.mxu0 %v1388
  %1874 = vmatprep.subr.bf16.mxu0 0
  %1875 = vmatpush1.bf16.msra.mxu0 %v1389
  %1876 = vmatprep.subr.bf16.mxu0 0
  %1877 = vmatpush1.bf16.msra.mxu0 %v1390
  %1878 = vmatprep.subr.bf16.mxu0 0
  %1879 = vmatpush1.bf16.msra.mxu0 %v1391
  %1880 = vmatprep.subr.bf16.mxu0 0
  %1881 = vmatpush1.bf16.msra.mxu0 %v1392
  %1882 = vmatprep.subr.bf16.mxu0 0
  %1883 = vmatpush1.bf16.msra.mxu0 %v1393
  %1884 = vmatprep.subr.bf16.mxu0 0
  %1885 = vmatpush1.bf16.msra.mxu0 %v1394
  %1886 = vmatprep.subr.bf16.mxu0 0
  %1887 = vmatpush1.bf16.msra.mxu0 %v1395
  %1888 = vmatprep.subr.bf16.mxu0 0
  %1889 = vmatpush1.bf16.msra.mxu0 %v1396
  %1890 = vmatprep.subr.bf16.mxu0 0
  %1891 = vmatpush1.bf16.msra.mxu0 %v1397
  %1892 = vmatprep.subr.bf16.mxu0 0
  %1893 = vmatpush1.bf16.msra.mxu0 %v1398
  %1894 = vmatprep.subr.bf16.mxu0 0
  %1895 = vmatpush1.bf16.msra.mxu0 %v1399
  %1896 = vmatprep.subr.bf16.mxu0 0
  %1897 = vmatpush1.bf16.msra.mxu0 %v1400
  %1898 = vmatprep.subr.bf16.mxu0 0
  %1899 = vmatpush1.bf16.msra.mxu0 %v1401
  %1900 = vmatprep.subr.bf16.mxu0 0
  %1901 = vmatpush1.bf16.msra.mxu0 %v1402
  %1902 = vmatprep.subr.bf16.mxu0 0
  %1903 = vmatpush1.bf16.msra.mxu0 %v1403
  %1904 = vmatprep.mubr.bf16.mxu0 %v517
  %1905 = vmatmul.mubr.bf16.gmra.mrb[0].mxu0 %v516
  %v1906 = vpop.f32.mrb[0].mxu0
  %v1907 = vadd.f32 %v1866, %v1906
  %v1908 = vpop.f32.mrb[0].mxu0
  %v1909 = vpop.f32.mrb[0].mxu0
  %v1910 = vadd.f32 %v1869, %v1909
  %v1911 = vpop.f32.mrb[0].mxu0
  %1912 = vdwg.mxu0
  %1913 = vmatprep.subr.bf16.mxu0 0
  %1914 = vmatpush1.bf16.msra.mxu0 %v1404
  %1915 = vmatprep.subr.bf16.mxu0 0
  %1916 = vmatpush1.bf16.msra.mxu0 %v1405
  %1917 = vmatprep.subr.bf16.mxu0 0
  %1918 = vmatpush1.bf16.msra.mxu0 %v1406
  %1919 = vmatprep.subr.bf16.mxu0 0
  %1920 = vmatpush1.bf16.msra.mxu0 %v1407
  %1921 = vmatprep.subr.bf16.mxu0 0
  %1922 = vmatpush1.bf16.msra.mxu0 %v1408
  %1923 = vmatprep.subr.bf16.mxu0 0
  %1924 = vmatpush1.bf16.msra.mxu0 %v1409
  %1925 = vmatprep.subr.bf16.mxu0 0
  %1926 = vmatpush1.bf16.msra.mxu0 %v1410
  %1927 = vmatprep.subr.bf16.mxu0 0
  %1928 = vmatpush1.bf16.msra.mxu0 %v1411
  %1929 = vmatprep.subr.bf16.mxu0 0
  %1930 = vmatpush1.bf16.msra.mxu0 %v1412
  %1931 = vmatprep.subr.bf16.mxu0 0
  %1932 = vmatpush1.bf16.msra.mxu0 %v1413
  %1933 = vmatprep.subr.bf16.mxu0 0
  %1934 = vmatpush1.bf16.msra.mxu0 %v1414
  %1935 = vmatprep.subr.bf16.mxu0 0
  %1936 = vmatpush1.bf16.msra.mxu0 %v1415
  %1937 = vmatprep.subr.bf16.mxu0 0
  %1938 = vmatpush1.bf16.msra.mxu0 %v1416
  %1939 = vmatprep.subr.bf16.mxu0 0
  %1940 = vmatpush1.bf16.msra.mxu0 %v1417
  %1941 = vmatprep.subr.bf16.mxu0 0
  %1942 = vmatpush1.bf16.msra.mxu0 %v1418
  %1943 = vmatprep.subr.bf16.mxu0 0
  %1944 = vmatpush1.bf16.msra.mxu0 %v1419
  %1945 = vmatprep.mubr.bf16.mxu0 %v519
  %1946 = vmatmul.mubr.bf16.gmra.mrb[0].mxu0 %v518
  %v1947 = vpop.f32.mrb[0].mxu0
  %v1948 = vadd.f32 %v1907, %v1947
  %v1949 = vpop.f32.mrb[0].mxu0
  %v1950 = vpop.f32.mrb[0].mxu0
  %v1951 = vadd.f32 %v1910, %v1950
  %v1952 = vpop.f32.mrb[0].mxu0
  %1953 = vdwg.mxu0
  %1954 = vmatprep.subr.bf16.mxu0 0
  %1955 = vmatpush1.bf16.msra.mxu0 %v1420
  %1956 = vmatprep.subr.bf16.mxu0 0
  %1957 = vmatpush1.bf16.msra.mxu0 %v1421
  %1958 = vmatprep.subr.bf16.mxu0 0
  %1959 = vmatpush1.bf16.msra.mxu0 %v1422
  %1960 = vmatprep.subr.bf16.mxu0 0
  %1961 = vmatpush1.bf16.msra.mxu0 %v1423
  %1962 = vmatprep.subr.bf16.mxu0 0
  %1963 = vmatpush1.bf16.msra.mxu0 %v1424
  %1964 = vmatprep.subr.bf16.mxu0 0
  %1965 = vmatpush1.bf16.msra.mxu0 %v1425
  %1966 = vmatprep.subr.bf16.mxu0 0
  %1967 = vmatpush1.bf16.msra.mxu0 %v1426
  %1968 = vmatprep.subr.bf16.mxu0 0
  %1969 = vmatpush1.bf16.msra.mxu0 %v1427
  %1970 = vmatprep.subr.bf16.mxu0 0
  %1971 = vmatpush1.bf16.msra.mxu0 %v1428
  %1972 = vmatprep.subr.bf16.mxu0 0
  %1973 = vmatpush1.bf16.msra.mxu0 %v1429
  %1974 = vmatprep.subr.bf16.mxu0 0
  %1975 = vmatpush1.bf16.msra.mxu0 %v1430
  %1976 = vmatprep.subr.bf16.mxu0 0
  %1977 = vmatpush1.bf16.msra.mxu0 %v1431
  %1978 = vmatprep.subr.bf16.mxu0 0
  %1979 = vmatpush1.bf16.msra.mxu0 %v1432
  %1980 = vmatprep.subr.bf16.mxu0 0
  %1981 = vmatpush1.bf16.msra.mxu0 %v1433
  %1982 = vmatprep.subr.bf16.mxu0 0
  %1983 = vmatpush1.bf16.msra.mxu0 %v1434
  %1984 = vmatprep.subr.bf16.mxu0 0
  %1985 = vmatpush1.bf16.msra.mxu0 %v1435
  %1986 = vmatprep.mubr.bf16.mxu0 %v521
  %1987 = vmatmul.mubr.bf16.gmra.mrb[0].mxu0 %v520
  %v1988 = vpop.f32.mrb[0].mxu0
  %v1989 = vadd.f32 %v1948, %v1988
  %v1990 = vpop.f32.mrb[0].mxu0
  %v1991 = vpop.f32.mrb[0].mxu0
  %v1992 = vadd.f32 %v1951, %v1991
  %v1993 = vpop.f32.mrb[0].mxu0
  %1994 = vdwg.mxu0
  %1995 = vmatprep.subr.bf16.mxu0 0
  %1996 = vmatpush1.bf16.msra.mxu0 %v1436
  %1997 = vmatprep.subr.bf16.mxu0 0
  %1998 = vmatpush1.bf16.msra.mxu0 %v1437
  %1999 = vmatprep.subr.bf16.mxu0 0
  %2000 = vmatpush1.bf16.msra.mxu0 %v1438
  %2001 = vmatprep.subr.bf16.mxu0 0
  %2002 = vmatpush1.bf16.msra.mxu0 %v1439
  %2003 = vmatprep.subr.bf16.mxu0 0
  %2004 = vmatpush1.bf16.msra.mxu0 %v1440
  %2005 = vmatprep.subr.bf16.mxu0 0
  %2006 = vmatpush1.bf16.msra.mxu0 %v1441
  %2007 = vmatprep.subr.bf16.mxu0 0
  %2008 = vmatpush1.bf16.msra.mxu0 %v1442
  %2009 = vmatprep.subr.bf16.mxu0 0
  %2010 = vmatpush1.bf16.msra.mxu0 %v1443
  %2011 = vmatprep.subr.bf16.mxu0 0
  %2012 = vmatpush1.bf16.msra.mxu0 %v1444
  %2013 = vmatprep.subr.bf16.mxu0 0
  %2014 = vmatpush1.bf16.msra.mxu0 %v1445
  %2015 = vmatprep.subr.bf16.mxu0 0
  %2016 = vmatpush1.bf16.msra.mxu0 %v1446
  %2017 = vmatprep.subr.bf16.mxu0 0
  %2018 = vmatpush1.bf16.msra.mxu0 %v1447
  %2019 = vmatprep.subr.bf16.mxu0 0
  %2020 = vmatpush1.bf16.msra.mxu0 %v1448
  %2021 = vmatprep.subr.bf16.mxu0 0
  %2022 = vmatpush1.bf16.msra.mxu0 %v1449
  %2023 = vmatprep.subr.bf16.mxu0 0
  %2024 = vmatpush1.bf16.msra.mxu0 %v1450
  %2025 = vmatprep.subr.bf16.mxu0 0
  %2026 = vmatpush1.bf16.msra.mxu0 %v1451
  %2027 = vmatprep.mubr.bf16.mxu0 %v523
  %2028 = vmatmul.mubr.bf16.gmra.mrb[0].mxu0 %v522
  %v2029 = vpop.f32.mrb[0].mxu0
  %v2030 = vadd.f32 %v1989, %v2029
  %v2031 = vpop.f32.mrb[0].mxu0
  %v2032 = vpop.f32.mrb[0].mxu0
  %v2033 = vadd.f32 %v1992, %v2032
  %v2034 = vpop.f32.mrb[0].mxu0
  %2035 = vdwg.mxu0
  %2036 = vmatprep.subr.bf16.mxu0 0
  %2037 = vmatpush1.bf16.msra.mxu0 %v1452
  %2038 = vmatprep.subr.bf16.mxu0 0
  %2039 = vmatpush1.bf16.msra.mxu0 %v1453
  %2040 = vmatprep.subr.bf16.mxu0 0
  %2041 = vmatpush1.bf16.msra.mxu0 %v1454
  %2042 = vmatprep.subr.bf16.mxu0 0
  %2043 = vmatpush1.bf16.msra.mxu0 %v1455
  %2044 = vmatprep.subr.bf16.mxu0 0
  %2045 = vmatpush1.bf16.msra.mxu0 %v1456
  %2046 = vmatprep.subr.bf16.mxu0 0
  %2047 = vmatpush1.bf16.msra.mxu0 %v1457
  %2048 = vmatprep.subr.bf16.mxu0 0
  %2049 = vmatpush1.bf16.msra.mxu0 %v1458
  %2050 = vmatprep.subr.bf16.mxu0 0
  %2051 = vmatpush1.bf16.msra.mxu0 %v1459
  %2052 = vmatprep.subr.bf16.mxu0 0
  %2053 = vmatpush1.bf16.msra.mxu0 %v1460
  %2054 = vmatprep.subr.bf16.mxu0 0
  %2055 = vmatpush1.bf16.msra.mxu0 %v1461
  %2056 = vmatprep.subr.bf16.mxu0 0
  %2057 = vmatpush1.bf16.msra.mxu0 %v1462
  %2058 = vmatprep.subr.bf16.mxu0 0
  %2059 = vmatpush1.bf16.msra.mxu0 %v1463
  %2060 = vmatprep.subr.bf16.mxu0 0
  %2061 = vmatpush1.bf16.msra.mxu0 %v1464
  %2062 = vmatprep.subr.bf16.mxu0 0
  %2063 = vmatpush1.bf16.msra.mxu0 %v1465
  %2064 = vmatprep.subr.bf16.mxu0 0
  %2065 = vmatpush1.bf16.msra.mxu0 %v1466
  %2066 = vmatprep.subr.bf16.mxu0 0
  %2067 = vmatpush1.bf16.msra.mxu0 %v1467
  %2068 = vmatprep.mubr.bf16.mxu0 %v525
  %2069 = vmatmul.mubr.bf16.gmra.mrb[0].mxu0 %v524
  %v2070 = vpop.f32.mrb[0].mxu0
  %v2071 = vadd.f32 %v2030, %v2070
  %v2072 = vpop.f32.mrb[0].mxu0
  %v2073 = vpop.f32.mrb[0].mxu0
  %v2074 = vadd.f32 %v2033, %v2073
  %v2075 = vpop.f32.mrb[0].mxu0
  %2076 = vdwg.mxu0
  %2077 = vmatprep.subr.bf16.mxu0 0
  %2078 = vmatpush1.bf16.msra.mxu0 %v1468
  %2079 = vmatprep.subr.bf16.mxu0 0
  %2080 = vmatpush1.bf16.msra.mxu0 %v1469
  %2081 = vmatprep.subr.bf16.mxu0 0
  %2082 = vmatpush1.bf16.msra.mxu0 %v1470
  %2083 = vmatprep.subr.bf16.mxu0 0
  %2084 = vmatpush1.bf16.msra.mxu0 %v1471
  %2085 = vmatprep.subr.bf16.mxu0 0
  %2086 = vmatpush1.bf16.msra.mxu0 %v1472
  %2087 = vmatprep.subr.bf16.mxu0 0
  %2088 = vmatpush1.bf16.msra.mxu0 %v1473
  %2089 = vmatprep.subr.bf16.mxu0 0
  %2090 = vmatpush1.bf16.msra.mxu0 %v1474
  %2091 = vmatprep.subr.bf16.mxu0 0
  %2092 = vmatpush1.bf16.msra.mxu0 %v1475
  %2093 = vmatprep.subr.bf16.mxu0 0
  %2094 = vmatpush1.bf16.msra.mxu0 %v1476
  %2095 = vmatprep.subr.bf16.mxu0 0
  %2096 = vmatpush1.bf16.msra.mxu0 %v1477
  %2097 = vmatprep.subr.bf16.mxu0 0
  %2098 = vmatpush1.bf16.msra.mxu0 %v1478
  %2099 = vmatprep.subr.bf16.mxu0 0
  %2100 = vmatpush1.bf16.msra.mxu0 %v1479
  %2101 = vmatprep.subr.bf16.mxu0 0
  %2102 = vmatpush1.bf16.msra.mxu0 %v1480
  %2103 = vmatprep.subr.bf16.mxu0 0
  %2104 = vmatpush1.bf16.msra.mxu0 %v1481
  %2105 = vmatprep.subr.bf16.mxu0 0
  %2106 = vmatpush1.bf16.msra.mxu0 %v1482
  %2107 = vmatprep.subr.bf16.mxu0 0
  %2108 = vmatpush1.bf16.msra.mxu0 %v1483
  %2109 = vmatprep.mubr.bf16.mxu0 %v527
  %2110 = vmatmul.mubr.bf16.gmra.mrb[0].mxu0 %v526
  %v2111 = vpop.f32.mrb[0].mxu0
  %v2112 = vadd.f32 %v2071, %v2111
  %v2113 = vpop.f32.mrb[0].mxu0
  %v2114 = vpop.f32.mrb[0].mxu0
  %v2115 = vadd.f32 %v2074, %v2114
  %v2116 = vpop.f32.mrb[0].mxu0
  %2117 = vdwg.mxu0
  %2118 = vmatprep.subr.bf16.mxu0 0
  %2119 = vmatpush1.bf16.msra.mxu0 %v1484
  %2120 = vmatprep.subr.bf16.mxu0 0
  %2121 = vmatpush1.bf16.msra.mxu0 %v1485
  %2122 = vmatprep.subr.bf16.mxu0 0
  %2123 = vmatpush1.bf16.msra.mxu0 %v1486
  %2124 = vmatprep.subr.bf16.mxu0 0
  %2125 = vmatpush1.bf16.msra.mxu0 %v1487
  %2126 = vmatprep.subr.bf16.mxu0 0
  %2127 = vmatpush1.bf16.msra.mxu0 %v1488
  %2128 = vmatprep.subr.bf16.mxu0 0
  %2129 = vmatpush1.bf16.msra.mxu0 %v1489
  %2130 = vmatprep.subr.bf16.mxu0 0
  %2131 = vmatpush1.bf16.msra.mxu0 %v1490
  %2132 = vmatprep.subr.bf16.mxu0 0
  %2133 = vmatpush1.bf16.msra.mxu0 %v1491
  %2134 = vmatprep.subr.bf16.mxu0 0
  %2135 = vmatpush1.bf16.msra.mxu0 %v1492
  %2136 = vmatprep.subr.bf16.mxu0 0
  %2137 = vmatpush1.bf16.msra.mxu0 %v1493
  %2138 = vmatprep.subr.bf16.mxu0 0
  %2139 = vmatpush1.bf16.msra.mxu0 %v1494
  %2140 = vmatprep.subr.bf16.mxu0 0
  %2141 = vmatpush1.bf16.msra.mxu0 %v1495
  %2142 = vmatprep.subr.bf16.mxu0 0
  %2143 = vmatpush1.bf16.msra.mxu0 %v1496
  %2144 = vmatprep.subr.bf16.mxu0 0
  %2145 = vmatpush1.bf16.msra.mxu0 %v1497
  %2146 = vmatprep.subr.bf16.mxu0 0
  %2147 = vmatpush1.bf16.msra.mxu0 %v1498
  %2148 = vmatprep.subr.bf16.mxu0 0
  %2149 = vmatpush1.bf16.msra.mxu0 %v1499
  %2150 = vmatprep.mubr.bf16.mxu0 %v529
  %2151 = vmatmul.mubr.bf16.gmra.mrb[0].mxu0 %v528
  %v2152 = vpop.f32.mrb[0].mxu0
  %v2153 = vadd.f32 %v2112, %v2152
  %v2154 = vpop.f32.mrb[0].mxu0
  %v2155 = vpop.f32.mrb[0].mxu0
  %v2156 = vadd.f32 %v2115, %v2155
  %v2157 = vpop.f32.mrb[0].mxu0
  %2158 = vdwg.mxu0
  %2159 = vmatprep.subr.bf16.mxu0 0
  %2160 = vmatpush1.bf16.msra.mxu0 %v1500
  %2161 = vmatprep.subr.bf16.mxu0 0
  %2162 = vmatpush1.bf16.msra.mxu0 %v1501
  %2163 = vmatprep.subr.bf16.mxu0 0
  %2164 = vmatpush1.bf16.msra.mxu0 %v1502
  %2165 = vmatprep.subr.bf16.mxu0 0
  %2166 = vmatpush1.bf16.msra.mxu0 %v1503
  %2167 = vmatprep.subr.bf16.mxu0 0
  %2168 = vmatpush1.bf16.msra.mxu0 %v1504
  %2169 = vmatprep.subr.bf16.mxu0 0
  %2170 = vmatpush1.bf16.msra.mxu0 %v1505
  %2171 = vmatprep.subr.bf16.mxu0 0
  %2172 = vmatpush1.bf16.msra.mxu0 %v1506
  %2173 = vmatprep.subr.bf16.mxu0 0
  %2174 = vmatpush1.bf16.msra.mxu0 %v1507
  %2175 = vmatprep.subr.bf16.mxu0 0
  %2176 = vmatpush1.bf16.msra.mxu0 %v1508
  %2177 = vmatprep.subr.bf16.mxu0 0
  %2178 = vmatpush1.bf16.msra.mxu0 %v1509
  %2179 = vmatprep.subr.bf16.mxu0 0
  %2180 = vmatpush1.bf16.msra.mxu0 %v1510
  %2181 = vmatprep.subr.bf16.mxu0 0
  %2182 = vmatpush1.bf16.msra.mxu0 %v1511
  %2183 = vmatprep.subr.bf16.mxu0 0
  %2184 = vmatpush1.bf16.msra.mxu0 %v1512
  %2185 = vmatprep.subr.bf16.mxu0 0
  %2186 = vmatpush1.bf16.msra.mxu0 %v1513
  %2187 = vmatprep.subr.bf16.mxu0 0
  %2188 = vmatpush1.bf16.msra.mxu0 %v1514
  %2189 = vmatprep.subr.bf16.mxu0 0
  %2190 = vmatpush1.bf16.msra.mxu0 %v1515
  %2191 = vmatprep.mubr.bf16.mxu0 %v531
  %2192 = vmatmul.mubr.bf16.gmra.mrb[0].mxu0 %v530
  %v2193 = vpop.f32.mrb[0].mxu0
  %v2194 = vadd.f32 %v2153, %v2193
  %v2195 = vpop.f32.mrb[0].mxu0
  %v2196 = vpop.f32.mrb[0].mxu0
  %v2197 = vadd.f32 %v2156, %v2196
  %v2198 = vpop.f32.mrb[0].mxu0
  %2199 = vdwg.mxu0
  %v2200 = vmax.f32 %v2194, 0.0
  %v2201 = vmax.f32 %v2197, 0.0
  %v2202 = vpack.c.bf16 %v2201, %v2200
  %v2203 = vld [vmem:[%s3] sm:$0xff]
  %v2204 = vld [vmem:[%s3 + $0x8] sm:$0xff]
  %v2205 = vld [vmem:[%s3 + $0x10] sm:$0xff]
  %v2206 = vld [vmem:[%s3 + $0x18] sm:$0xff]
  %v2207 = vld [vmem:[%s3 + $0x20] sm:$0xff]
  %v2208 = vld [vmem:[%s3 + $0x28] sm:$0xff]
  %v2209 = vld [vmem:[%s3 + $0x30] sm:$0xff]
  %v2210 = vld [vmem:[%s3 + $0x38] sm:$0xff]
  %v2211 = vld [vmem:[%s3 + $0x40] sm:$0xff]
  %v2212 = vld [vmem:[%s3 + $0x48] sm:$0xff]
  %v2213 = vld [vmem:[%s3 + $0x50] sm:$0xff]
  %v2214 = vld [vmem:[%s3 + $0x58] sm:$0xff]
  %v2215 = vld [vmem:[%s3 + $0x60] sm:$0xff]
  %v2216 = vld [vmem:[%s3 + $0x68] sm:$0xff]
  %v2217 = vld [vmem:[%s3 + $0x70] sm:$0xff]
  %v2218 = vld [vmem:[%s3 + $0x78] sm:$0xff]
  %v2219 = vld [vmem:[%s3 + $0x80] sm:$0xff]
  %v2220 = vld [vmem:[%s3 + $0x88] sm:$0xff]
  %v2221 = vld [vmem:[%s3 + $0x90] sm:$0xff]
  %v2222 = vld [vmem:[%s3 + $0x98] sm:$0xff]
  %v2223 = vld [vmem:[%s3 + $0xa0] sm:$0xff]
  %v2224 = vld [vmem:[%s3 + $0xa8] sm:$0xff]
  %v2225 = vld [vmem:[%s3 + $0xb0] sm:$0xff]
  %v2226 = vld [vmem:[%s3 + $0xb8] sm:$0xff]
  %v2227 = vld [vmem:[%s3 + $0xc0] sm:$0xff]
  %v2228 = vld [vmem:[%s3 + $0xc8] sm:$0xff]
  %v2229 = vld [vmem:[%s3 + $0xd0] sm:$0xff]
  %v2230 = vld [vmem:[%s3 + $0xd8] sm:$0xff]
  %v2231 = vld [vmem:[%s3 + $0xe0] sm:$0xff]
  %v2232 = vld [vmem:[%s3 + $0xe8] sm:$0xff]
  %v2233 = vld [vmem:[%s3 + $0xf0] sm:$0xff]
  %v2234 = vld [vmem:[%s3 + $0xf8] sm:$0xff]
  %v2235 = vld [vmem:[%s3 + $0x100] sm:$0xff]
  %v2236 = vld [vmem:[%s3 + $0x108] sm:$0xff]
  %v2237 = vld [vmem:[%s3 + $0x110] sm:$0xff]
  %v2238 = vld [vmem:[%s3 + $0x118] sm:$0xff]
  %v2239 = vld [vmem:[%s3 + $0x120] sm:$0xff]
  %v2240 = vld [vmem:[%s3 + $0x128] sm:$0xff]
  %v2241 = vld [vmem:[%s3 + $0x130] sm:$0xff]
  %v2242 = vld [vmem:[%s3 + $0x138] sm:$0xff]
  %v2243 = vld [vmem:[%s3 + $0x140] sm:$0xff]
  %v2244 = vld [vmem:[%s3 + $0x148] sm:$0xff]
  %v2245 = vld [vmem:[%s3 + $0x150] sm:$0xff]
  %v2246 = vld [vmem:[%s3 + $0x158] sm:$0xff]
  %v2247 = vld [vmem:[%s3 + $0x160] sm:$0xff]
  %v2248 = vld [vmem:[%s3 + $0x168] sm:$0xff]
  %v2249 = vld [vmem:[%s3 + $0x170] sm:$0xff]
  %v2250 = vld [vmem:[%s3 + $0x178] sm:$0xff]
  %v2251 = vld [vmem:[%s3 + $0x180] sm:$0xff]
  %v2252 = vld [vmem:[%s3 + $0x188] sm:$0xff]
  %v2253 = vld [vmem:[%s3 + $0x190] sm:$0xff]
  %v2254 = vld [vmem:[%s3 + $0x198] sm:$0xff]
  %v2255 = vld [vmem:[%s3 + $0x1a0] sm:$0xff]
  %v2256 = vld [vmem:[%s3 + $0x1a8] sm:$0xff]
  %v2257 = vld [vmem:[%s3 + $0x1b0] sm:$0xff]
  %v2258 = vld [vmem:[%s3 + $0x1b8] sm:$0xff]
  %v2259 = vld [vmem:[%s3 + $0x1c0] sm:$0xff]
  %v2260 = vld [vmem:[%s3 + $0x1c8] sm:$0xff]
  %v2261 = vld [vmem:[%s3 + $0x1d0] sm:$0xff]
  %v2262 = vld [vmem:[%s3 + $0x1d8] sm:$0xff]
  %v2263 = vld [vmem:[%s3 + $0x1e0] sm:$0xff]
  %v2264 = vld [vmem:[%s3 + $0x1e8] sm:$0xff]
  %v2265 = vld [vmem:[%s3 + $0x1f0] sm:$0xff]
  %v2266 = vld [vmem:[%s3 + $0x1f8] sm:$0xff]
  %v2267 = vld [vmem:[%s3 + $0x200] sm:$0xff]
  %v2268 = vld [vmem:[%s3 + $0x208] sm:$0xff]
  %v2269 = vld [vmem:[%s3 + $0x210] sm:$0xff]
  %v2270 = vld [vmem:[%s3 + $0x218] sm:$0xff]
  %v2271 = vld [vmem:[%s3 + $0x220] sm:$0xff]
  %v2272 = vld [vmem:[%s3 + $0x228] sm:$0xff]
  %v2273 = vld [vmem:[%s3 + $0x230] sm:$0xff]
  %v2274 = vld [vmem:[%s3 + $0x238] sm:$0xff]
  %v2275 = vld [vmem:[%s3 + $0x240] sm:$0xff]
  %v2276 = vld [vmem:[%s3 + $0x248] sm:$0xff]
  %v2277 = vld [vmem:[%s3 + $0x250] sm:$0xff]
  %v2278 = vld [vmem:[%s3 + $0x258] sm:$0xff]
  %v2279 = vld [vmem:[%s3 + $0x260] sm:$0xff]
  %v2280 = vld [vmem:[%s3 + $0x268] sm:$0xff]
  %v2281 = vld [vmem:[%s3 + $0x270] sm:$0xff]
  %v2282 = vld [vmem:[%s3 + $0x278] sm:$0xff]
  %v2283 = vld [vmem:[%s3 + $0x280] sm:$0xff]
  %v2284 = vld [vmem:[%s3 + $0x288] sm:$0xff]
  %v2285 = vld [vmem:[%s3 + $0x290] sm:$0xff]
  %v2286 = vld [vmem:[%s3 + $0x298] sm:$0xff]
  %v2287 = vld [vmem:[%s3 + $0x2a0] sm:$0xff]
  %v2288 = vld [vmem:[%s3 + $0x2a8] sm:$0xff]
  %v2289 = vld [vmem:[%s3 + $0x2b0] sm:$0xff]
  %v2290 = vld [vmem:[%s3 + $0x2b8] sm:$0xff]
  %v2291 = vld [vmem:[%s3 + $0x2c0] sm:$0xff]
  %v2292 = vld [vmem:[%s3 + $0x2c8] sm:$0xff]
  %v2293 = vld [vmem:[%s3 + $0x2d0] sm:$0xff]
  %v2294 = vld [vmem:[%s3 + $0x2d8] sm:$0xff]
  %v2295 = vld [vmem:[%s3 + $0x2e0] sm:$0xff]
  %v2296 = vld [vmem:[%s3 + $0x2e8] sm:$0xff]
  %v2297 = vld [vmem:[%s3 + $0x2f0] sm:$0xff]
  %v2298 = vld [vmem:[%s3 + $0x2f8] sm:$0xff]
  %v2299 = vld [vmem:[%s3 + $0x300] sm:$0xff]
  %v2300 = vld [vmem:[%s3 + $0x308] sm:$0xff]
  %v2301 = vld [vmem:[%s3 + $0x310] sm:$0xff]
  %v2302 = vld [vmem:[%s3 + $0x318] sm:$0xff]
  %v2303 = vld [vmem:[%s3 + $0x320] sm:$0xff]
  %v2304 = vld [vmem:[%s3 + $0x328] sm:$0xff]
  %v2305 = vld [vmem:[%s3 + $0x330] sm:$0xff]
  %v2306 = vld [vmem:[%s3 + $0x338] sm:$0xff]
  %v2307 = vld [vmem:[%s3 + $0x340] sm:$0xff]
  %v2308 = vld [vmem:[%s3 + $0x348] sm:$0xff]
  %v2309 = vld [vmem:[%s3 + $0x350] sm:$0xff]
  %v2310 = vld [vmem:[%s3 + $0x358] sm:$0xff]
  %v2311 = vld [vmem:[%s3 + $0x360] sm:$0xff]
  %v2312 = vld [vmem:[%s3 + $0x368] sm:$0xff]
  %v2313 = vld [vmem:[%s3 + $0x370] sm:$0xff]
  %v2314 = vld [vmem:[%s3 + $0x378] sm:$0xff]
  %v2315 = vld [vmem:[%s3 + $0x380] sm:$0xff]
  %v2316 = vld [vmem:[%s3 + $0x388] sm:$0xff]
  %v2317 = vld [vmem:[%s3 + $0x390] sm:$0xff]
  %v2318 = vld [vmem:[%s3 + $0x398] sm:$0xff]
  %v2319 = vld [vmem:[%s3 + $0x3a0] sm:$0xff]
  %v2320 = vld [vmem:[%s3 + $0x3a8] sm:$0xff]
  %v2321 = vld [vmem:[%s3 + $0x3b0] sm:$0xff]
  %v2322 = vld [vmem:[%s3 + $0x3b8] sm:$0xff]
  %v2323 = vld [vmem:[%s3 + $0x3c0] sm:$0xff]
  %v2324 = vld [vmem:[%s3 + $0x3c8] sm:$0xff]
  %v2325 = vld [vmem:[%s3 + $0x3d0] sm:$0xff]
  %v2326 = vld [vmem:[%s3 + $0x3d8] sm:$0xff]
  %v2327 = vld [vmem:[%s3 + $0x3e0] sm:$0xff]
  %v2328 = vld [vmem:[%s3 + $0x3e8] sm:$0xff]
  %v2329 = vld [vmem:[%s3 + $0x3f0] sm:$0xff]
  %v2330 = vld [vmem:[%s3 + $0x3f8] sm:$0xff]
  %v2331 = vld [vmem:[%s3 + $0x400] sm:$0xff]
  %v2332 = vld [vmem:[%s3 + $0x408] sm:$0xff]
  %v2333 = vld [vmem:[%s3 + $0x410] sm:$0xff]
  %v2334 = vld [vmem:[%s3 + $0x418] sm:$0xff]
  %v2335 = vld [vmem:[%s3 + $0x420] sm:$0xff]
  %v2336 = vld [vmem:[%s3 + $0x428] sm:$0xff]
  %v2337 = vld [vmem:[%s3 + $0x430] sm:$0xff]
  %v2338 = vld [vmem:[%s3 + $0x438] sm:$0xff]
  %v2339 = vld [vmem:[%s3 + $0x440] sm:$0xff]
  %v2340 = vld [vmem:[%s3 + $0x448] sm:$0xff]
  %v2341 = vld [vmem:[%s3 + $0x450] sm:$0xff]
  %v2342 = vld [vmem:[%s3 + $0x458] sm:$0xff]
  %v2343 = vld [vmem:[%s3 + $0x460] sm:$0xff]
  %v2344 = vld [vmem:[%s3 + $0x468] sm:$0xff]
  %v2345 = vld [vmem:[%s3 + $0x470] sm:$0xff]
  %v2346 = vld [vmem:[%s3 + $0x478] sm:$0xff]
  %v2347 = vld [vmem:[%s3 + $0x480] sm:$0xff]
  %v2348 = vld [vmem:[%s3 + $0x488] sm:$0xff]
  %v2349 = vld [vmem:[%s3 + $0x490] sm:$0xff]
  %v2350 = vld [vmem:[%s3 + $0x498] sm:$0xff]
  %v2351 = vld [vmem:[%s3 + $0x4a0] sm:$0xff]
  %v2352 = vld [vmem:[%s3 + $0x4a8] sm:$0xff]
  %v2353 = vld [vmem:[%s3 + $0x4b0] sm:$0xff]
  %v2354 = vld [vmem:[%s3 + $0x4b8] sm:$0xff]
  %v2355 = vld [vmem:[%s3 + $0x4c0] sm:$0xff]
  %v2356 = vld [vmem:[%s3 + $0x4c8] sm:$0xff]
  %v2357 = vld [vmem:[%s3 + $0x4d0] sm:$0xff]
  %v2358 = vld [vmem:[%s3 + $0x4d8] sm:$0xff]
  %v2359 = vld [vmem:[%s3 + $0x4e0] sm:$0xff]
  %v2360 = vld [vmem:[%s3 + $0x4e8] sm:$0xff]
  %v2361 = vld [vmem:[%s3 + $0x4f0] sm:$0xff]
  %v2362 = vld [vmem:[%s3 + $0x4f8] sm:$0xff]
  %v2363 = vld [vmem:[%s3 + $0x500] sm:$0xff]
  %v2364 = vld [vmem:[%s3 + $0x508] sm:$0xff]
  %v2365 = vld [vmem:[%s3 + $0x510] sm:$0xff]
  %v2366 = vld [vmem:[%s3 + $0x518] sm:$0xff]
  %v2367 = vld [vmem:[%s3 + $0x520] sm:$0xff]
  %v2368 = vld [vmem:[%s3 + $0x528] sm:$0xff]
  %v2369 = vld [vmem:[%s3 + $0x530] sm:$0xff]
  %v2370 = vld [vmem:[%s3 + $0x538] sm:$0xff]
  %v2371 = vld [vmem:[%s3 + $0x540] sm:$0xff]
  %v2372 = vld [vmem:[%s3 + $0x548] sm:$0xff]
  %v2373 = vld [vmem:[%s3 + $0x550] sm:$0xff]
  %v2374 = vld [vmem:[%s3 + $0x558] sm:$0xff]
  %v2375 = vld [vmem:[%s3 + $0x560] sm:$0xff]
  %v2376 = vld [vmem:[%s3 + $0x568] sm:$0xff]
  %v2377 = vld [vmem:[%s3 + $0x570] sm:$0xff]
  %v2378 = vld [vmem:[%s3 + $0x578] sm:$0xff]
  %v2379 = vld [vmem:[%s3 + $0x580] sm:$0xff]
  %v2380 = vld [vmem:[%s3 + $0x588] sm:$0xff]
  %v2381 = vld [vmem:[%s3 + $0x590] sm:$0xff]
  %v2382 = vld [vmem:[%s3 + $0x598] sm:$0xff]
  %v2383 = vld [vmem:[%s3 + $0x5a0] sm:$0xff]
  %v2384 = vld [vmem:[%s3 + $0x5a8] sm:$0xff]
  %v2385 = vld [vmem:[%s3 + $0x5b0] sm:$0xff]
  %v2386 = vld [vmem:[%s3 + $0x5b8] sm:$0xff]
  %v2387 = vld [vmem:[%s3 + $0x5c0] sm:$0xff]
  %v2388 = vld [vmem:[%s3 + $0x5c8] sm:$0xff]
  %v2389 = vld [vmem:[%s3 + $0x5d0] sm:$0xff]
  %v2390 = vld [vmem:[%s3 + $0x5d8] sm:$0xff]
  %v2391 = vld [vmem:[%s3 + $0x5e0] sm:$0xff]
  %v2392 = vld [vmem:[%s3 + $0x5e8] sm:$0xff]
  %v2393 = vld [vmem:[%s3 + $0x5f0] sm:$0xff]
  %v2394 = vld [vmem:[%s3 + $0x5f8] sm:$0xff]
  %v2395 = vld [vmem:[%s4] sm:$0xff]
  %v2396 = vld [vmem:[%s4 + $0x8] sm:$0xff]
  %v2397 = vld [vmem:[%s4 + $0x10] sm:$0xff]
  %v2401 = vlaneseq
  %v2402 = vshrl.u32 %v2401, 7
  %v2403 = vsub.s32 0, %v2402
  %v2404 = vrot.slane %v2395, %v2403
  %v2405 = vlaneseq
  %v2406 = vshrl.u32 %v2405, 7
  %v2407 = vsub.s32 1, %v2406
  %v2408 = vrot.slane %v2395, %v2407
  %v2409 = vlaneseq
  %v2410 = vshrl.u32 %v2409, 7
  %v2411 = vsub.s32 2, %v2410
  %v2412 = vrot.slane %v2395, %v2411
  %v2413 = vlaneseq
  %v2414 = vshrl.u32 %v2413, 7
  %v2415 = vsub.s32 3, %v2414
  %v2416 = vrot.slane %v2395, %v2415
  %v2417 = vlaneseq
  %v2418 = vshrl.u32 %v2417, 7
  %v2419 = vsub.s32 4, %v2418
  %v2420 = vrot.slane %v2395, %v2419
  %v2421 = vlaneseq
  %v2422 = vshrl.u32 %v2421, 7
  %v2423 = vsub.s32 5, %v2422
  %v2424 = vrot.slane %v2395, %v2423
  %v2425 = vlaneseq
  %v2426 = vshrl.u32 %v2425, 7
  %v2427 = vsub.s32 6, %v2426
  %v2428 = vrot.slane %v2395, %v2427
  %v2429 = vlaneseq
  %v2430 = vshrl.u32 %v2429, 7
  %v2431 = vsub.s32 7, %v2430
  %v2432 = vrot.slane %v2395, %v2431
  %v2433 = vlaneseq
  %v2434 = vshrl.u32 %v2433, 7
  %v2435 = vsub.s32 0, %v2434
  %v2436 = vrot.slane %v2396, %v2435
  %v2437 = vlaneseq
  %v2438 = vshrl.u32 %v2437, 7
  %v2439 = vsub.s32 1, %v2438
  %v2440 = vrot.slane %v2396, %v2439
  %v2441 = vlaneseq
  %v2442 = vshrl.u32 %v2441, 7
  %v2443 = vsub.s32 2, %v2442
  %v2444 = vrot.slane %v2396, %v2443
  %v2445 = vlaneseq
  %v2446 = vshrl.u32 %v2445, 7
  %v2447 = vsub.s32 3, %v2446
  %v2448 = vrot.slane %v2396, %v2447
  %v2449 = vlaneseq
  %v2450 = vshrl.u32 %v2449, 7
  %v2451 = vsub.s32 4, %v2450
  %v2452 = vrot.slane %v2396, %v2451
  %v2453 = vlaneseq
  %v2454 = vshrl.u32 %v2453, 7
  %v2455 = vsub.s32 5, %v2454
  %v2456 = vrot.slane %v2396, %v2455
  %v2457 = vlaneseq
  %v2458 = vshrl.u32 %v2457, 7
  %v2459 = vsub.s32 6, %v2458
  %v2460 = vrot.slane %v2396, %v2459
  %v2461 = vlaneseq
  %v2462 = vshrl.u32 %v2461, 7
  %v2463 = vsub.s32 7, %v2462
  %v2464 = vrot.slane %v2396, %v2463
  %v2465 = vlaneseq
  %v2466 = vshrl.u32 %v2465, 7
  %v2467 = vsub.s32 0, %v2466
  %v2468 = vrot.slane %v2397, %v2467
  %v2469 = vlaneseq
  %v2470 = vshrl.u32 %v2469, 7
  %v2471 = vsub.s32 1, %v2470
  %v2472 = vrot.slane %v2397, %v2471
  %v2473 = vlaneseq
  %v2474 = vshrl.u32 %v2473, 7
  %v2475 = vsub.s32 2, %v2474
  %v2476 = vrot.slane %v2397, %v2475
  %v2477 = vlaneseq
  %v2478 = vshrl.u32 %v2477, 7
  %v2479 = vsub.s32 3, %v2478
  %v2480 = vrot.slane %v2397, %v2479
  %v2481 = vlaneseq
  %v2482 = vshrl.u32 %v2481, 7
  %v2483 = vsub.s32 4, %v2482
  %v2484 = vrot.slane %v2397, %v2483
  %v2485 = vlaneseq
  %v2486 = vshrl.u32 %v2485, 7
  %v2487 = vsub.s32 5, %v2486
  %v2488 = vrot.slane %v2397, %v2487
  %v2489 = vlaneseq
  %v2490 = vshrl.u32 %v2489, 7
  %v2491 = vsub.s32 6, %v2490
  %v2492 = vrot.slane %v2397, %v2491
  %v2493 = vlaneseq
  %v2494 = vshrl.u32 %v2493, 7
  %v2495 = vsub.s32 7, %v2494
  %v2496 = vrot.slane %v2397, %v2495
  %v2713 = vunpack.c.l.b16 %v2203
  %v2714 = vunpack.c.h.b16 %v2203
  %v2715 = vunpack.c.l.b16 %v2204
  %v2716 = vunpack.c.h.b16 %v2204
  %v2717 = vunpack.c.l.b16 %v2205
  %v2718 = vunpack.c.h.b16 %v2205
  %v2719 = vunpack.c.l.b16 %v2206
  %v2720 = vunpack.c.h.b16 %v2206
  %v2721 = vunpack.c.l.b16 %v2207
  %v2722 = vunpack.c.h.b16 %v2207
  %v2723 = vunpack.c.l.b16 %v2208
  %v2724 = vunpack.c.h.b16 %v2208
  %v2725 = vunpack.c.l.b16 %v2209
  %v2726 = vunpack.c.h.b16 %v2209
  %v2727 = vunpack.c.l.b16 %v2210
  %v2728 = vunpack.c.h.b16 %v2210
  %v2729 = vunpack.c.l.b16 %v2211
  %v2730 = vunpack.c.h.b16 %v2211
  %v2731 = vunpack.c.l.b16 %v2212
  %v2732 = vunpack.c.h.b16 %v2212
  %v2733 = vunpack.c.l.b16 %v2213
  %v2734 = vunpack.c.h.b16 %v2213
  %v2735 = vunpack.c.l.b16 %v2214
  %v2736 = vunpack.c.h.b16 %v2214
  %v2737 = vunpack.c.l.b16 %v2215
  %v2738 = vunpack.c.h.b16 %v2215
  %v2739 = vunpack.c.l.b16 %v2216
  %v2740 = vunpack.c.h.b16 %v2216
  %v2741 = vunpack.c.l.b16 %v2217
  %v2742 = vunpack.c.h.b16 %v2217
  %v2743 = vunpack.c.l.b16 %v2218
  %v2744 = vunpack.c.h.b16 %v2218
  %v2745 = vunpack.c.l.b16 %v2219
  %v2746 = vunpack.c.h.b16 %v2219
  %v2747 = vunpack.c.l.b16 %v2220
  %v2748 = vunpack.c.h.b16 %v2220
  %v2749 = vunpack.c.l.b16 %v2221
  %v2750 = vunpack.c.h.b16 %v2221
  %v2751 = vunpack.c.l.b16 %v2222
  %v2752 = vunpack.c.h.b16 %v2222
  %v2753 = vunpack.c.l.b16 %v2223
  %v2754 = vunpack.c.h.b16 %v2223
  %v2755 = vunpack.c.l.b16 %v2224
  %v2756 = vunpack.c.h.b16 %v2224
  %v2757 = vunpack.c.l.b16 %v2225
  %v2758 = vunpack.c.h.b16 %v2225
  %v2759 = vunpack.c.l.b16 %v2226
  %v2760 = vunpack.c.h.b16 %v2226
  %v2761 = vunpack.c.l.b16 %v2227
  %v2762 = vunpack.c.h.b16 %v2227
  %v2763 = vunpack.c.l.b16 %v2228
  %v2764 = vunpack.c.h.b16 %v2228
  %v2765 = vunpack.c.l.b16 %v2229
  %v2766 = vunpack.c.h.b16 %v2229
  %v2767 = vunpack.c.l.b16 %v2230
  %v2768 = vunpack.c.h.b16 %v2230
  %v2769 = vunpack.c.l.b16 %v2231
  %v2770 = vunpack.c.h.b16 %v2231
  %v2771 = vunpack.c.l.b16 %v2232
  %v2772 = vunpack.c.h.b16 %v2232
  %v2773 = vunpack.c.l.b16 %v2233
  %v2774 = vunpack.c.h.b16 %v2233
  %v2775 = vunpack.c.l.b16 %v2234
  %v2776 = vunpack.c.h.b16 %v2234
  %v2777 = vunpack.c.l.b16 %v2235
  %v2778 = vunpack.c.h.b16 %v2235
  %v2779 = vunpack.c.l.b16 %v2236
  %v2780 = vunpack.c.h.b16 %v2236
  %v2781 = vunpack.c.l.b16 %v2237
  %v2782 = vunpack.c.h.b16 %v2237
  %v2783 = vunpack.c.l.b16 %v2238
  %v2784 = vunpack.c.h.b16 %v2238
  %v2785 = vunpack.c.l.b16 %v2239
  %v2786 = vunpack.c.h.b16 %v2239
  %v2787 = vunpack.c.l.b16 %v2240
  %v2788 = vunpack.c.h.b16 %v2240
  %v2789 = vunpack.c.l.b16 %v2241
  %v2790 = vunpack.c.h.b16 %v2241
  %v2791 = vunpack.c.l.b16 %v2242
  %v2792 = vunpack.c.h.b16 %v2242
  %v2793 = vunpack.c.l.b16 %v2243
  %v2794 = vunpack.c.h.b16 %v2243
  %v2795 = vunpack.c.l.b16 %v2244
  %v2796 = vunpack.c.h.b16 %v2244
  %v2797 = vunpack.c.l.b16 %v2245
  %v2798 = vunpack.c.h.b16 %v2245
  %v2799 = vunpack.c.l.b16 %v2246
  %v2800 = vunpack.c.h.b16 %v2246
  %v2801 = vunpack.c.l.b16 %v2247
  %v2802 = vunpack.c.h.b16 %v2247
  %v2803 = vunpack.c.l.b16 %v2248
  %v2804 = vunpack.c.h.b16 %v2248
  %v2805 = vunpack.c.l.b16 %v2249
  %v2806 = vunpack.c.h.b16 %v2249
  %v2807 = vunpack.c.l.b16 %v2250
  %v2808 = vunpack.c.h.b16 %v2250
  %v2809 = vunpack.c.l.b16 %v2251
  %v2810 = vunpack.c.h.b16 %v2251
  %v2811 = vunpack.c.l.b16 %v2252
  %v2812 = vunpack.c.h.b16 %v2252
  %v2813 = vunpack.c.l.b16 %v2253
  %v2814 = vunpack.c.h.b16 %v2253
  %v2815 = vunpack.c.l.b16 %v2254
  %v2816 = vunpack.c.h.b16 %v2254
  %v2817 = vunpack.c.l.b16 %v2255
  %v2818 = vunpack.c.h.b16 %v2255
  %v2819 = vunpack.c.l.b16 %v2256
  %v2820 = vunpack.c.h.b16 %v2256
  %v2821 = vunpack.c.l.b16 %v2257
  %v2822 = vunpack.c.h.b16 %v2257
  %v2823 = vunpack.c.l.b16 %v2258
  %v2824 = vunpack.c.h.b16 %v2258
  %v2825 = vunpack.c.l.b16 %v2259
  %v2826 = vunpack.c.h.b16 %v2259
  %v2827 = vunpack.c.l.b16 %v2260
  %v2828 = vunpack.c.h.b16 %v2260
  %v2829 = vunpack.c.l.b16 %v2261
  %v2830 = vunpack.c.h.b16 %v2261
  %v2831 = vunpack.c.l.b16 %v2262
  %v2832 = vunpack.c.h.b16 %v2262
  %v2833 = vunpack.c.l.b16 %v2263
  %v2834 = vunpack.c.h.b16 %v2263
  %v2835 = vunpack.c.l.b16 %v2264
  %v2836 = vunpack.c.h.b16 %v2264
  %v2837 = vunpack.c.l.b16 %v2265
  %v2838 = vunpack.c.h.b16 %v2265
  %v2839 = vunpack.c.l.b16 %v2266
  %v2840 = vunpack.c.h.b16 %v2266
  %v2841 = vunpack.c.l.b16 %v2267
  %v2842 = vunpack.c.h.b16 %v2267
  %v2843 = vunpack.c.l.b16 %v2268
  %v2844 = vunpack.c.h.b16 %v2268
  %v2845 = vunpack.c.l.b16 %v2269
  %v2846 = vunpack.c.h.b16 %v2269
  %v2847 = vunpack.c.l.b16 %v2270
  %v2848 = vunpack.c.h.b16 %v2270
  %v2849 = vunpack.c.l.b16 %v2271
  %v2850 = vunpack.c.h.b16 %v2271
  %v2851 = vunpack.c.l.b16 %v2272
  %v2852 = vunpack.c.h.b16 %v2272
  %v2853 = vunpack.c.l.b16 %v2273
  %v2854 = vunpack.c.h.b16 %v2273
  %v2855 = vunpack.c.l.b16 %v2274
  %v2856 = vunpack.c.h.b16 %v2274
  %v2857 = vunpack.c.l.b16 %v2275
  %v2858 = vunpack.c.h.b16 %v2275
  %v2859 = vunpack.c.l.b16 %v2276
  %v2860 = vunpack.c.h.b16 %v2276
  %v2861 = vunpack.c.l.b16 %v2277
  %v2862 = vunpack.c.h.b16 %v2277
  %v2863 = vunpack.c.l.b16 %v2278
  %v2864 = vunpack.c.h.b16 %v2278
  %v2865 = vunpack.c.l.b16 %v2279
  %v2866 = vunpack.c.h.b16 %v2279
  %v2867 = vunpack.c.l.b16 %v2280
  %v2868 = vunpack.c.h.b16 %v2280
  %v2869 = vunpack.c.l.b16 %v2281
  %v2870 = vunpack.c.h.b16 %v2281
  %v2871 = vunpack.c.l.b16 %v2282
  %v2872 = vunpack.c.h.b16 %v2282
  %v2873 = vunpack.c.l.b16 %v2283
  %v2874 = vunpack.c.h.b16 %v2283
  %v2875 = vunpack.c.l.b16 %v2284
  %v2876 = vunpack.c.h.b16 %v2284
  %v2877 = vunpack.c.l.b16 %v2285
  %v2878 = vunpack.c.h.b16 %v2285
  %v2879 = vunpack.c.l.b16 %v2286
  %v2880 = vunpack.c.h.b16 %v2286
  %v2881 = vunpack.c.l.b16 %v2287
  %v2882 = vunpack.c.h.b16 %v2287
  %v2883 = vunpack.c.l.b16 %v2288
  %v2884 = vunpack.c.h.b16 %v2288
  %v2885 = vunpack.c.l.b16 %v2289
  %v2886 = vunpack.c.h.b16 %v2289
  %v2887 = vunpack.c.l.b16 %v2290
  %v2888 = vunpack.c.h.b16 %v2290
  %v2889 = vunpack.c.l.b16 %v2291
  %v2890 = vunpack.c.h.b16 %v2291
  %v2891 = vunpack.c.l.b16 %v2292
  %v2892 = vunpack.c.h.b16 %v2292
  %v2893 = vunpack.c.l.b16 %v2293
  %v2894 = vunpack.c.h.b16 %v2293
  %v2895 = vunpack.c.l.b16 %v2294
  %v2896 = vunpack.c.h.b16 %v2294
  %v2897 = vunpack.c.l.b16 %v2295
  %v2898 = vunpack.c.h.b16 %v2295
  %v2899 = vunpack.c.l.b16 %v2296
  %v2900 = vunpack.c.h.b16 %v2296
  %v2901 = vunpack.c.l.b16 %v2297
  %v2902 = vunpack.c.h.b16 %v2297
  %v2903 = vunpack.c.l.b16 %v2298
  %v2904 = vunpack.c.h.b16 %v2298
  %v2905 = vunpack.c.l.b16 %v2299
  %v2906 = vunpack.c.h.b16 %v2299
  %v2907 = vunpack.c.l.b16 %v2300
  %v2908 = vunpack.c.h.b16 %v2300
  %v2909 = vunpack.c.l.b16 %v2301
  %v2910 = vunpack.c.h.b16 %v2301
  %v2911 = vunpack.c.l.b16 %v2302
  %v2912 = vunpack.c.h.b16 %v2302
  %v2913 = vunpack.c.l.b16 %v2303
  %v2914 = vunpack.c.h.b16 %v2303
  %v2915 = vunpack.c.l.b16 %v2304
  %v2916 = vunpack.c.h.b16 %v2304
  %v2917 = vunpack.c.l.b16 %v2305
  %v2918 = vunpack.c.h.b16 %v2305
  %v2919 = vunpack.c.l.b16 %v2306
  %v2920 = vunpack.c.h.b16 %v2306
  %v2921 = vunpack.c.l.b16 %v2307
  %v2922 = vunpack.c.h.b16 %v2307
  %v2923 = vunpack.c.l.b16 %v2308
  %v2924 = vunpack.c.h.b16 %v2308
  %v2925 = vunpack.c.l.b16 %v2309
  %v2926 = vunpack.c.h.b16 %v2309
  %v2927 = vunpack.c.l.b16 %v2310
  %v2928 = vunpack.c.h.b16 %v2310
  %v2929 = vunpack.c.l.b16 %v2311
  %v2930 = vunpack.c.h.b16 %v2311
  %v2931 = vunpack.c.l.b16 %v2312
  %v2932 = vunpack.c.h.b16 %v2312
  %v2933 = vunpack.c.l.b16 %v2313
  %v2934 = vunpack.c.h.b16 %v2313
  %v2935 = vunpack.c.l.b16 %v2314
  %v2936 = vunpack.c.h.b16 %v2314
  %v2937 = vunpack.c.l.b16 %v2315
  %v2938 = vunpack.c.h.b16 %v2315
  %v2939 = vunpack.c.l.b16 %v2316
  %v2940 = vunpack.c.h.b16 %v2316
  %v2941 = vunpack.c.l.b16 %v2317
  %v2942 = vunpack.c.h.b16 %v2317
  %v2943 = vunpack.c.l.b16 %v2318
  %v2944 = vunpack.c.h.b16 %v2318
  %v2945 = vunpack.c.l.b16 %v2319
  %v2946 = vunpack.c.h.b16 %v2319
  %v2947 = vunpack.c.l.b16 %v2320
  %v2948 = vunpack.c.h.b16 %v2320
  %v2949 = vunpack.c.l.b16 %v2321
  %v2950 = vunpack.c.h.b16 %v2321
  %v2951 = vunpack.c.l.b16 %v2322
  %v2952 = vunpack.c.h.b16 %v2322
  %v2953 = vunpack.c.l.b16 %v2323
  %v2954 = vunpack.c.h.b16 %v2323
  %v2955 = vunpack.c.l.b16 %v2324
  %v2956 = vunpack.c.h.b16 %v2324
  %v2957 = vunpack.c.l.b16 %v2325
  %v2958 = vunpack.c.h.b16 %v2325
  %v2959 = vunpack.c.l.b16 %v2326
  %v2960 = vunpack.c.h.b16 %v2326
  %v2961 = vunpack.c.l.b16 %v2327
  %v2962 = vunpack.c.h.b16 %v2327
  %v2963 = vunpack.c.l.b16 %v2328
  %v2964 = vunpack.c.h.b16 %v2328
  %v2965 = vunpack.c.l.b16 %v2329
  %v2966 = vunpack.c.h.b16 %v2329
  %v2967 = vunpack.c.l.b16 %v2330
  %v2968 = vunpack.c.h.b16 %v2330
  %v2969 = vunpack.c.l.b16 %v2331
  %v2970 = vunpack.c.h.b16 %v2331
  %v2971 = vunpack.c.l.b16 %v2332
  %v2972 = vunpack.c.h.b16 %v2332
  %v2973 = vunpack.c.l.b16 %v2333
  %v2974 = vunpack.c.h.b16 %v2333
  %v2975 = vunpack.c.l.b16 %v2334
  %v2976 = vunpack.c.h.b16 %v2334
  %v2977 = vunpack.c.l.b16 %v2335
  %v2978 = vunpack.c.h.b16 %v2335
  %v2979 = vunpack.c.l.b16 %v2336
  %v2980 = vunpack.c.h.b16 %v2336
  %v2981 = vunpack.c.l.b16 %v2337
  %v2982 = vunpack.c.h.b16 %v2337
  %v2983 = vunpack.c.l.b16 %v2338
  %v2984 = vunpack.c.h.b16 %v2338
  %v2985 = vunpack.c.l.b16 %v2339
  %v2986 = vunpack.c.h.b16 %v2339
  %v2987 = vunpack.c.l.b16 %v2340
  %v2988 = vunpack.c.h.b16 %v2340
  %v2989 = vunpack.c.l.b16 %v2341
  %v2990 = vunpack.c.h.b16 %v2341
  %v2991 = vunpack.c.l.b16 %v2342
  %v2992 = vunpack.c.h.b16 %v2342
  %v2993 = vunpack.c.l.b16 %v2343
  %v2994 = vunpack.c.h.b16 %v2343
  %v2995 = vunpack.c.l.b16 %v2344
  %v2996 = vunpack.c.h.b16 %v2344
  %v2997 = vunpack.c.l.b16 %v2345
  %v2998 = vunpack.c.h.b16 %v2345
  %v2999 = vunpack.c.l.b16 %v2346
  %v3000 = vunpack.c.h.b16 %v2346
  %v3001 = vunpack.c.l.b16 %v2347
  %v3002 = vunpack.c.h.b16 %v2347
  %v3003 = vunpack.c.l.b16 %v2348
  %v3004 = vunpack.c.h.b16 %v2348
  %v3005 = vunpack.c.l.b16 %v2349
  %v3006 = vunpack.c.h.b16 %v2349
  %v3007 = vunpack.c.l.b16 %v2350
  %v3008 = vunpack.c.h.b16 %v2350
  %v3009 = vunpack.c.l.b16 %v2351
  %v3010 = vunpack.c.h.b16 %v2351
  %v3011 = vunpack.c.l.b16 %v2352
  %v3012 = vunpack.c.h.b16 %v2352
  %v3013 = vunpack.c.l.b16 %v2353
  %v3014 = vunpack.c.h.b16 %v2353
  %v3015 = vunpack.c.l.b16 %v2354
  %v3016 = vunpack.c.h.b16 %v2354
  %v3017 = vunpack.c.l.b16 %v2355
  %v3018 = vunpack.c.h.b16 %v2355
  %v3019 = vunpack.c.l.b16 %v2356
  %v3020 = vunpack.c.h.b16 %v2356
  %v3021 = vunpack.c.l.b16 %v2357
  %v3022 = vunpack.c.h.b16 %v2357
  %v3023 = vunpack.c.l.b16 %v2358
  %v3024 = vunpack.c.h.b16 %v2358
  %v3025 = vunpack.c.l.b16 %v2359
  %v3026 = vunpack.c.h.b16 %v2359
  %v3027 = vunpack.c.l.b16 %v2360
  %v3028 = vunpack.c.h.b16 %v2360
  %v3029 = vunpack.c.l.b16 %v2361
  %v3030 = vunpack.c.h.b16 %v2361
  %v3031 = vunpack.c.l.b16 %v2362
  %v3032 = vunpack.c.h.b16 %v2362
  %v3033 = vunpack.c.l.b16 %v2363
  %v3034 = vunpack.c.h.b16 %v2363
  %v3035 = vunpack.c.l.b16 %v2364
  %v3036 = vunpack.c.h.b16 %v2364
  %v3037 = vunpack.c.l.b16 %v2365
  %v3038 = vunpack.c.h.b16 %v2365
  %v3039 = vunpack.c.l.b16 %v2366
  %v3040 = vunpack.c.h.b16 %v2366
  %v3041 = vunpack.c.l.b16 %v2367
  %v3042 = vunpack.c.h.b16 %v2367
  %v3043 = vunpack.c.l.b16 %v2368
  %v3044 = vunpack.c.h.b16 %v2368
  %v3045 = vunpack.c.l.b16 %v2369
  %v3046 = vunpack.c.h.b16 %v2369
  %v3047 = vunpack.c.l.b16 %v2370
  %v3048 = vunpack.c.h.b16 %v2370
  %v3049 = vunpack.c.l.b16 %v2371
  %v3050 = vunpack.c.h.b16 %v2371
  %v3051 = vunpack.c.l.b16 %v2372
  %v3052 = vunpack.c.h.b16 %v2372
  %v3053 = vunpack.c.l.b16 %v2373
  %v3054 = vunpack.c.h.b16 %v2373
  %v3055 = vunpack.c.l.b16 %v2374
  %v3056 = vunpack.c.h.b16 %v2374
  %v3057 = vunpack.c.l.b16 %v2375
  %v3058 = vunpack.c.h.b16 %v2375
  %v3059 = vunpack.c.l.b16 %v2376
  %v3060 = vunpack.c.h.b16 %v2376
  %v3061 = vunpack.c.l.b16 %v2377
  %v3062 = vunpack.c.h.b16 %v2377
  %v3063 = vunpack.c.l.b16 %v2378
  %v3064 = vunpack.c.h.b16 %v2378
  %v3065 = vunpack.c.l.b16 %v2379
  %v3066 = vunpack.c.h.b16 %v2379
  %v3067 = vunpack.c.l.b16 %v2380
  %v3068 = vunpack.c.h.b16 %v2380
  %v3069 = vunpack.c.l.b16 %v2381
  %v3070 = vunpack.c.h.b16 %v2381
  %v3071 = vunpack.c.l.b16 %v2382
  %v3072 = vunpack.c.h.b16 %v2382
  %v3073 = vunpack.c.l.b16 %v2383
  %v3074 = vunpack.c.h.b16 %v2383
  %v3075 = vunpack.c.l.b16 %v2384
  %v3076 = vunpack.c.h.b16 %v2384
  %v3077 = vunpack.c.l.b16 %v2385
  %v3078 = vunpack.c.h.b16 %v2385
  %v3079 = vunpack.c.l.b16 %v2386
  %v3080 = vunpack.c.h.b16 %v2386
  %v3081 = vunpack.c.l.b16 %v2387
  %v3082 = vunpack.c.h.b16 %v2387
  %v3083 = vunpack.c.l.b16 %v2388
  %v3084 = vunpack.c.h.b16 %v2388
  %v3085 = vunpack.c.l.b16 %v2389
  %v3086 = vunpack.c.h.b16 %v2389
  %v3087 = vunpack.c.l.b16 %v2390
  %v3088 = vunpack.c.h.b16 %v2390
  %v3089 = vunpack.c.l.b16 %v2391
  %v3090 = vunpack.c.h.b16 %v2391
  %v3091 = vunpack.c.l.b16 %v2392
  %v3092 = vunpack.c.h.b16 %v2392
  %v3093 = vunpack.c.l.b16 %v2393
  %v3094 = vunpack.c.h.b16 %v2393
  %v3095 = vunpack.c.l.b16 %v2394
  %v3096 = vunpack.c.h.b16 %v2394
  %v3097 = vpack.c.b16 %v2737, %v2713
  %v3098 = vpack.c.b16 %v2738, %v2714
  %v3099 = vpack.c.b16 %v2739, %v2715
  %v3100 = vpack.c.b16 %v2740, %v2716
  %v3101 = vpack.c.b16 %v2741, %v2717
  %v3102 = vpack.c.b16 %v2742, %v2718
  %v3103 = vpack.c.b16 %v2743, %v2719
  %v3104 = vpack.c.b16 %v2744, %v2720
  %v3105 = vpack.c.b16 %v2745, %v2721
  %v3106 = vpack.c.b16 %v2746, %v2722
  %v3107 = vpack.c.b16 %v2747, %v2723
  %v3108 = vpack.c.b16 %v2748, %v2724
  %v3109 = vpack.c.b16 %v2749, %v2725
  %v3110 = vpack.c.b16 %v2750, %v2726
  %v3111 = vpack.c.b16 %v2751, %v2727
  %v3112 = vpack.c.b16 %v2752, %v2728
  %v3113 = vpack.c.b16 %v2753, %v2729
  %v3114 = vpack.c.b16 %v2754, %v2730
  %v3115 = vpack.c.b16 %v2755, %v2731
  %v3116 = vpack.c.b16 %v2756, %v2732
  %v3117 = vpack.c.b16 %v2757, %v2733
  %v3118 = vpack.c.b16 %v2758, %v2734
  %v3119 = vpack.c.b16 %v2759, %v2735
  %v3120 = vpack.c.b16 %v2760, %v2736
  %v3121 = vpack.c.b16 %v2785, %v2761
  %v3122 = vpack.c.b16 %v2786, %v2762
  %v3123 = vpack.c.b16 %v2787, %v2763
  %v3124 = vpack.c.b16 %v2788, %v2764
  %v3125 = vpack.c.b16 %v2789, %v2765
  %v3126 = vpack.c.b16 %v2790, %v2766
  %v3127 = vpack.c.b16 %v2791, %v2767
  %v3128 = vpack.c.b16 %v2792, %v2768
  %v3129 = vpack.c.b16 %v2793, %v2769
  %v3130 = vpack.c.b16 %v2794, %v2770
  %v3131 = vpack.c.b16 %v2795, %v2771
  %v3132 = vpack.c.b16 %v2796, %v2772
  %v3133 = vpack.c.b16 %v2797, %v2773
  %v3134 = vpack.c.b16 %v2798, %v2774
  %v3135 = vpack.c.b16 %v2799, %v2775
  %v3136 = vpack.c.b16 %v2800, %v2776
  %v3137 = vpack.c.b16 %v2801, %v2777
  %v3138 = vpack.c.b16 %v2802, %v2778
  %v3139 = vpack.c.b16 %v2803, %v2779
  %v3140 = vpack.c.b16 %v2804, %v2780
  %v3141 = vpack.c.b16 %v2805, %v2781
  %v3142 = vpack.c.b16 %v2806, %v2782
  %v3143 = vpack.c.b16 %v2807, %v2783
  %v3144 = vpack.c.b16 %v2808, %v2784
  %v3145 = vpack.c.b16 %v2833, %v2809
  %v3146 = vpack.c.b16 %v2834, %v2810
  %v3147 = vpack.c.b16 %v2835, %v2811
  %v3148 = vpack.c.b16 %v2836, %v2812
  %v3149 = vpack.c.b16 %v2837, %v2813
  %v3150 = vpack.c.b16 %v2838, %v2814
  %v3151 = vpack.c.b16 %v2839, %v2815
  %v3152 = vpack.c.b16 %v2840, %v2816
  %v3153 = vpack.c.b16 %v2841, %v2817
  %v3154 = vpack.c.b16 %v2842, %v2818
  %v3155 = vpack.c.b16 %v2843, %v2819
  %v3156 = vpack.c.b16 %v2844, %v2820
  %v3157 = vpack.c.b16 %v2845, %v2821
  %v3158 = vpack.c.b16 %v2846, %v2822
  %v3159 = vpack.c.b16 %v2847, %v2823
  %v3160 = vpack.c.b16 %v2848, %v2824
  %v3161 = vpack.c.b16 %v2849, %v2825
  %v3162 = vpack.c.b16 %v2850, %v2826
  %v3163 = vpack.c.b16 %v2851, %v2827
  %v3164 = vpack.c.b16 %v2852, %v2828
  %v3165 = vpack.c.b16 %v2853, %v2829
  %v3166 = vpack.c.b16 %v2854, %v2830
  %v3167 = vpack.c.b16 %v2855, %v2831
  %v3168 = vpack.c.b16 %v2856, %v2832
  %v3169 = vpack.c.b16 %v2881, %v2857
  %v3170 = vpack.c.b16 %v2882, %v2858
  %v3171 = vpack.c.b16 %v2883, %v2859
  %v3172 = vpack.c.b16 %v2884, %v2860
  %v3173 = vpack.c.b16 %v2885, %v2861
  %v3174 = vpack.c.b16 %v2886, %v2862
  %v3175 = vpack.c.b16 %v2887, %v2863
  %v3176 = vpack.c.b16 %v2888, %v2864
  %v3177 = vpack.c.b16 %v2889, %v2865
  %v3178 = vpack.c.b16 %v2890, %v2866
  %v3179 = vpack.c.b16 %v2891, %v2867
  %v3180 = vpack.c.b16 %v2892, %v2868
  %v3181 = vpack.c.b16 %v2893, %v2869
  %v3182 = vpack.c.b16 %v2894, %v2870
  %v3183 = vpack.c.b16 %v2895, %v2871
  %v3184 = vpack.c.b16 %v2896, %v2872
  %v3185 = vpack.c.b16 %v2897, %v2873
  %v3186 = vpack.c.b16 %v2898, %v2874
  %v3187 = vpack.c.b16 %v2899, %v2875
  %v3188 = vpack.c.b16 %v2900, %v2876
  %v3189 = vpack.c.b16 %v2901, %v2877
  %v3190 = vpack.c.b16 %v2902, %v2878
  %v3191 = vpack.c.b16 %v2903, %v2879
  %v3192 = vpack.c.b16 %v2904, %v2880
  %v3193 = vpack.c.b16 %v2929, %v2905
  %v3194 = vpack.c.b16 %v2930, %v2906
  %v3195 = vpack.c.b16 %v2931, %v2907
  %v3196 = vpack.c.b16 %v2932, %v2908
  %v3197 = vpack.c.b16 %v2933, %v2909
  %v3198 = vpack.c.b16 %v2934, %v2910
  %v3199 = vpack.c.b16 %v2935, %v2911
  %v3200 = vpack.c.b16 %v2936, %v2912
  %v3201 = vpack.c.b16 %v2937, %v2913
  %v3202 = vpack.c.b16 %v2938, %v2914
  %v3203 = vpack.c.b16 %v2939, %v2915
  %v3204 = vpack.c.b16 %v2940, %v2916
  %v3205 = vpack.c.b16 %v2941, %v2917
  %v3206 = vpack.c.b16 %v2942, %v2918
  %v3207 = vpack.c.b16 %v2943, %v2919
  %v3208 = vpack.c.b16 %v2944, %v2920
  %v3209 = vpack.c.b16 %v2945, %v2921
  %v3210 = vpack.c.b16 %v2946, %v2922
  %v3211 = vpack.c.b16 %v2947, %v2923
  %v3212 = vpack.c.b16 %v2948, %v2924
  %v3213 = vpack.c.b16 %v2949, %v2925
  %v3214 = vpack.c.b16 %v2950, %v2926
  %v3215 = vpack.c.b16 %v2951, %v2927
  %v3216 = vpack.c.b16 %v2952, %v2928
  %v3217 = vpack.c.b16 %v2977, %v2953
  %v3218 = vpack.c.b16 %v2978, %v2954
  %v3219 = vpack.c.b16 %v2979, %v2955
  %v3220 = vpack.c.b16 %v2980, %v2956
  %v3221 = vpack.c.b16 %v2981, %v2957
  %v3222 = vpack.c.b16 %v2982, %v2958
  %v3223 = vpack.c.b16 %v2983, %v2959
  %v3224 = vpack.c.b16 %v2984, %v2960
  %v3225 = vpack.c.b16 %v2985, %v2961
  %v3226 = vpack.c.b16 %v2986, %v2962
  %v3227 = vpack.c.b16 %v2987, %v2963
  %v3228 = vpack.c.b16 %v2988, %v2964
  %v3229 = vpack.c.b16 %v2989, %v2965
  %v3230 = vpack.c.b16 %v2990, %v2966
  %v3231 = vpack.c.b16 %v2991, %v2967
  %v3232 = vpack.c.b16 %v2992, %v2968
  %v3233 = vpack.c.b16 %v2993, %v2969
  %v3234 = vpack.c.b16 %v2994, %v2970
  %v3235 = vpack.c.b16 %v2995, %v2971
  %v3236 = vpack.c.b16 %v2996, %v2972
  %v3237 = vpack.c.b16 %v2997, %v2973
  %v3238 = vpack.c.b16 %v2998, %v2974
  %v3239 = vpack.c.b16 %v2999, %v2975
  %v3240 = vpack.c.b16 %v3000, %v2976
  %v3241 = vpack.c.b16 %v3025, %v3001
  %v3242 = vpack.c.b16 %v3026, %v3002
  %v3243 = vpack.c.b16 %v3027, %v3003
  %v3244 = vpack.c.b16 %v3028, %v3004
  %v3245 = vpack.c.b16 %v3029, %v3005
  %v3246 = vpack.c.b16 %v3030, %v3006
  %v3247 = vpack.c.b16 %v3031, %v3007
  %v3248 = vpack.c.b16 %v3032, %v3008
  %v3249 = vpack.c.b16 %v3033, %v3009
  %v3250 = vpack.c.b16 %v3034, %v3010
  %v3251 = vpack.c.b16 %v3035, %v3011
  %v3252 = vpack.c.b16 %v3036, %v3012
  %v3253 = vpack.c.b16 %v3037, %v3013
  %v3254 = vpack.c.b16 %v3038, %v3014
  %v3255 = vpack.c.b16 %v3039, %v3015
  %v3256 = vpack.c.b16 %v3040, %v3016
  %v3257 = vpack.c.b16 %v3041, %v3017
  %v3258 = vpack.c.b16 %v3042, %v3018
  %v3259 = vpack.c.b16 %v3043, %v3019
  %v3260 = vpack.c.b16 %v3044, %v3020
  %v3261 = vpack.c.b16 %v3045, %v3021
  %v3262 = vpack.c.b16 %v3046, %v3022
  %v3263 = vpack.c.b16 %v3047, %v3023
  %v3264 = vpack.c.b16 %v3048, %v3024
  %v3265 = vpack.c.b16 %v3073, %v3049
  %v3266 = vpack.c.b16 %v3074, %v3050
  %v3267 = vpack.c.b16 %v3075, %v3051
  %v3268 = vpack.c.b16 %v3076, %v3052
  %v3269 = vpack.c.b16 %v3077, %v3053
  %v3270 = vpack.c.b16 %v3078, %v3054
  %v3271 = vpack.c.b16 %v3079, %v3055
  %v3272 = vpack.c.b16 %v3080, %v3056
  %v3273 = vpack.c.b16 %v3081, %v3057
  %v3274 = vpack.c.b16 %v3082, %v3058
  %v3275 = vpack.c.b16 %v3083, %v3059
  %v3276 = vpack.c.b16 %v3084, %v3060
  %v3277 = vpack.c.b16 %v3085, %v3061
  %v3278 = vpack.c.b16 %v3086, %v3062
  %v3279 = vpack.c.b16 %v3087, %v3063
  %v3280 = vpack.c.b16 %v3088, %v3064
  %v3281 = vpack.c.b16 %v3089, %v3065
  %v3282 = vpack.c.b16 %v3090, %v3066
  %v3283 = vpack.c.b16 %v3091, %v3067
  %v3284 = vpack.c.b16 %v3092, %v3068
  %v3285 = vpack.c.b16 %v3093, %v3069
  %v3286 = vpack.c.b16 %v3094, %v3070
  %v3287 = vpack.c.b16 %v3095, %v3071
  %v3288 = vpack.c.b16 %v3096, %v3072
  %3481 = vmatprep.subr.bf16.mxu0 %v3098
  %3482 = vmatpush1.bf16.msra.mxu0 %v3097
  %3483 = vmatprep.subr.bf16.mxu0 %v3122
  %3484 = vmatpush1.bf16.msra.mxu0 %v3121
  %3485 = vmatprep.subr.bf16.mxu0 %v3146
  %3486 = vmatpush1.bf16.msra.mxu0 %v3145
  %3487 = vmatprep.subr.bf16.mxu0 %v3170
  %3488 = vmatpush1.bf16.msra.mxu0 %v3169
  %3489 = vmatprep.subr.bf16.mxu0 %v3194
  %3490 = vmatpush1.bf16.msra.mxu0 %v3193
  %3491 = vmatprep.subr.bf16.mxu0 %v3218
  %3492 = vmatpush1.bf16.msra.mxu0 %v3217
  %3493 = vmatprep.subr.bf16.mxu0 %v3242
  %3494 = vmatpush1.bf16.msra.mxu0 %v3241
  %3495 = vmatprep.subr.bf16.mxu0 %v3266
  %3496 = vmatpush1.bf16.msra.mxu0 %v3265
  %3497 = vmatprep.subr.bf16.mxu0 0
  %3498 = vmatpush1.bf16.msra.mxu0 0
  %3499 = vmatprep.subr.bf16.mxu0 0
  %3500 = vmatpush1.bf16.msra.mxu0 0
  %3501 = vmatprep.subr.bf16.mxu0 0
  %3502 = vmatpush1.bf16.msra.mxu0 0
  %3503 = vmatprep.subr.bf16.mxu0 0
  %3504 = vmatpush1.bf16.msra.mxu0 0
  %3505 = vmatprep.subr.bf16.mxu0 0
  %3506 = vmatpush1.bf16.msra.mxu0 0
  %3507 = vmatprep.subr.bf16.mxu0 0
  %3508 = vmatpush1.bf16.msra.mxu0 0
  %3509 = vmatprep.subr.bf16.mxu0 0
  %3510 = vmatpush1.bf16.msra.mxu0 0
  %3511 = vmatprep.subr.bf16.mxu0 0
  %3512 = vmatpush1.bf16.msra.mxu0 0
  %3513 = vmatprep.mubr.bf16.mxu0 0
  %3514 = vmatmul.mubr.bf16.gmra.mrb[0].mxu0 %v2202
  %v3515 = vpop.f32.mrb[0].mxu0
  %v3516 = vadd.f32 %v2404, %v3515
  %v3517 = vpop.f32.mrb[0].mxu0
  %v3518 = vadd.f32 %v2408, %v3517
  %v3519 = vpop.f32.mrb[0].mxu0
  %v3520 = vadd.f32 %v2404, %v3519
  %v3521 = vpop.f32.mrb[0].mxu0
  %v3522 = vadd.f32 %v2408, %v3521
  %3523 = vdwg.mxu0
  %3524 = vmatprep.subr.bf16.mxu0 %v3100
  %3525 = vmatpush1.bf16.msra.mxu0 %v3099
  %3526 = vmatprep.subr.bf16.mxu0 %v3124
  %3527 = vmatpush1.bf16.msra.mxu0 %v3123
  %3528 = vmatprep.subr.bf16.mxu0 %v3148
  %3529 = vmatpush1.bf16.msra.mxu0 %v3147
  %3530 = vmatprep.subr.bf16.mxu0 %v3172
  %3531 = vmatpush1.bf16.msra.mxu0 %v3171
  %3532 = vmatprep.subr.bf16.mxu0 %v3196
  %3533 = vmatpush1.bf16.msra.mxu0 %v3195
  %3534 = vmatprep.subr.bf16.mxu0 %v3220
  %3535 = vmatpush1.bf16.msra.mxu0 %v3219
  %3536 = vmatprep.subr.bf16.mxu0 %v3244
  %3537 = vmatpush1.bf16.msra.mxu0 %v3243
  %3538 = vmatprep.subr.bf16.mxu0 %v3268
  %3539 = vmatpush1.bf16.msra.mxu0 %v3267
  %3540 = vmatprep.subr.bf16.mxu0 0
  %3541 = vmatpush1.bf16.msra.mxu0 0
  %3542 = vmatprep.subr.bf16.mxu0 0
  %3543 = vmatpush1.bf16.msra.mxu0 0
  %3544 = vmatprep.subr.bf16.mxu0 0
  %3545 = vmatpush1.bf16.msra.mxu0 0
  %3546 = vmatprep.subr.bf16.mxu0 0
  %3547 = vmatpush1.bf16.msra.mxu0 0
  %3548 = vmatprep.subr.bf16.mxu0 0
  %3549 = vmatpush1.bf16.msra.mxu0 0
  %3550 = vmatprep.subr.bf16.mxu0 0
  %3551 = vmatpush1.bf16.msra.mxu0 0
  %3552 = vmatprep.subr.bf16.mxu0 0
  %3553 = vmatpush1.bf16.msra.mxu0 0
  %3554 = vmatprep.subr.bf16.mxu0 0
  %3555 = vmatpush1.bf16.msra.mxu0 0
  %3556 = vmatprep.mubr.bf16.mxu0 0
  %3557 = vmatmul.mubr.bf16.gmra.mrb[0].mxu0 %v2202
  %v3558 = vpop.f32.mrb[0].mxu0
  %v3559 = vadd.f32 %v2412, %v3558
  %v3560 = vpop.f32.mrb[0].mxu0
  %v3561 = vadd.f32 %v2416, %v3560
  %v3562 = vpop.f32.mrb[0].mxu0
  %v3563 = vadd.f32 %v2412, %v3562
  %v3564 = vpop.f32.mrb[0].mxu0
  %v3565 = vadd.f32 %v2416, %v3564
  %3566 = vdwg.mxu0
  %3567 = vmatprep.subr.bf16.mxu0 %v3102
  %3568 = vmatpush1.bf16.msra.mxu0 %v3101
  %3569 = vmatprep.subr.bf16.mxu0 %v3126
  %3570 = vmatpush1.bf16.msra.mxu0 %v3125
  %3571 = vmatprep.subr.bf16.mxu0 %v3150
  %3572 = vmatpush1.bf16.msra.mxu0 %v3149
  %3573 = vmatprep.subr.bf16.mxu0 %v3174
  %3574 = vmatpush1.bf16.msra.mxu0 %v3173
  %3575 = vmatprep.subr.bf16.mxu0 %v3198
  %3576 = vmatpush1.bf16.msra.mxu0 %v3197
  %3577 = vmatprep.subr.bf16.mxu0 %v3222
  %3578 = vmatpush1.bf16.msra.mxu0 %v3221
  %3579 = vmatprep.subr.bf16.mxu0 %v3246
  %3580 = vmatpush1.bf16.msra.mxu0 %v3245
  %3581 = vmatprep.subr.bf16.mxu0 %v3270
  %3582 = vmatpush1.bf16.msra.mxu0 %v3269
  %3583 = vmatprep.subr.bf16.mxu0 0
  %3584 = vmatpush1.bf16.msra.mxu0 0
  %3585 = vmatprep.subr.bf16.mxu0 0
  %3586 = vmatpush1.bf16.msra.mxu0 0
  %3587 = vmatprep.subr.bf16.mxu0 0
  %3588 = vmatpush1.bf16.msra.mxu0 0
  %3589 = vmatprep.subr.bf16.mxu0 0
  %3590 = vmatpush1.bf16.msra.mxu0 0
  %3591 = vmatprep.subr.bf16.mxu0 0
  %3592 = vmatpush1.bf16.msra.mxu0 0
  %3593 = vmatprep.subr.bf16.mxu0 0
  %3594 = vmatpush1.bf16.msra.mxu0 0
  %3595 = vmatprep.subr.bf16.mxu0 0
  %3596 = vmatpush1.bf16.msra.mxu0 0
  %3597 = vmatprep.subr.bf16.mxu0 0
  %3598 = vmatpush1.bf16.msra.mxu0 0
  %3599 = vmatprep.mubr.bf16.mxu0 0
  %3600 = vmatmul.mubr.bf16.gmra.mrb[0].mxu0 %v2202
  %v3601 = vpop.f32.mrb[0].mxu0
  %v3602 = vadd.f32 %v2420, %v3601
  %v3603 = vpop.f32.mrb[0].mxu0
  %v3604 = vadd.f32 %v2424, %v3603
  %v3605 = vpop.f32.mrb[0].mxu0
  %v3606 = vadd.f32 %v2420, %v3605
  %v3607 = vpop.f32.mrb[0].mxu0
  %v3608 = vadd.f32 %v2424, %v3607
  %3609 = vdwg.mxu0
  %3610 = vmatprep.subr.bf16.mxu0 %v3104
  %3611 = vmatpush1.bf16.msra.mxu0 %v3103
  %3612 = vmatprep.subr.bf16.mxu0 %v3128
  %3613 = vmatpush1.bf16.msra.mxu0 %v3127
  %3614 = vmatprep.subr.bf16.mxu0 %v3152
  %3615 = vmatpush1.bf16.msra.mxu0 %v3151
  %3616 = vmatprep.subr.bf16.mxu0 %v3176
  %3617 = vmatpush1.bf16.msra.mxu0 %v3175
  %3618 = vmatprep.subr.bf16.mxu0 %v3200
  %3619 = vmatpush1.bf16.msra.mxu0 %v3199
  %3620 = vmatprep.subr.bf16.mxu0 %v3224
  %3621 = vmatpush1.bf16.msra.mxu0 %v3223
  %3622 = vmatprep.subr.bf16.mxu0 %v3248
  %3623 = vmatpush1.bf16.msra.mxu0 %v3247
  %3624 = vmatprep.subr.bf16.mxu0 %v3272
  %3625 = vmatpush1.bf16.msra.mxu0 %v3271
  %3626 = vmatprep.subr.bf16.mxu0 0
  %3627 = vmatpush1.bf16.msra.mxu0 0
  %3628 = vmatprep.subr.bf16.mxu0 0
  %3629 = vmatpush1.bf16.msra.mxu0 0
  %3630 = vmatprep.subr.bf16.mxu0 0
  %3631 = vmatpush1.bf16.msra.mxu0 0
  %3632 = vmatprep.subr.bf16.mxu0 0
  %3633 = vmatpush1.bf16.msra.mxu0 0
  %3634 = vmatprep.subr.bf16.mxu0 0
  %3635 = vmatpush1.bf16.msra.mxu0 0
  %3636 = vmatprep.subr.bf16.mxu0 0
  %3637 = vmatpush1.bf16.msra.mxu0 0
  %3638 = vmatprep.subr.bf16.mxu0 0
  %3639 = vmatpush1.bf16.msra.mxu0 0
  %3640 = vmatprep.subr.bf16.mxu0 0
  %3641 = vmatpush1.bf16.msra.mxu0 0
  %3642 = vmatprep.mubr.bf16.mxu0 0
  %3643 = vmatmul.mubr.bf16.gmra.mrb[0].mxu0 %v2202
  %v3644 = vpop.f32.mrb[0].mxu0
  %v3645 = vadd.f32 %v2428, %v3644
  %v3646 = vpop.f32.mrb[0].mxu0
  %v3647 = vadd.f32 %v2432, %v3646
  %v3648 = vpop.f32.mrb[0].mxu0
  %v3649 = vadd.f32 %v2428, %v3648
  %v3650 = vpop.f32.mrb[0].mxu0
  %v3651 = vadd.f32 %v2432, %v3650
  %3652 = vdwg.mxu0
  %3653 = vmatprep.subr.bf16.mxu0 %v3106
  %3654 = vmatpush1.bf16.msra.mxu0 %v3105
  %3655 = vmatprep.subr.bf16.mxu0 %v3130
  %3656 = vmatpush1.bf16.msra.mxu0 %v3129
  %3657 = vmatprep.subr.bf16.mxu0 %v3154
  %3658 = vmatpush1.bf16.msra.mxu0 %v3153
  %3659 = vmatprep.subr.bf16.mxu0 %v3178
  %3660 = vmatpush1.bf16.msra.mxu0 %v3177
  %3661 = vmatprep.subr.bf16.mxu0 %v3202
  %3662 = vmatpush1.bf16.msra.mxu0 %v3201
  %3663 = vmatprep.subr.bf16.mxu0 %v3226
  %3664 = vmatpush1.bf16.msra.mxu0 %v3225
  %3665 = vmatprep.subr.bf16.mxu0 %v3250
  %3666 = vmatpush1.bf16.msra.mxu0 %v3249
  %3667 = vmatprep.subr.bf16.mxu0 %v3274
  %3668 = vmatpush1.bf16.msra.mxu0 %v3273
  %3669 = vmatprep.subr.bf16.mxu0 0
  %3670 = vmatpush1.bf16.msra.mxu0 0
  %3671 = vmatprep.subr.bf16.mxu0 0
  %3672 = vmatpush1.bf16.msra.mxu0 0
  %3673 = vmatprep.subr.bf16.mxu0 0
  %3674 = vmatpush1.bf16.msra.mxu0 0
  %3675 = vmatprep.subr.bf16.mxu0 0
  %3676 = vmatpush1.bf16.msra.mxu0 0
  %3677 = vmatprep.subr.bf16.mxu0 0
  %3678 = vmatpush1.bf16.msra.mxu0 0
  %3679 = vmatprep.subr.bf16.mxu0 0
  %3680 = vmatpush1.bf16.msra.mxu0 0
  %3681 = vmatprep.subr.bf16.mxu0 0
  %3682 = vmatpush1.bf16.msra.mxu0 0
  %3683 = vmatprep.subr.bf16.mxu0 0
  %3684 = vmatpush1.bf16.msra.mxu0 0
  %3685 = vmatprep.mubr.bf16.mxu0 0
  %3686 = vmatmul.mubr.bf16.gmra.mrb[0].mxu0 %v2202
  %v3687 = vpop.f32.mrb[0].mxu0
  %v3688 = vadd.f32 %v2436, %v3687
  %v3689 = vpop.f32.mrb[0].mxu0
  %v3690 = vadd.f32 %v2440, %v3689
  %v3691 = vpop.f32.mrb[0].mxu0
  %v3692 = vadd.f32 %v2436, %v3691
  %v3693 = vpop.f32.mrb[0].mxu0
  %v3694 = vadd.f32 %v2440, %v3693
  %3695 = vdwg.mxu0
  %3696 = vmatprep.subr.bf16.mxu0 %v3108
  %3697 = vmatpush1.bf16.msra.mxu0 %v3107
  %3698 = vmatprep.subr.bf16.mxu0 %v3132
  %3699 = vmatpush1.bf16.msra.mxu0 %v3131
  %3700 = vmatprep.subr.bf16.mxu0 %v3156
  %3701 = vmatpush1.bf16.msra.mxu0 %v3155
  %3702 = vmatprep.subr.bf16.mxu0 %v3180
  %3703 = vmatpush1.bf16.msra.mxu0 %v3179
  %3704 = vmatprep.subr.bf16.mxu0 %v3204
  %3705 = vmatpush1.bf16.msra.mxu0 %v3203
  %3706 = vmatprep.subr.bf16.mxu0 %v3228
  %3707 = vmatpush1.bf16.msra.mxu0 %v3227
  %3708 = vmatprep.subr.bf16.mxu0 %v3252
  %3709 = vmatpush1.bf16.msra.mxu0 %v3251
  %3710 = vmatprep.subr.bf16.mxu0 %v3276
  %3711 = vmatpush1.bf16.msra.mxu0 %v3275
  %3712 = vmatprep.subr.bf16.mxu0 0
  %3713 = vmatpush1.bf16.msra.mxu0 0
  %3714 = vmatprep.subr.bf16.mxu0 0
  %3715 = vmatpush1.bf16.msra.mxu0 0
  %3716 = vmatprep.subr.bf16.mxu0 0
  %3717 = vmatpush1.bf16.msra.mxu0 0
  %3718 = vmatprep.subr.bf16.mxu0 0
  %3719 = vmatpush1.bf16.msra.mxu0 0
  %3720 = vmatprep.subr.bf16.mxu0 0
  %3721 = vmatpush1.bf16.msra.mxu0 0
  %3722 = vmatprep.subr.bf16.mxu0 0
  %3723 = vmatpush1.bf16.msra.mxu0 0
  %3724 = vmatprep.subr.bf16.mxu0 0
  %3725 = vmatpush1.bf16.msra.mxu0 0
  %3726 = vmatprep.subr.bf16.mxu0 0
  %3727 = vmatpush1.bf16.msra.mxu0 0
  %3728 = vmatprep.mubr.bf16.mxu0 0
  %3729 = vmatmul.mubr.bf16.gmra.mrb[0].mxu0 %v2202
  %v3730 = vpop.f32.mrb[0].mxu0
  %v3731 = vadd.f32 %v2444, %v3730
  %v3732 = vpop.f32.mrb[0].mxu0
  %v3733 = vadd.f32 %v2448, %v3732
  %v3734 = vpop.f32.mrb[0].mxu0
  %v3735 = vadd.f32 %v2444, %v3734
  %v3736 = vpop.f32.mrb[0].mxu0
  %v3737 = vadd.f32 %v2448, %v3736
  %3738 = vdwg.mxu0
  %3739 = vmatprep.subr.bf16.mxu0 %v3110
  %3740 = vmatpush1.bf16.msra.mxu0 %v3109
  %3741 = vmatprep.subr.bf16.mxu0 %v3134
  %3742 = vmatpush1.bf16.msra.mxu0 %v3133
  %3743 = vmatprep.subr.bf16.mxu0 %v3158
  %3744 = vmatpush1.bf16.msra.mxu0 %v3157
  %3745 = vmatprep.subr.bf16.mxu0 %v3182
  %3746 = vmatpush1.bf16.msra.mxu0 %v3181
  %3747 = vmatprep.subr.bf16.mxu0 %v3206
  %3748 = vmatpush1.bf16.msra.mxu0 %v3205
  %3749 = vmatprep.subr.bf16.mxu0 %v3230
  %3750 = vmatpush1.bf16.msra.mxu0 %v3229
  %3751 = vmatprep.subr.bf16.mxu0 %v3254
  %3752 = vmatpush1.bf16.msra.mxu0 %v3253
  %3753 = vmatprep.subr.bf16.mxu0 %v3278
  %3754 = vmatpush1.bf16.msra.mxu0 %v3277
  %3755 = vmatprep.subr.bf16.mxu0 0
  %3756 = vmatpush1.bf16.msra.mxu0 0
  %3757 = vmatprep.subr.bf16.mxu0 0
  %3758 = vmatpush1.bf16.msra.mxu0 0
  %3759 = vmatprep.subr.bf16.mxu0 0
  %3760 = vmatpush1.bf16.msra.mxu0 0
  %3761 = vmatprep.subr.bf16.mxu0 0
  %3762 = vmatpush1.bf16.msra.mxu0 0
  %3763 = vmatprep.subr.bf16.mxu0 0
  %3764 = vmatpush1.bf16.msra.mxu0 0
  %3765 = vmatprep.subr.bf16.mxu0 0
  %3766 = vmatpush1.bf16.msra.mxu0 0
  %3767 = vmatprep.subr.bf16.mxu0 0
  %3768 = vmatpush1.bf16.msra.mxu0 0
  %3769 = vmatprep.subr.bf16.mxu0 0
  %3770 = vmatpush1.bf16.msra.mxu0 0
  %3771 = vmatprep.mubr.bf16.mxu0 0
  %3772 = vmatmul.mubr.bf16.gmra.mrb[0].mxu0 %v2202
  %v3773 = vpop.f32.mrb[0].mxu0
  %v3774 = vadd.f32 %v2452, %v3773
  %v3775 = vpop.f32.mrb[0].mxu0
  %v3776 = vadd.f32 %v2456, %v3775
  %v3777 = vpop.f32.mrb[0].mxu0
  %v3778 = vadd.f32 %v2452, %v3777
  %v3779 = vpop.f32.mrb[0].mxu0
  %v3780 = vadd.f32 %v2456, %v3779
  %3781 = vdwg.mxu0
  %3782 = vmatprep.subr.bf16.mxu0 %v3112
  %3783 = vmatpush1.bf16.msra.mxu0 %v3111
  %3784 = vmatprep.subr.bf16.mxu0 %v3136
  %3785 = vmatpush1.bf16.msra.mxu0 %v3135
  %3786 = vmatprep.subr.bf16.mxu0 %v3160
  %3787 = vmatpush1.bf16.msra.mxu0 %v3159
  %3788 = vmatprep.subr.bf16.mxu0 %v3184
  %3789 = vmatpush1.bf16.msra.mxu0 %v3183
  %3790 = vmatprep.subr.bf16.mxu0 %v3208
  %3791 = vmatpush1.bf16.msra.mxu0 %v3207
  %3792 = vmatprep.subr.bf16.mxu0 %v3232
  %3793 = vmatpush1.bf16.msra.mxu0 %v3231
  %3794 = vmatprep.subr.bf16.mxu0 %v3256
  %3795 = vmatpush1.bf16.msra.mxu0 %v3255
  %3796 = vmatprep.subr.bf16.mxu0 %v3280
  %3797 = vmatpush1.bf16.msra.mxu0 %v3279
  %3798 = vmatprep.subr.bf16.mxu0 0
  %3799 = vmatpush1.bf16.msra.mxu0 0
  %3800 = vmatprep.subr.bf16.mxu0 0
  %3801 = vmatpush1.bf16.msra.mxu0 0
  %3802 = vmatprep.subr.bf16.mxu0 0
  %3803 = vmatpush1.bf16.msra.mxu0 0
  %3804 = vmatprep.subr.bf16.mxu0 0
  %3805 = vmatpush1.bf16.msra.mxu0 0
  %3806 = vmatprep.subr.bf16.mxu0 0
  %3807 = vmatpush1.bf16.msra.mxu0 0
  %3808 = vmatprep.subr.bf16.mxu0 0
  %3809 = vmatpush1.bf16.msra.mxu0 0
  %3810 = vmatprep.subr.bf16.mxu0 0
  %3811 = vmatpush1.bf16.msra.mxu0 0
  %3812 = vmatprep.subr.bf16.mxu0 0
  %3813 = vmatpush1.bf16.msra.mxu0 0
  %3814 = vmatprep.mubr.bf16.mxu0 0
  %3815 = vmatmul.mubr.bf16.gmra.mrb[0].mxu0 %v2202
  %v3816 = vpop.f32.mrb[0].mxu0
  %v3817 = vadd.f32 %v2460, %v3816
  %v3818 = vpop.f32.mrb[0].mxu0
  %v3819 = vadd.f32 %v2464, %v3818
  %v3820 = vpop.f32.mrb[0].mxu0
  %v3821 = vadd.f32 %v2460, %v3820
  %v3822 = vpop.f32.mrb[0].mxu0
  %v3823 = vadd.f32 %v2464, %v3822
  %3824 = vdwg.mxu0
  %3825 = vmatprep.subr.bf16.mxu0 %v3114
  %3826 = vmatpush1.bf16.msra.mxu0 %v3113
  %3827 = vmatprep.subr.bf16.mxu0 %v3138
  %3828 = vmatpush1.bf16.msra.mxu0 %v3137
  %3829 = vmatprep.subr.bf16.mxu0 %v3162
  %3830 = vmatpush1.bf16.msra.mxu0 %v3161
  %3831 = vmatprep.subr.bf16.mxu0 %v3186
  %3832 = vmatpush1.bf16.msra.mxu0 %v3185
  %3833 = vmatprep.subr.bf16.mxu0 %v3210
  %3834 = vmatpush1.bf16.msra.mxu0 %v3209
  %3835 = vmatprep.subr.bf16.mxu0 %v3234
  %3836 = vmatpush1.bf16.msra.mxu0 %v3233
  %3837 = vmatprep.subr.bf16.mxu0 %v3258
  %3838 = vmatpush1.bf16.msra.mxu0 %v3257
  %3839 = vmatprep.subr.bf16.mxu0 %v3282
  %3840 = vmatpush1.bf16.msra.mxu0 %v3281
  %3841 = vmatprep.subr.bf16.mxu0 0
  %3842 = vmatpush1.bf16.msra.mxu0 0
  %3843 = vmatprep.subr.bf16.mxu0 0
  %3844 = vmatpush1.bf16.msra.mxu0 0
  %3845 = vmatprep.subr.bf16.mxu0 0
  %3846 = vmatpush1.bf16.msra.mxu0 0
  %3847 = vmatprep.subr.bf16.mxu0 0
  %3848 = vmatpush1.bf16.msra.mxu0 0
  %3849 = vmatprep.subr.bf16.mxu0 0
  %3850 = vmatpush1.bf16.msra.mxu0 0
  %3851 = vmatprep.subr.bf16.mxu0 0
  %3852 = vmatpush1.bf16.msra.mxu0 0
  %3853 = vmatprep.subr.bf16.mxu0 0
  %3854 = vmatpush1.bf16.msra.mxu0 0
  %3855 = vmatprep.subr.bf16.mxu0 0
  %3856 = vmatpush1.bf16.msra.mxu0 0
  %3857 = vmatprep.mubr.bf16.mxu0 0
  %3858 = vmatmul.mubr.bf16.gmra.mrb[0].mxu0 %v2202
  %v3859 = vpop.f32.mrb[0].mxu0
  %v3860 = vadd.f32 %v2468, %v3859
  %v3861 = vpop.f32.mrb[0].mxu0
  %v3862 = vadd.f32 %v2472, %v3861
  %v3863 = vpop.f32.mrb[0].mxu0
  %v3864 = vadd.f32 %v2468, %v3863
  %v3865 = vpop.f32.mrb[0].mxu0
  %v3866 = vadd.f32 %v2472, %v3865
  %3867 = vdwg.mxu0
  %3868 = vmatprep.subr.bf16.mxu0 %v3116
  %3869 = vmatpush1.bf16.msra.mxu0 %v3115
  %3870 = vmatprep.subr.bf16.mxu0 %v3140
  %3871 = vmatpush1.bf16.msra.mxu0 %v3139
  %3872 = vmatprep.subr.bf16.mxu0 %v3164
  %3873 = vmatpush1.bf16.msra.mxu0 %v3163
  %3874 = vmatprep.subr.bf16.mxu0 %v3188
  %3875 = vmatpush1.bf16.msra.mxu0 %v3187
  %3876 = vmatprep.subr.bf16.mxu0 %v3212
  %3877 = vmatpush1.bf16.msra.mxu0 %v3211
  %3878 = vmatprep.subr.bf16.mxu0 %v3236
  %3879 = vmatpush1.bf16.msra.mxu0 %v3235
  %3880 = vmatprep.subr.bf16.mxu0 %v3260
  %3881 = vmatpush1.bf16.msra.mxu0 %v3259
  %3882 = vmatprep.subr.bf16.mxu0 %v3284
  %3883 = vmatpush1.bf16.msra.mxu0 %v3283
  %3884 = vmatprep.subr.bf16.mxu0 0
  %3885 = vmatpush1.bf16.msra.mxu0 0
  %3886 = vmatprep.subr.bf16.mxu0 0
  %3887 = vmatpush1.bf16.msra.mxu0 0
  %3888 = vmatprep.subr.bf16.mxu0 0
  %3889 = vmatpush1.bf16.msra.mxu0 0
  %3890 = vmatprep.subr.bf16.mxu0 0
  %3891 = vmatpush1.bf16.msra.mxu0 0
  %3892 = vmatprep.subr.bf16.mxu0 0
  %3893 = vmatpush1.bf16.msra.mxu0 0
  %3894 = vmatprep.subr.bf16.mxu0 0
  %3895 = vmatpush1.bf16.msra.mxu0 0
  %3896 = vmatprep.subr.bf16.mxu0 0
  %3897 = vmatpush1.bf16.msra.mxu0 0
  %3898 = vmatprep.subr.bf16.mxu0 0
  %3899 = vmatpush1.bf16.msra.mxu0 0
  %3900 = vmatprep.mubr.bf16.mxu0 0
  %3901 = vmatmul.mubr.bf16.gmra.mrb[0].mxu0 %v2202
  %v3902 = vpop.f32.mrb[0].mxu0
  %v3903 = vadd.f32 %v2476, %v3902
  %v3904 = vpop.f32.mrb[0].mxu0
  %v3905 = vadd.f32 %v2480, %v3904
  %v3906 = vpop.f32.mrb[0].mxu0
  %v3907 = vadd.f32 %v2476, %v3906
  %v3908 = vpop.f32.mrb[0].mxu0
  %v3909 = vadd.f32 %v2480, %v3908
  %3910 = vdwg.mxu0
  %3911 = vmatprep.subr.bf16.mxu0 %v3118
  %3912 = vmatpush1.bf16.msra.mxu0 %v3117
  %3913 = vmatprep.subr.bf16.mxu0 %v3142
  %3914 = vmatpush1.bf16.msra.mxu0 %v3141
  %3915 = vmatprep.subr.bf16.mxu0 %v3166
  %3916 = vmatpush1.bf16.msra.mxu0 %v3165
  %3917 = vmatprep.subr.bf16.mxu0 %v3190
  %3918 = vmatpush1.bf16.msra.mxu0 %v3189
  %3919 = vmatprep.subr.bf16.mxu0 %v3214
  %3920 = vmatpush1.bf16.msra.mxu0 %v3213
  %3921 = vmatprep.subr.bf16.mxu0 %v3238
  %3922 = vmatpush1.bf16.msra.mxu0 %v3237
  %3923 = vmatprep.subr.bf16.mxu0 %v3262
  %3924 = vmatpush1.bf16.msra.mxu0 %v3261
  %3925 = vmatprep.subr.bf16.mxu0 %v3286
  %3926 = vmatpush1.bf16.msra.mxu0 %v3285
  %3927 = vmatprep.subr.bf16.mxu0 0
  %3928 = vmatpush1.bf16.msra.mxu0 0
  %3929 = vmatprep.subr.bf16.mxu0 0
  %3930 = vmatpush1.bf16.msra.mxu0 0
  %3931 = vmatprep.subr.bf16.mxu0 0
  %3932 = vmatpush1.bf16.msra.mxu0 0
  %3933 = vmatprep.subr.bf16.mxu0 0
  %3934 = vmatpush1.bf16.msra.mxu0 0
  %3935 = vmatprep.subr.bf16.mxu0 0
  %3936 = vmatpush1.bf16.msra.mxu0 0
  %3937 = vmatprep.subr.bf16.mxu0 0
  %3938 = vmatpush1.bf16.msra.mxu0 0
  %3939 = vmatprep.subr.bf16.mxu0 0
  %3940 = vmatpush1.bf16.msra.mxu0 0
  %3941 = vmatprep.subr.bf16.mxu0 0
  %3942 = vmatpush1.bf16.msra.mxu0 0
  %3943 = vmatprep.mubr.bf16.mxu0 0
  %3944 = vmatmul.mubr.bf16.gmra.mrb[0].mxu0 %v2202
  %v3945 = vpop.f32.mrb[0].mxu0
  %v3946 = vadd.f32 %v2484, %v3945
  %v3947 = vpop.f32.mrb[0].mxu0
  %v3948 = vadd.f32 %v2488, %v3947
  %v3949 = vpop.f32.mrb[0].mxu0
  %v3950 = vadd.f32 %v2484, %v3949
  %v3951 = vpop.f32.mrb[0].mxu0
  %v3952 = vadd.f32 %v2488, %v3951
  %3953 = vdwg.mxu0
  %3954 = vmatprep.subr.bf16.mxu0 %v3120
  %3955 = vmatpush1.bf16.msra.mxu0 %v3119
  %3956 = vmatprep.subr.bf16.mxu0 %v3144
  %3957 = vmatpush1.bf16.msra.mxu0 %v3143
  %3958 = vmatprep.subr.bf16.mxu0 %v3168
  %3959 = vmatpush1.bf16.msra.mxu0 %v3167
  %3960 = vmatprep.subr.bf16.mxu0 %v3192
  %3961 = vmatpush1.bf16.msra.mxu0 %v3191
  %3962 = vmatprep.subr.bf16.mxu0 %v3216
  %3963 = vmatpush1.bf16.msra.mxu0 %v3215
  %3964 = vmatprep.subr.bf16.mxu0 %v3240
  %3965 = vmatpush1.bf16.msra.mxu0 %v3239
  %3966 = vmatprep.subr.bf16.mxu0 %v3264
  %3967 = vmatpush1.bf16.msra.mxu0 %v3263
  %3968 = vmatprep.subr.bf16.mxu0 %v3288
  %3969 = vmatpush1.bf16.msra.mxu0 %v3287
  %3970 = vmatprep.subr.bf16.mxu0 0
  %3971 = vmatpush1.bf16.msra.mxu0 0
  %3972 = vmatprep.subr.bf16.mxu0 0
  %3973 = vmatpush1.bf16.msra.mxu0 0
  %3974 = vmatprep.subr.bf16.mxu0 0
  %3975 = vmatpush1.bf16.msra.mxu0 0
  %3976 = vmatprep.subr.bf16.mxu0 0
  %3977 = vmatpush1.bf16.msra.mxu0 0
  %3978 = vmatprep.subr.bf16.mxu0 0
  %3979 = vmatpush1.bf16.msra.mxu0 0
  %3980 = vmatprep.subr.bf16.mxu0 0
  %3981 = vmatpush1.bf16.msra.mxu0 0
  %3982 = vmatprep.subr.bf16.mxu0 0
  %3983 = vmatpush1.bf16.msra.mxu0 0
  %3984 = vmatprep.subr.bf16.mxu0 0
  %3985 = vmatpush1.bf16.msra.mxu0 0
  %3986 = vmatprep.mubr.bf16.mxu0 0
  %3987 = vmatmul.mubr.bf16.gmra.mrb[0].mxu0 %v2202
  %v3988 = vpop.f32.mrb[0].mxu0
  %v3989 = vadd.f32 %v2492, %v3988
  %v3990 = vpop.f32.mrb[0].mxu0
  %v3991 = vadd.f32 %v2496, %v3990
  %v3992 = vpop.f32.mrb[0].mxu0
  %v3993 = vadd.f32 %v2492, %v3992
  %v3994 = vpop.f32.mrb[0].mxu0
  %v3995 = vadd.f32 %v2496, %v3994
  %3996 = vdwg.mxu0
  %v3997 = vxor.u32 %v3516, 2147483648
  %v3998 = vxor.u32 %v3518, 2147483648
  %v3999 = vxor.u32 %v3559, 2147483648
  %v4000 = vxor.u32 %v3561, 2147483648
  %v4001 = vxor.u32 %v3602, 2147483648
  %v4002 = vxor.u32 %v3604, 2147483648
  %v4003 = vxor.u32 %v3645, 2147483648
  %v4004 = vxor.u32 %v3647, 2147483648
  %v4005 = vxor.u32 %v3688, 2147483648
  %v4006 = vxor.u32 %v3690, 2147483648
  %v4007 = vxor.u32 %v3731, 2147483648
  %v4008 = vxor.u32 %v3733, 2147483648
  %v4009 = vxor.u32 %v3774, 2147483648
  %v4010 = vxor.u32 %v3776, 2147483648
  %v4011 = vxor.u32 %v3817, 2147483648
  %v4012 = vxor.u32 %v3819, 2147483648
  %v4013 = vxor.u32 %v3860, 2147483648
  %v4014 = vxor.u32 %v3862, 2147483648
  %v4015 = vxor.u32 %v3903, 2147483648
  %v4016 = vxor.u32 %v3905, 2147483648
  %v4017 = vxor.u32 %v3946, 2147483648
  %v4018 = vxor.u32 %v3948, 2147483648
  %v4019 = vxor.u32 %v3989, 2147483648
  %v4020 = vxor.u32 %v3991, 2147483648
  %v4021 = vxor.u32 %v3520, 2147483648
  %v4022 = vxor.u32 %v3522, 2147483648
  %v4023 = vxor.u32 %v3563, 2147483648
  %v4024 = vxor.u32 %v3565, 2147483648
  %v4025 = vxor.u32 %v3606, 2147483648
  %v4026 = vxor.u32 %v3608, 2147483648
  %v4027 = vxor.u32 %v3649, 2147483648
  %v4028 = vxor.u32 %v3651, 2147483648
  %v4029 = vxor.u32 %v3692, 2147483648
  %v4030 = vxor.u32 %v3694, 2147483648
  %v4031 = vxor.u32 %v3735, 2147483648
  %v4032 = vxor.u32 %v3737, 2147483648
  %v4033 = vxor.u32 %v3778, 2147483648
  %v4034 = vxor.u32 %v3780, 2147483648
  %v4035 = vxor.u32 %v3821, 2147483648
  %v4036 = vxor.u32 %v3823, 2147483648
  %v4037 = vxor.u32 %v3864, 2147483648
  %v4038 = vxor.u32 %v3866, 2147483648
  %v4039 = vxor.u32 %v3907, 2147483648
  %v4040 = vxor.u32 %v3909, 2147483648
  %v4041 = vxor.u32 %v3950, 2147483648
  %v4042 = vxor.u32 %v3952, 2147483648
  %v4043 = vxor.u32 %v3993, 2147483648
  %v4044 = vxor.u32 %v3995, 2147483648
  %v4045 = vmul.f32 %v3997, 1.442695
  %v4046 = vpow.pop %v4045
  %v4047 = vmul.f32 %v3998, 1.442695
  %v4048 = vpow.pop %v4047
  %v4049 = vmul.f32 %v3999, 1.442695
  %v4050 = vpow.pop %v4049
  %v4051 = vmul.f32 %v4000, 1.442695
  %v4052 = vpow.pop %v4051
  %v4053 = vmul.f32 %v4001, 1.442695
  %v4054 = vpow.pop %v4053
  %v4055 = vmul.f32 %v4002, 1.442695
  %v4056 = vpow.pop %v4055
  %v4057 = vmul.f32 %v4003, 1.442695
  %v4058 = vpow.pop %v4057
  %v4059 = vmul.f32 %v4004, 1.442695
  %v4060 = vpow.pop %v4059
  %v4061 = vmul.f32 %v4005, 1.442695
  %v4062 = vpow.pop %v4061
  %v4063 = vmul.f32 %v4006, 1.442695
  %v4064 = vpow.pop %v4063
  %v4065 = vmul.f32 %v4007, 1.442695
  %v4066 = vpow.pop %v4065
  %v4067 = vmul.f32 %v4008, 1.442695
  %v4068 = vpow.pop %v4067
  %v4069 = vmul.f32 %v4009, 1.442695
  %v4070 = vpow.pop %v4069
  %v4071 = vmul.f32 %v4010, 1.442695
  %v4072 = vpow.pop %v4071
  %v4073 = vmul.f32 %v4011, 1.442695
  %v4074 = vpow.pop %v4073
  %v4075 = vmul.f32 %v4012, 1.442695
  %v4076 = vpow.pop %v4075
  %v4077 = vmul.f32 %v4013, 1.442695
  %v4078 = vpow.pop %v4077
  %v4079 = vmul.f32 %v4014, 1.442695
  %v4080 = vpow.pop %v4079
  %v4081 = vmul.f32 %v4015, 1.442695
  %v4082 = vpow.pop %v4081
  %v4083 = vmul.f32 %v4016, 1.442695
  %v4084 = vpow.pop %v4083
  %v4085 = vmul.f32 %v4017, 1.442695
  %v4086 = vpow.pop %v4085
  %v4087 = vmul.f32 %v4018, 1.442695
  %v4088 = vpow.pop %v4087
  %v4089 = vmul.f32 %v4019, 1.442695
  %v4090 = vpow.pop %v4089
  %v4091 = vmul.f32 %v4020, 1.442695
  %v4092 = vpow.pop %v4091
  %v4093 = vmul.f32 %v4021, 1.442695
  %v4094 = vpow.pop %v4093
  %v4095 = vmul.f32 %v4022, 1.442695
  %v4096 = vpow.pop %v4095
  %v4097 = vmul.f32 %v4023, 1.442695
  %v4098 = vpow.pop %v4097
  %v4099 = vmul.f32 %v4024, 1.442695
  %v4100 = vpow.pop %v4099
  %v4101 = vmul.f32 %v4025, 1.442695
  %v4102 = vpow.pop %v4101
  %v4103 = vmul.f32 %v4026, 1.442695
  %v4104 = vpow.pop %v4103
  %v4105 = vmul.f32 %v4027, 1.442695
  %v4106 = vpow.pop %v4105
  %v4107 = vmul.f32 %v4028, 1.442695
  %v4108 = vpow.pop %v4107
  %v4109 = vmul.f32 %v4029, 1.442695
  %v4110 = vpow.pop %v4109
  %v4111 = vmul.f32 %v4030, 1.442695
  %v4112 = vpow.pop %v4111
  %v4113 = vmul.f32 %v4031, 1.442695
  %v4114 = vpow.pop %v4113
  %v4115 = vmul.f32 %v4032, 1.442695
  %v4116 = vpow.pop %v4115
  %v4117 = vmul.f32 %v4033, 1.442695
  %v4118 = vpow.pop %v4117
  %v4119 = vmul.f32 %v4034, 1.442695
  %v4120 = vpow.pop %v4119
  %v4121 = vmul.f32 %v4035, 1.442695
  %v4122 = vpow.pop %v4121
  %v4123 = vmul.f32 %v4036, 1.442695
  %v4124 = vpow.pop %v4123
  %v4125 = vmul.f32 %v4037, 1.442695
  %v4126 = vpow.pop %v4125
  %v4127 = vmul.f32 %v4038, 1.442695
  %v4128 = vpow.pop %v4127
  %v4129 = vmul.f32 %v4039, 1.442695
  %v4130 = vpow.pop %v4129
  %v4131 = vmul.f32 %v4040, 1.442695
  %v4132 = vpow.pop %v4131
  %v4133 = vmul.f32 %v4041, 1.442695
  %v4134 = vpow.pop %v4133
  %v4135 = vmul.f32 %v4042, 1.442695
  %v4136 = vpow.pop %v4135
  %v4137 = vmul.f32 %v4043, 1.442695
  %v4138 = vpow.pop %v4137
  %v4139 = vmul.f32 %v4044, 1.442695
  %v4140 = vpow.pop %v4139
  %v4141 = vadd.f32 %v4046, 1.0
  %v4142 = vadd.f32 %v4048, 1.0
  %v4143 = vadd.f32 %v4050, 1.0
  %v4144 = vadd.f32 %v4052, 1.0
  %v4145 = vadd.f32 %v4054, 1.0
  %v4146 = vadd.f32 %v4056, 1.0
  %v4147 = vadd.f32 %v4058, 1.0
  %v4148 = vadd.f32 %v4060, 1.0
  %v4149 = vadd.f32 %v4062, 1.0
  %v4150 = vadd.f32 %v4064, 1.0
  %v4151 = vadd.f32 %v4066, 1.0
  %v4152 = vadd.f32 %v4068, 1.0
  %v4153 = vadd.f32 %v4070, 1.0
  %v4154 = vadd.f32 %v4072, 1.0
  %v4155 = vadd.f32 %v4074, 1.0
  %v4156 = vadd.f32 %v4076, 1.0
  %v4157 = vadd.f32 %v4078, 1.0
  %v4158 = vadd.f32 %v4080, 1.0
  %v4159 = vadd.f32 %v4082, 1.0
  %v4160 = vadd.f32 %v4084, 1.0
  %v4161 = vadd.f32 %v4086, 1.0
  %v4162 = vadd.f32 %v4088, 1.0
  %v4163 = vadd.f32 %v4090, 1.0
  %v4164 = vadd.f32 %v4092, 1.0
  %v4165 = vadd.f32 %v4094, 1.0
  %v4166 = vadd.f32 %v4096, 1.0
  %v4167 = vadd.f32 %v4098, 1.0
  %v4168 = vadd.f32 %v4100, 1.0
  %v4169 = vadd.f32 %v4102, 1.0
  %v4170 = vadd.f32 %v4104, 1.0
  %v4171 = vadd.f32 %v4106, 1.0
  %v4172 = vadd.f32 %v4108, 1.0
  %v4173 = vadd.f32 %v4110, 1.0
  %v4174 = vadd.f32 %v4112, 1.0
  %v4175 = vadd.f32 %v4114, 1.0
  %v4176 = vadd.f32 %v4116, 1.0
  %v4177 = vadd.f32 %v4118, 1.0
  %v4178 = vadd.f32 %v4120, 1.0
  %v4179 = vadd.f32 %v4122, 1.0
  %v4180 = vadd.f32 %v4124, 1.0
  %v4181 = vadd.f32 %v4126, 1.0
  %v4182 = vadd.f32 %v4128, 1.0
  %v4183 = vadd.f32 %v4130, 1.0
  %v4184 = vadd.f32 %v4132, 1.0
  %v4185 = vadd.f32 %v4134, 1.0
  %v4186 = vadd.f32 %v4136, 1.0
  %v4187 = vadd.f32 %v4138, 1.0
  %v4188 = vadd.f32 %v4140, 1.0
  %v4189 = vrcp.pop %v4141
  %v4190 = vmul.f32 1.0, %v4189
  %v4191 = vrcp.pop %v4142
  %v4192 = vmul.f32 1.0, %v4191
  %v4193 = vrcp.pop %v4143
  %v4194 = vmul.f32 1.0, %v4193
  %v4195 = vrcp.pop %v4144
  %v4196 = vmul.f32 1.0, %v4195
  %v4197 = vrcp.pop %v4145
  %v4198 = vmul.f32 1.0, %v4197
  %v4199 = vrcp.pop %v4146
  %v4200 = vmul.f32 1.0, %v4199
  %v4201 = vrcp.pop %v4147
  %v4202 = vmul.f32 1.0, %v4201
  %v4203 = vrcp.pop %v4148
  %v4204 = vmul.f32 1.0, %v4203
  %v4205 = vrcp.pop %v4149
  %v4206 = vmul.f32 1.0, %v4205
  %v4207 = vrcp.pop %v4150
  %v4208 = vmul.f32 1.0, %v4207
  %v4209 = vrcp.pop %v4151
  %v4210 = vmul.f32 1.0, %v4209
  %v4211 = vrcp.pop %v4152
  %v4212 = vmul.f32 1.0, %v4211
  %v4213 = vrcp.pop %v4153
  %v4214 = vmul.f32 1.0, %v4213
  %v4215 = vrcp.pop %v4154
  %v4216 = vmul.f32 1.0, %v4215
  %v4217 = vrcp.pop %v4155
  %v4218 = vmul.f32 1.0, %v4217
  %v4219 = vrcp.pop %v4156
  %v4220 = vmul.f32 1.0, %v4219
  %v4221 = vrcp.pop %v4157
  %v4222 = vmul.f32 1.0, %v4221
  %v4223 = vrcp.pop %v4158
  %v4224 = vmul.f32 1.0, %v4223
  %v4225 = vrcp.pop %v4159
  %v4226 = vmul.f32 1.0, %v4225
  %v4227 = vrcp.pop %v4160
  %v4228 = vmul.f32 1.0, %v4227
  %v4229 = vrcp.pop %v4161
  %v4230 = vmul.f32 1.0, %v4229
  %v4231 = vrcp.pop %v4162
  %v4232 = vmul.f32 1.0, %v4231
  %v4233 = vrcp.pop %v4163
  %v4234 = vmul.f32 1.0, %v4233
  %v4235 = vrcp.pop %v4164
  %v4236 = vmul.f32 1.0, %v4235
  %v4237 = vrcp.pop %v4165
  %v4238 = vmul.f32 1.0, %v4237
  %v4239 = vrcp.pop %v4166
  %v4240 = vmul.f32 1.0, %v4239
  %v4241 = vrcp.pop %v4167
  %v4242 = vmul.f32 1.0, %v4241
  %v4243 = vrcp.pop %v4168
  %v4244 = vmul.f32 1.0, %v4243
  %v4245 = vrcp.pop %v4169
  %v4246 = vmul.f32 1.0, %v4245
  %v4247 = vrcp.pop %v4170
  %v4248 = vmul.f32 1.0, %v4247
  %v4249 = vrcp.pop %v4171
  %v4250 = vmul.f32 1.0, %v4249
  %v4251 = vrcp.pop %v4172
  %v4252 = vmul.f32 1.0, %v4251
  %v4253 = vrcp.pop %v4173
  %v4254 = vmul.f32 1.0, %v4253
  %v4255 = vrcp.pop %v4174
  %v4256 = vmul.f32 1.0, %v4255
  %v4257 = vrcp.pop %v4175
  %v4258 = vmul.f32 1.0, %v4257
  %v4259 = vrcp.pop %v4176
  %v4260 = vmul.f32 1.0, %v4259
  %v4261 = vrcp.pop %v4177
  %v4262 = vmul.f32 1.0, %v4261
  %v4263 = vrcp.pop %v4178
  %v4264 = vmul.f32 1.0, %v4263
  %v4265 = vrcp.pop %v4179
  %v4266 = vmul.f32 1.0, %v4265
  %v4267 = vrcp.pop %v4180
  %v4268 = vmul.f32 1.0, %v4267
  %v4269 = vrcp.pop %v4181
  %v4270 = vmul.f32 1.0, %v4269
  %v4271 = vrcp.pop %v4182
  %v4272 = vmul.f32 1.0, %v4271
  %v4273 = vrcp.pop %v4183
  %v4274 = vmul.f32 1.0, %v4273
  %v4275 = vrcp.pop %v4184
  %v4276 = vmul.f32 1.0, %v4275
  %v4277 = vrcp.pop %v4185
  %v4278 = vmul.f32 1.0, %v4277
  %v4279 = vrcp.pop %v4186
  %v4280 = vmul.f32 1.0, %v4279
  %v4281 = vrcp.pop %v4187
  %v4282 = vmul.f32 1.0, %v4281
  %v4283 = vrcp.pop %v4188
  %v4284 = vmul.f32 1.0, %v4283
  %v4285 = vpack.c.bf16 %v4238, %v4190
  %v4286 = vpack.c.bf16 %v4240, %v4192
  %v4287 = vpack.c.bf16 %v4242, %v4194
  %v4288 = vpack.c.bf16 %v4244, %v4196
  %v4289 = vpack.c.bf16 %v4246, %v4198
  %v4290 = vpack.c.bf16 %v4248, %v4200
  %v4291 = vpack.c.bf16 %v4250, %v4202
  %v4292 = vpack.c.bf16 %v4252, %v4204
  %v4293 = vpack.c.bf16 %v4254, %v4206
  %v4294 = vpack.c.bf16 %v4256, %v4208
  %v4295 = vpack.c.bf16 %v4258, %v4210
  %v4296 = vpack.c.bf16 %v4260, %v4212
  %v4297 = vpack.c.bf16 %v4262, %v4214
  %v4298 = vpack.c.bf16 %v4264, %v4216
  %v4299 = vpack.c.bf16 %v4266, %v4218
  %v4300 = vpack.c.bf16 %v4268, %v4220
  %v4301 = vpack.c.bf16 %v4270, %v4222
  %v4302 = vpack.c.bf16 %v4272, %v4224
  %v4303 = vpack.c.bf16 %v4274, %v4226
  %v4304 = vpack.c.bf16 %v4276, %v4228
  %v4305 = vpack.c.bf16 %v4278, %v4230
  %v4306 = vpack.c.bf16 %v4280, %v4232
  %v4307 = vpack.c.bf16 %v4282, %v4234
  %v4308 = vpack.c.bf16 %v4284, %v4236
  %v4333 = vunpack.c.l.b16 %v4285
  %v4334 = vunpack.c.l.b16 %v4286
  %v4335 = vunpack.c.l.b16 %v4287
  %v4336 = vunpack.c.l.b16 %v4288
  %v4337 = vunpack.c.l.b16 %v4289
  %v4338 = vunpack.c.l.b16 %v4290
  %v4339 = vunpack.c.l.b16 %v4291
  %v4340 = vunpack.c.l.b16 %v4292
  %v4341 = vunpack.c.l.b16 %v4293
  %v4342 = vunpack.c.l.b16 %v4294
  %v4343 = vunpack.c.l.b16 %v4295
  %v4344 = vunpack.c.l.b16 %v4296
  %v4345 = vunpack.c.l.b16 %v4297
  %v4346 = vunpack.c.l.b16 %v4298
  %v4347 = vunpack.c.l.b16 %v4299
  %v4348 = vunpack.c.l.b16 %v4300
  %v4349 = vunpack.c.l.b16 %v4301
  %v4350 = vunpack.c.l.b16 %v4302
  %v4351 = vunpack.c.l.b16 %v4303
  %v4352 = vunpack.c.l.b16 %v4304
  %v4353 = vunpack.c.l.b16 %v4305
  %v4354 = vunpack.c.l.b16 %v4306
  %v4355 = vunpack.c.l.b16 %v4307
  %v4356 = vunpack.c.l.b16 %v4308
  %v4357 = vunpack.c.h.b16 %v4285
  %v4358 = vunpack.c.h.b16 %v4286
  %v4359 = vunpack.c.h.b16 %v4287
  %v4360 = vunpack.c.h.b16 %v4288
  %v4361 = vunpack.c.h.b16 %v4289
  %v4362 = vunpack.c.h.b16 %v4290
  %v4363 = vunpack.c.h.b16 %v4291
  %v4364 = vunpack.c.h.b16 %v4292
  %v4365 = vunpack.c.h.b16 %v4293
  %v4366 = vunpack.c.h.b16 %v4294
  %v4367 = vunpack.c.h.b16 %v4295
  %v4368 = vunpack.c.h.b16 %v4296
  %v4369 = vunpack.c.h.b16 %v4297
  %v4370 = vunpack.c.h.b16 %v4298
  %v4371 = vunpack.c.h.b16 %v4299
  %v4372 = vunpack.c.h.b16 %v4300
  %v4373 = vunpack.c.h.b16 %v4301
  %v4374 = vunpack.c.h.b16 %v4302
  %v4375 = vunpack.c.h.b16 %v4303
  %v4376 = vunpack.c.h.b16 %v4304
  %v4377 = vunpack.c.h.b16 %v4305
  %v4378 = vunpack.c.h.b16 %v4306
  %v4379 = vunpack.c.h.b16 %v4307
  %v4380 = vunpack.c.h.b16 %v4308
  %v4381 = vpack.c.b16 %v4334, %v4333
  %v4382 = vpack.c.b16 %v4336, %v4335
  %v4383 = vpack.c.b16 %v4338, %v4337
  %v4384 = vpack.c.b16 %v4340, %v4339
  %v4385 = vpack.c.b16 %v4342, %v4341
  %v4386 = vpack.c.b16 %v4344, %v4343
  %v4387 = vpack.c.b16 %v4346, %v4345
  %v4388 = vpack.c.b16 %v4348, %v4347
  %v4389 = vpack.c.b16 %v4350, %v4349
  %v4390 = vpack.c.b16 %v4352, %v4351
  %v4391 = vpack.c.b16 %v4354, %v4353
  %v4392 = vpack.c.b16 %v4356, %v4355
  %v4393 = vpack.c.b16 %v4358, %v4357
  %v4394 = vpack.c.b16 %v4360, %v4359
  %v4395 = vpack.c.b16 %v4362, %v4361
  %v4396 = vpack.c.b16 %v4364, %v4363
  %v4397 = vpack.c.b16 %v4366, %v4365
  %v4398 = vpack.c.b16 %v4368, %v4367
  %v4399 = vpack.c.b16 %v4370, %v4369
  %v4400 = vpack.c.b16 %v4372, %v4371
  %v4401 = vpack.c.b16 %v4374, %v4373
  %v4402 = vpack.c.b16 %v4376, %v4375
  %v4403 = vpack.c.b16 %v4378, %v4377
  %v4404 = vpack.c.b16 %v4380, %v4379
  %4429 = vst [vmem:[%s5] sm:$0xff] %v4381
  %4430 = vst [vmem:[%s5 + $0x8] sm:$0xff] %v4382
  %4431 = vst [vmem:[%s5 + $0x10] sm:$0xff] %v4383
  %4432 = vst [vmem:[%s5 + $0x18] sm:$0xff] %v4384
  %4433 = vst [vmem:[%s5 + $0x20] sm:$0xff] %v4385
  %4434 = vst [vmem:[%s5 + $0x28] sm:$0xff] %v4386
  %4435 = vst [vmem:[%s5 + $0x30] sm:$0xff] %v4387
  %4436 = vst [vmem:[%s5 + $0x38] sm:$0xff] %v4388
  %4437 = vst [vmem:[%s5 + $0x40] sm:$0xff] %v4389
  %4438 = vst [vmem:[%s5 + $0x48] sm:$0xff] %v4390
  %4439 = vst [vmem:[%s5 + $0x50] sm:$0xff] %v4391
  %4440 = vst [vmem:[%s5 + $0x58] sm:$0xff] %v4392
  %4441 = vst [vmem:[%s5 + $0x60] sm:$0xff] %v4393
  %4442 = vst [vmem:[%s5 + $0x68] sm:$0xff] %v4394
  %4443 = vst [vmem:[%s5 + $0x70] sm:$0xff] %v4395
  %4444 = vst [vmem:[%s5 + $0x78] sm:$0xff] %v4396
  %4445 = vst [vmem:[%s5 + $0x80] sm:$0xff] %v4397
  %4446 = vst [vmem:[%s5 + $0x88] sm:$0xff] %v4398
  %4447 = vst [vmem:[%s5 + $0x90] sm:$0xff] %v4399
  %4448 = vst [vmem:[%s5 + $0x98] sm:$0xff] %v4400
  %4449 = vst [vmem:[%s5 + $0xa0] sm:$0xff] %v4401
  %4450 = vst [vmem:[%s5 + $0xa8] sm:$0xff] %v4402
  %4451 = vst [vmem:[%s5 + $0xb0] sm:$0xff] %v4403
  %4452 = vst [vmem:[%s5 + $0xb8] sm:$0xff] %v4404
  // Predicated region
  $region22: #{aesthetic_net_forward.1} parent=0 // pred_check
    _
  $region23: #{aesthetic_net_forward.1} parent=0 // pred_check_branch
    %4454 = sbr.rel (0) target = $region25
  $region24: #{aesthetic_net_forward.1} parent=0 // pred_region
    _
  $region25: #{aesthetic_net_forward.1} parent=0 // pred_fallthru
    _
  // Predicated region
  $region26: #{aesthetic_net_forward.1} parent=0 // pred_check
    _
  $region27: #{aesthetic_net_forward.1} parent=0 // pred_check_branch
    %4456 = sbr.rel (0) target = $region29
  $region28: #{aesthetic_net_forward.1} parent=0 // pred_region
    _
  $region29: #{aesthetic_net_forward.1} parent=0 // pred_fallthru
    _

</llo_original>
